<compile_context>
chip_gen: v6e
topology: v6e:2x2x1
jax: 0.10.0
libtpu: 0.0.40
codegen_flags: <defaults>
</compile_context>

<pallas_src>
import jax
import jax.numpy as jnp
from jax.experimental import pallas as pl
from jax.experimental.pallas import tpu as pltpu

BERT_DIM = 768
RK_HIDDEN = 200        # logical ReasonModule output width
RK_HIDDEN_PAD = 256    # padded to a lane-dense multiple of 128
VOCAB = 128


# ----------------------------------------------------------------------------
# Single fused kernel, one grid step for the whole batch.
#   plen_ref : (B, 1)   int32   path lengths
#   ids_ref  : (B*N, T) int32   path concept token ids (flattened batch*node)
#   mask_ref : (B*N, T) f32     token attention mask
#   emb_ref  : (V, 768) bf16    token embedding table (VMEM resident)
#   wp_ref   : (768, 768) bf16  pooler weight
#   bp_ref   : (1, 768) f32     pooler bias
#   wg_ref   : (768, 256) bf16  ReasonModule weight (cols 200:256 == 0)
#   bg_ref   : (1, 256) f32     ReasonModule bias   (cols 200:256 == 0)
#   out_ref  : (2*B, 256) f32   rows [0:B] = rk_e1, rows [B:2B] = rk_e2
# ----------------------------------------------------------------------------
def rk_fused_kernel(plen_ref, ids_ref, mask_ref, emb_ref, wp_ref, bp_ref,
                    wg_ref, bg_ref, out_ref):
    BN, T = ids_ref.shape
    V = emb_ref.shape[0]
    B = plen_ref.shape[0]
    N = BN // B

    ids = ids_ref[...]                                         # (BN, T) int32
    mask = mask_ref[...]                                       # (BN, T) f32

    # --- synthetic BERT pooler front-end ------------------------------------
    # Embedding gather + masked token sum fused into one one-hot matmul:
    # tok_counts[n, v] = sum_t mask[n, t] * [ids[n, t] == v]
    vocab_iota = jax.lax.broadcasted_iota(jnp.int32, (BN, T, V), 2)
    onehot = jnp.where(ids[:, :, None] == vocab_iota, mask[:, :, None], 0.0)
    tok_counts = jnp.sum(onehot, axis=1)                       # (BN, V) f32
    denom = jnp.maximum(jnp.sum(mask, axis=1, keepdims=True), 1.0)
    inv_denom = pl.reciprocal(denom, approx=True)              # EUP, ~free
    tok_mean = (tok_counts * inv_denom).astype(jnp.bfloat16)   # (BN, V) masked mean weights

    # --- readout-row selection hoisted above the heavy matmuls --------------
    # Only node 0 and node (path_len-1) of each batch are ever read out, and the
    # ReasonModule stand-in is per-node, so select those 2*B rows now.
    plen = plen_ref[...]                                       # (B, 1) int32
    last = jnp.clip(plen - 1, 0, N - 1)                        # clamp path_len to [1, N]
    base = jax.lax.broadcasted_iota(jnp.int32, (B, 1), 0) * N  # first node of batch b
    col = jax.lax.broadcasted_iota(jnp.int32, (B, BN), 1)
    s1 = (col == base).astype(jnp.bfloat16)                    # (B, BN) -> node 0
    s2 = (col == base + last).astype(jnp.bfloat16)             # (B, BN) -> node path_len-1
    sel = jnp.concatenate([s1, s2], axis=0)                    # (2B, BN)

    mean_sel = jnp.dot(sel, tok_mean,
                       preferred_element_type=jnp.float32)     # (2B, V) exact row select
    mean_emb = jnp.dot(mean_sel.astype(jnp.bfloat16), emb_ref[...],
                       preferred_element_type=jnp.float32)     # (2B, 768) masked mean emb
    pooled = jnp.tanh(
        jnp.dot(mean_emb.astype(jnp.bfloat16), wp_ref[...],
                preferred_element_type=jnp.float32) + bp_ref[...])   # (2B, 768)

    # --- ReasonModule encoder (stand-in: per-node dense + relu) --------------
    rk = jnp.maximum(
        jnp.dot(pooled.astype(jnp.bfloat16), wg_ref[...],
                preferred_element_type=jnp.float32) + bg_ref[...], 0.0)  # (2B, 256)

    out_ref[...] = rk


# ----------------------------------------------------------------------------
# RKModule forward (default branch: attn=False, aggcn=False -> ReasonModule()).
# ----------------------------------------------------------------------------
def rk_module_forward(path_concept_ids, path_len, path_concept_mask, params):
    B, N, T = path_concept_ids.shape
    V, D = params["emb"].shape
    Hp = params["wg"].shape[1]
    BN = B * N
    M = 2 * B

    ids_flat = path_concept_ids.reshape(BN, T).astype(jnp.int32)
    mask_flat = path_concept_mask.reshape(BN, T).astype(jnp.float32)
    plen = path_len.reshape(B, 1).astype(jnp.int32)

    flops = 2 * M * (BN * V + V * D + D * D + D * Hp)
    bytes_accessed = (ids_flat.size * 4 + mask_flat.size * 4 + plen.size * 4
                      + params["emb"].size * 2 + params["wp"].size * 2
                      + params["bp"].size * 4 + params["wg"].size * 2
                      + params["bg"].size * 4 + M * Hp * 4)

    out = pl.pallas_call(
        rk_fused_kernel,
        out_shape=jax.ShapeDtypeStruct((M, Hp), jnp.float32),
        grid=(1,),
        in_specs=[
            pl.BlockSpec((B, 1), lambda i: (0, 0)),     # path_len
            pl.BlockSpec((BN, T), lambda i: (0, 0)),    # ids
            pl.BlockSpec((BN, T), lambda i: (0, 0)),    # mask
            pl.BlockSpec((V, D), lambda i: (0, 0)),     # emb
            pl.BlockSpec((D, D), lambda i: (0, 0)),     # wp
            pl.BlockSpec((1, D), lambda i: (0, 0)),     # bp
            pl.BlockSpec((D, Hp), lambda i: (0, 0)),    # wg
            pl.BlockSpec((1, Hp), lambda i: (0, 0)),    # bg
        ],
        out_specs=pl.BlockSpec((M, Hp), lambda i: (0, 0)),
        compiler_params=pltpu.CompilerParams(
            # Single grid step: no megacore split of a tiny batch (v7x would
            # otherwise duplicate the whole weight DMA on both TensorCores).
            dimension_semantics=("arbitrary",)),
        cost_estimate=pl.CostEstimate(
            flops=int(flops),
            transcendentals=int(M * D + BN),
            bytes_accessed=int(bytes_accessed)),
    )(plen, ids_flat, mask_flat,
      params["emb"], params["wp"], params["bp"], params["wg"], params["bg"])

    # Strip lane padding (256 -> 200) and build rk_rep = [rk_e1 | rk_e2].
    rk_e1 = out[:B, :RK_HIDDEN]
    rk_e2 = out[B:, :RK_HIDDEN]
    return jnp.concatenate([rk_e1, rk_e2], axis=-1)            # (B, 400)


def init_params(key):
    k_emb, k_wp, k_bp, k_wg, k_bg = jax.random.split(key, 5)
    wg = jax.random.normal(k_wg, (BERT_DIM, RK_HIDDEN), jnp.float32) * 0.02
    bg = jax.random.normal(k_bg, (1, RK_HIDDEN), jnp.float32) * 0.02
    pad = RK_HIDDEN_PAD - RK_HIDDEN
    return {
        # Matmul operands in bf16 (MXU-native, halves weight DMA); biases and
        # elementwise math stay f32 (v5e VPU/EUP have no bf16).
        "emb": (jax.random.normal(k_emb, (VOCAB, BERT_DIM), jnp.float32)
                * 0.02).astype(jnp.bfloat16),
        "wp": (jax.random.normal(k_wp, (BERT_DIM, BERT_DIM), jnp.float32)
               * 0.02).astype(jnp.bfloat16),
        "bp": jax.random.normal(k_bp, (1, BERT_DIM), jnp.float32) * 0.02,
        # Zero-padded columns 200:256 so padded lanes stay exactly zero.
        "wg": jnp.pad(wg, ((0, 0), (0, pad))).astype(jnp.bfloat16),
        "bg": jnp.pad(bg, ((0, 0), (0, pad))),
    }


if __name__ == "__main__":
    B, N, T = 2, 8, 8  # batch, node_num (path concepts), token_num
    key = jax.random.PRNGKey(0)
    kp, ki, kl, km = jax.random.split(key, 4)

    params = init_params(kp)

    path_concept_ids = jax.random.randint(ki, (B, N, T), 0, VOCAB)   # (B, N, T)
    path_len = jax.random.randint(kl, (B,), 1, N + 1)                # (B,)

    tok_lens = jax.random.randint(km, (B * N, 1), 1, T + 1)
    tok = jnp.arange(T)[None, :]
    path_concept_mask = (tok < tok_lens).astype(jnp.float32)         # (B*N, T)

    fwd = jax.jit(rk_module_forward)
    rk_rep = fwd(path_concept_ids, path_len, path_concept_mask, params)
    rk_rep = jax.block_until_ready(rk_rep)

    assert rk_rep.shape == (B, 2 * RK_HIDDEN), rk_rep.shape
    assert bool(jnp.all(jnp.isfinite(rk_rep)))
    print("KERNEL_OK")
</pallas_src>

<mosaic_0001>
module attributes {stable_mosaic.version = 11 : i64} {
  func.func @rk_fused_kernel(%arg0: i32, %arg1: memref<2x1xi32, #tpu.memory_space<vmem>>, %arg2: memref<16x8xi32, #tpu.memory_space<vmem>>, %arg3: memref<16x8xf32, #tpu.memory_space<vmem>>, %arg4: memref<128x768xbf16, #tpu.memory_space<vmem>>, %arg5: memref<768x768xbf16, #tpu.memory_space<vmem>>, %arg6: memref<1x768xf32, #tpu.memory_space<vmem>>, %arg7: memref<768x256xbf16, #tpu.memory_space<vmem>>, %arg8: memref<1x256xf32, #tpu.memory_space<vmem>>, %arg9: memref<4x256xf32, #tpu.memory_space<vmem>>) attributes {dimension_semantics = [#tpu.dimension_semantics<arbitrary>], iteration_bounds = array<i64: 1>, scalar_prefetch = 0 : i64, scratch_operands = 0 : i64, tpu.core_type = #tpu.core_type<tc>, window_params = [{pipeline_mode = #tpu.pipeline_mode<synchronous>, transform_indices = @transform_0, window_bounds = array<i64: 2, 1>}, {pipeline_mode = #tpu.pipeline_mode<synchronous>, transform_indices = @transform_1, window_bounds = array<i64: 16, 8>}, {pipeline_mode = #tpu.pipeline_mode<synchronous>, transform_indices = @transform_2, window_bounds = array<i64: 16, 8>}, {pipeline_mode = #tpu.pipeline_mode<synchronous>, transform_indices = @transform_3, window_bounds = array<i64: 128, 768>}, {pipeline_mode = #tpu.pipeline_mode<synchronous>, transform_indices = @transform_4, window_bounds = array<i64: 768, 768>}, {pipeline_mode = #tpu.pipeline_mode<synchronous>, transform_indices = @transform_5, window_bounds = array<i64: 1, 768>}, {pipeline_mode = #tpu.pipeline_mode<synchronous>, transform_indices = @transform_6, window_bounds = array<i64: 768, 256>}, {pipeline_mode = #tpu.pipeline_mode<synchronous>, transform_indices = @transform_7, window_bounds = array<i64: 1, 256>}, {pipeline_mode = #tpu.pipeline_mode<synchronous>, transform_indices = @transform_8, window_bounds = array<i64: 4, 256>}]} {
    %c0 = arith.constant 0 : index
    %c0_0 = arith.constant 0 : index
    %0 = vector.load %arg2[%c0, %c0_0] : memref<16x8xi32, #tpu.memory_space<vmem>>, vector<16x8xi32>
    %c0_1 = arith.constant 0 : index
    %c0_2 = arith.constant 0 : index
    %1 = vector.load %arg3[%c0_1, %c0_2] : memref<16x8xf32, #tpu.memory_space<vmem>>, vector<16x8xf32>
    %2 = tpu.iota {dimensions = array<i32: 2>} : vector<16x8x128xi32>
    %3 = vector.shape_cast %0 : vector<16x8xi32> to vector<16x8x1xi32>
    %4 = vector.broadcast %3 : vector<16x8x1xi32> to vector<16x8x128xi32>
    %5 = arith.cmpi eq, %4, %2 : vector<16x8x128xi32>
    %6 = vector.shape_cast %1 : vector<16x8xf32> to vector<16x8x1xf32>
    %cst = arith.constant 0.000000e+00 : f32
    %7 = vector.shape_cast %6 : vector<16x8x1xf32> to vector<16x8x1xf32>
    %8 = vector.broadcast %7 : vector<16x8x1xf32> to vector<16x8x128xf32>
    %9 = vector.broadcast %cst : f32 to vector<16x8x128xf32>
    %10 = arith.select %5, %8, %9 : vector<16x8x128xi1>, vector<16x8x128xf32>
    %cst_3 = arith.constant dense<0.000000e+00> : vector<16x128xf32>
    %11 = vector.multi_reduction <add>, %10, %cst_3 [1] : vector<16x8x128xf32> to vector<16x128xf32>
    %cst_4 = arith.constant dense<0.000000e+00> : vector<16xf32>
    %12 = vector.multi_reduction <add>, %1, %cst_4 [1] : vector<16x8xf32> to vector<16xf32>
    %13 = vector.shape_cast %12 : vector<16xf32> to vector<16x1xf32>
    %cst_5 = arith.constant 1.000000e+00 : f32
    %14 = vector.broadcast %cst_5 : f32 to vector<16x1xf32>
    %15 = arith.maximumf %13, %14 : vector<16x1xf32>
    %16 = tpu.reciprocal %15 {approx = true} : vector<16x1xf32> -> vector<16x1xf32>
    %17 = vector.broadcast %16 : vector<16x1xf32> to vector<16x128xf32>
    %18 = arith.mulf %11, %17 : vector<16x128xf32>
    %19 = arith.truncf %18 : vector<16x128xf32> to vector<16x128xbf16>
    %c0_6 = arith.constant 0 : index
    %c0_7 = arith.constant 0 : index
    %20 = vector.load %arg1[%c0_6, %c0_7] : memref<2x1xi32, #tpu.memory_space<vmem>>, vector<2x1xi32>
    %c1_i32 = arith.constant 1 : i32
    %21 = vector.broadcast %c1_i32 : i32 to vector<2x1xi32>
    %22 = arith.subi %20, %21 : vector<2x1xi32>
    %c0_i32 = arith.constant 0 : i32
    %c7_i32 = arith.constant 7 : i32
    %23 = vector.broadcast %c0_i32 : i32 to vector<2x1xi32>
    %24 = arith.maxsi %23, %22 : vector<2x1xi32>
    %25 = vector.broadcast %c7_i32 : i32 to vector<2x1xi32>
    %26 = arith.minsi %25, %24 : vector<2x1xi32>
    %27 = tpu.iota {dimensions = array<i32: 0>} : vector<2x1xi32>
    %c8_i32 = arith.constant 8 : i32
    %28 = vector.broadcast %c8_i32 : i32 to vector<2x1xi32>
    %29 = arith.muli %27, %28 : vector<2x1xi32>
    %30 = tpu.iota {dimensions = array<i32: 1>} : vector<2x16xi32>
    %31 = vector.broadcast %29 : vector<2x1xi32> to vector<2x16xi32>
    %32 = arith.cmpi eq, %30, %31 : vector<2x16xi32>
    %33 = arith.extui %32 : vector<2x16xi1> to vector<2x16xi32>
    %34 = arith.sitofp %33 : vector<2x16xi32> to vector<2x16xf32>
    %35 = arith.truncf %34 : vector<2x16xf32> to vector<2x16xbf16>
    %36 = arith.addi %29, %26 : vector<2x1xi32>
    %37 = vector.broadcast %36 : vector<2x1xi32> to vector<2x16xi32>
    %38 = arith.cmpi eq, %30, %37 : vector<2x16xi32>
    %39 = arith.extui %38 : vector<2x16xi1> to vector<2x16xi32>
    %40 = arith.sitofp %39 : vector<2x16xi32> to vector<2x16xf32>
    %41 = arith.truncf %40 : vector<2x16xf32> to vector<2x16xbf16>
    %42 = tpu.concatenate %35, %41 in 0 : vector<2x16xbf16>, vector<2x16xbf16> -> vector<4x16xbf16>
    %cst_8 = arith.constant dense<0.000000e+00> : vector<4x128xf32>
    %43 = tpu.matmul %42, %19, %cst_8 {dimension_numbers = #tpu.dot_dimension_numbers<[1], [0], [0], [1], [0, 0, 1, 1], [], []>} : vector<4x16xbf16>, vector<16x128xbf16>, vector<4x128xf32> -> vector<4x128xf32>
    %44 = arith.truncf %43 : vector<4x128xf32> to vector<4x128xbf16>
    %c0_9 = arith.constant 0 : index
    %c0_10 = arith.constant 0 : index
    %45 = vector.load %arg4[%c0_9, %c0_10] : memref<128x768xbf16, #tpu.memory_space<vmem>>, vector<128x768xbf16>
    %cst_11 = arith.constant dense<0.000000e+00> : vector<4x768xf32>
    %46 = tpu.matmul %44, %45, %cst_11 {dimension_numbers = #tpu.dot_dimension_numbers<[1], [0], [0], [1], [0, 0, 1, 1], [], []>} : vector<4x128xbf16>, vector<128x768xbf16>, vector<4x768xf32> -> vector<4x768xf32>
    %47 = arith.truncf %46 : vector<4x768xf32> to vector<4x768xbf16>
    %c0_12 = arith.constant 0 : index
    %c0_13 = arith.constant 0 : index
    %48 = vector.load %arg5[%c0_12, %c0_13] : memref<768x768xbf16, #tpu.memory_space<vmem>>, vector<768x768xbf16>
    %cst_14 = arith.constant dense<0.000000e+00> : vector<4x768xf32>
    %49 = tpu.matmul %47, %48, %cst_14 {dimension_numbers = #tpu.dot_dimension_numbers<[1], [0], [0], [1], [0, 0, 1, 1], [], []>} : vector<4x768xbf16>, vector<768x768xbf16>, vector<4x768xf32> -> vector<4x768xf32>
    %c0_15 = arith.constant 0 : index
    %c0_16 = arith.constant 0 : index
    %50 = vector.load %arg6[%c0_15, %c0_16] : memref<1x768xf32, #tpu.memory_space<vmem>>, vector<1x768xf32>
    %51 = vector.broadcast %50 : vector<1x768xf32> to vector<4x768xf32>
    %52 = arith.addf %49, %51 : vector<4x768xf32>
    %53 = math.tanh %52 : vector<4x768xf32>
    %54 = arith.truncf %53 : vector<4x768xf32> to vector<4x768xbf16>
    %c0_17 = arith.constant 0 : index
    %c0_18 = arith.constant 0 : index
    %55 = vector.load %arg7[%c0_17, %c0_18] : memref<768x256xbf16, #tpu.memory_space<vmem>>, vector<768x256xbf16>
    %cst_19 = arith.constant dense<0.000000e+00> : vector<4x256xf32>
    %56 = tpu.matmul %54, %55, %cst_19 {dimension_numbers = #tpu.dot_dimension_numbers<[1], [0], [0], [1], [0, 0, 1, 1], [], []>} : vector<4x768xbf16>, vector<768x256xbf16>, vector<4x256xf32> -> vector<4x256xf32>
    %c0_20 = arith.constant 0 : index
    %c0_21 = arith.constant 0 : index
    %57 = vector.load %arg8[%c0_20, %c0_21] : memref<1x256xf32, #tpu.memory_space<vmem>>, vector<1x256xf32>
    %58 = vector.broadcast %57 : vector<1x256xf32> to vector<4x256xf32>
    %59 = arith.addf %56, %58 : vector<4x256xf32>
    %cst_22 = arith.constant 0.000000e+00 : f32
    %60 = vector.broadcast %cst_22 : f32 to vector<4x256xf32>
    %61 = arith.maximumf %59, %60 : vector<4x256xf32>
    %c0_23 = arith.constant 0 : index
    %c0_24 = arith.constant 0 : index
    %62 = vector.load %arg9[%c0_23, %c0_24] : memref<4x256xf32, #tpu.memory_space<vmem>>, vector<4x256xf32>
    tpu.vector_store %arg9[%c0_23, %c0_24], %61 {strides = array<i32>} : memref<4x256xf32, #tpu.memory_space<vmem>>, vector<4x256xf32>,
    return
  }
  func.func @transform_0(%arg0: i32) -> (i32, i32) {
    %c0_i32 = arith.constant 0 : i32
    %c0_i32_0 = arith.constant 0 : i32
    %c0_i32_1 = arith.constant 0 : i32
    return %c0_i32, %c0_i32_0 : i32, i32
  }
  func.func @transform_1(%arg0: i32) -> (i32, i32) {
    %c0_i32 = arith.constant 0 : i32
    %c0_i32_0 = arith.constant 0 : i32
    %c0_i32_1 = arith.constant 0 : i32
    return %c0_i32, %c0_i32_0 : i32, i32
  }
  func.func @transform_2(%arg0: i32) -> (i32, i32) {
    %c0_i32 = arith.constant 0 : i32
    %c0_i32_0 = arith.constant 0 : i32
    %c0_i32_1 = arith.constant 0 : i32
    return %c0_i32, %c0_i32_0 : i32, i32
  }
  func.func @transform_3(%arg0: i32) -> (i32, i32) {
    %c0_i32 = arith.constant 0 : i32
    %c0_i32_0 = arith.constant 0 : i32
    %c0_i32_1 = arith.constant 0 : i32
    return %c0_i32, %c0_i32_0 : i32, i32
  }
  func.func @transform_4(%arg0: i32) -> (i32, i32) {
    %c0_i32 = arith.constant 0 : i32
    %c0_i32_0 = arith.constant 0 : i32
    %c0_i32_1 = arith.constant 0 : i32
    return %c0_i32, %c0_i32_0 : i32, i32
  }
  func.func @transform_5(%arg0: i32) -> (i32, i32) {
    %c0_i32 = arith.constant 0 : i32
    %c0_i32_0 = arith.constant 0 : i32
    %c0_i32_1 = arith.constant 0 : i32
    return %c0_i32, %c0_i32_0 : i32, i32
  }
  func.func @transform_6(%arg0: i32) -> (i32, i32) {
    %c0_i32 = arith.constant 0 : i32
    %c0_i32_0 = arith.constant 0 : i32
    %c0_i32_1 = arith.constant 0 : i32
    return %c0_i32, %c0_i32_0 : i32, i32
  }
  func.func @transform_7(%arg0: i32) -> (i32, i32) {
    %c0_i32 = arith.constant 0 : i32
    %c0_i32_0 = arith.constant 0 : i32
    %c0_i32_1 = arith.constant 0 : i32
    return %c0_i32, %c0_i32_0 : i32, i32
  }
  func.func @transform_8(%arg0: i32) -> (i32, i32) {
    %c0_i32 = arith.constant 0 : i32
    %c0_i32_0 = arith.constant 0 : i32
    %c0_i32_1 = arith.constant 0 : i32
    return %c0_i32, %c0_i32_0 : i32, i32
  }
}

</mosaic_0001>

<llo_original>
// kernel: rk_module_forward.1
$region0: #{rk_module_forward.1}
  #allocation0 [shape = 'u32[]', space=smem, size = 0x4, offset = 0x4, fixed_abs, tag = 'smem constant byte address 0x4 - core index']
  #allocation1 [shape = 'u32[144,128]{1,0:T(1,128)}', space=vmem, size = 0x12000, scoped, tag = 'internal scratch']
  %s0 = inlined_call_operand.vmem [shape: s32[2,1], index: 0, kind: input, shape index: {}]
  %s1 = inlined_call_operand.hbm [shape: s32[16,8], index: 1, kind: input, shape index: {}]
  %s2 = inlined_call_operand.vmem [shape: f32[16,8], index: 2, kind: input, shape index: {}]
  %s3 = inlined_call_operand.hbm [shape: bf16[128,768], index: 3, kind: input, shape index: {}]
  %s4 = inlined_call_operand.hbm [shape: bf16[768,768], index: 4, kind: input, shape index: {}]
  %s5 = inlined_call_operand.hbm [shape: f32[1,768], index: 5, kind: input, shape index: {}]
  %s6 = inlined_call_operand.hbm [shape: bf16[768,256], index: 6, kind: input, shape index: {}]
  %s7 = inlined_call_operand.hbm [shape: f32[1,256], index: 7, kind: input, shape index: {}]
  %s8 = inlined_call_operand.vmem [shape: f32[4,256], index: 8, kind: output, shape index: {}]
  %s9 = sld [smem:[#allocation0]]
  $region66: #{rk_module_forward.1} parent=0
    _
  %s11 = ssub.s32 1, %s9
  %s12 = scalar_select 0, %s11, %s9
  $region1: #{rk_module_forward.1} parent=0
    #allocation2 [shape = 'u8[8192]{0}', space=vmem, size = 0x2000, scoped, tag = 'input window, operand 1, single buffered']
    #allocation3 [shape = 's32[1]{0}', space=sflag, size = 0x4, scoped, tag = 'scoped memory for rk_module_forward.1']
    #allocation4 [shape = 'u8[196608]{0}', space=vmem, size = 0x30000, scoped, tag = 'input window, operand 3, single buffered']
    #allocation5 [shape = 's32[1]{0}', space=sflag, size = 0x4, scoped, tag = 'scoped memory for rk_module_forward.1']
    #allocation6 [shape = 'u8[1179648]{0}', space=vmem, size = 0x120000, scoped, tag = 'input window, operand 4, single buffered']
    #allocation7 [shape = 'u8[3072]{0}', space=vmem, size = 0xc00, scoped, tag = 'input window, operand 5, single buffered']
    #allocation8 [shape = 's32[1]{0}', space=sflag, size = 0x4, scoped, tag = 'scoped memory for rk_module_forward.1']
    #allocation9 [shape = 'u8[393216]{0}', space=vmem, size = 0x60000, scoped, tag = 'input window, operand 6, single buffered']
    #allocation10 [shape = 'u8[1024]{0}', space=vmem, size = 0x400, scoped, tag = 'input window, operand 7, single buffered']
    #allocation11 [shape = 's32[1]{0}', space=sflag, size = 0x4, scoped, tag = 'scoped memory for rk_module_forward.1']
    %13 = vsyncpa [#allocation3], 0
    %14 = vsyncpa [#allocation5], 0
    %15 = vsyncpa [#allocation8], 0
    %16 = vsyncpa [#allocation11], 0
    // Predicated region
    $region2: #{rk_module_forward.1} parent=1 // pred_check
      _
    $region3: #{rk_module_forward.1} parent=1 // pred_check_branch
      %18 = sbr.rel (0) target = $region5
    $region4: #{rk_module_forward.1} parent=1 // pred_region
      _
    $region5: #{rk_module_forward.1} parent=1 // pred_fallthru
      _
    // Predicated region
    $region6: #{rk_module_forward.1} parent=1 // pred_check
      _
    $region7: #{rk_module_forward.1} parent=1 // pred_check_branch
      %20 = sbr.rel (0) target = $region9
    $region8: #{rk_module_forward.1} parent=1 // pred_region
      %s22 = ssub.s32 256, 256
      %23 = vsyncadd [#allocation3], %s22
      %s24 = sshll.u32 [#allocation2], 4
      %s25 = int_to_ptr.vmem [resolvable:$true] %s24
      %30 = dma.hbm_to_vmem [thread:$0]  %s1, 256, %s25, [#allocation3], 128, 128, 8
    $region9: #{rk_module_forward.1} parent=1 // pred_fallthru
      _
    // Predicated region
    $region10: #{rk_module_forward.1} parent=1 // pred_check
      _
    $region11: #{rk_module_forward.1} parent=1 // pred_check_branch
      %32 = sbr.rel (0) target = $region13
    $region12: #{rk_module_forward.1} parent=1 // pred_region
      _
    $region13: #{rk_module_forward.1} parent=1 // pred_fallthru
      _
    // Predicated region
    $region14: #{rk_module_forward.1} parent=1 // pred_check
      _
    $region15: #{rk_module_forward.1} parent=1 // pred_check_branch
      %34 = sbr.rel (0) target = $region17
    $region16: #{rk_module_forward.1} parent=1 // pred_region
      %s36 = ssub.s32 6144, 6144
      %37 = vsyncadd [#allocation5], %s36
      %s38 = sshll.u32 [#allocation4], 4
      %s39 = int_to_ptr.vmem [resolvable:$true] %s38
      %44 = dma.hbm_to_vmem [thread:$0]  %s3, 6144, %s39, [#allocation5], 384, 384, 24
    $region17: #{rk_module_forward.1} parent=1 // pred_fallthru
      _
    // Predicated region
    $region18: #{rk_module_forward.1} parent=1 // pred_check
      _
    $region19: #{rk_module_forward.1} parent=1 // pred_check_branch
      %46 = sbr.rel (0) target = $region21
    $region20: #{rk_module_forward.1} parent=1 // pred_region
      %s48 = ssub.s32 36864, 36864
      %49 = vsyncadd [#allocation5], %s48
      %s50 = sshll.u32 [#allocation6], 4
      %s51 = int_to_ptr.vmem [resolvable:$true] %s50
      %56 = dma.hbm_to_vmem [thread:$0]  %s4, 36864, %s51, [#allocation5], 384, 384, 24
    $region21: #{rk_module_forward.1} parent=1 // pred_fallthru
      _
    // Predicated region
    $region22: #{rk_module_forward.1} parent=1 // pred_check
      _
    $region23: #{rk_module_forward.1} parent=1 // pred_check_branch
      %58 = sbr.rel (0) target = $region25
    $region24: #{rk_module_forward.1} parent=1 // pred_region
      %s60 = ssub.s32 96, 96
      %61 = vsyncadd [#allocation8], %s60
      %s63 = sshll.u32 [#allocation7], 4
      %s64 = int_to_ptr.vmem [resolvable:$true] %s63
      %66 = dma.hbm_to_vmem [thread:$0]  %s5, 96, %s64, [#allocation8]
    $region25: #{rk_module_forward.1} parent=1 // pred_fallthru
      _
    // Predicated region
    $region26: #{rk_module_forward.1} parent=1 // pred_check
      _
    $region27: #{rk_module_forward.1} parent=1 // pred_check_branch
      %68 = sbr.rel (0) target = $region29
    $region28: #{rk_module_forward.1} parent=1 // pred_region
      %s70 = ssub.s32 12288, 12288
      %71 = vsyncadd [#allocation8], %s70
      %s72 = sshll.u32 [#allocation9], 4
      %s73 = int_to_ptr.vmem [resolvable:$true] %s72
      %78 = dma.hbm_to_vmem [thread:$0]  %s6, 12288, %s73, [#allocation8], 128, 128, 8
    $region29: #{rk_module_forward.1} parent=1 // pred_fallthru
      _
    // Predicated region
    $region30: #{rk_module_forward.1} parent=1 // pred_check
      _
    $region31: #{rk_module_forward.1} parent=1 // pred_check_branch
      %80 = sbr.rel (0) target = $region33
    $region32: #{rk_module_forward.1} parent=1 // pred_region
      %s82 = ssub.s32 32, 32
      %83 = vsyncadd [#allocation11], %s82
      %s85 = sshll.u32 [#allocation10], 4
      %s86 = int_to_ptr.vmem [resolvable:$true] %s85
      %88 = dma.hbm_to_vmem [thread:$0]  %s7, 32, %s86, [#allocation11]
    $region33: #{rk_module_forward.1} parent=1 // pred_fallthru
      _
    // Predicated region
    $region34: #{rk_module_forward.1} parent=1 // pred_check
      _
    $region35: #{rk_module_forward.1} parent=1 // pred_check_branch
      %90 = sbr.rel (0) target = $region37
    $region36: #{rk_module_forward.1} parent=1 // pred_region
      %91 = dma.done [#allocation3], 256
    $region37: #{rk_module_forward.1} parent=1 // pred_fallthru
      _
    // Predicated region
    $region38: #{rk_module_forward.1} parent=1 // pred_check
      _
    $region39: #{rk_module_forward.1} parent=1 // pred_check_branch
      %93 = sbr.rel (0) target = $region41
    $region40: #{rk_module_forward.1} parent=1 // pred_region
      %94 = dma.done [#allocation5], 6144
    $region41: #{rk_module_forward.1} parent=1 // pred_fallthru
      _
    // Predicated region
    $region42: #{rk_module_forward.1} parent=1 // pred_check
      _
    $region43: #{rk_module_forward.1} parent=1 // pred_check_branch
      %96 = sbr.rel (0) target = $region45
    $region44: #{rk_module_forward.1} parent=1 // pred_region
      %97 = dma.done [#allocation5], 36864
    $region45: #{rk_module_forward.1} parent=1 // pred_fallthru
      _
    // Predicated region
    $region46: #{rk_module_forward.1} parent=1 // pred_check
      _
    $region47: #{rk_module_forward.1} parent=1 // pred_check_branch
      %99 = sbr.rel (0) target = $region49
    $region48: #{rk_module_forward.1} parent=1 // pred_region
      %100 = dma.done [#allocation8], 96
    $region49: #{rk_module_forward.1} parent=1 // pred_fallthru
      _
    // Predicated region
    $region50: #{rk_module_forward.1} parent=1 // pred_check
      _
    $region51: #{rk_module_forward.1} parent=1 // pred_check_branch
      %102 = sbr.rel (0) target = $region53
    $region52: #{rk_module_forward.1} parent=1 // pred_region
      %103 = dma.done [#allocation8], 12288
    $region53: #{rk_module_forward.1} parent=1 // pred_fallthru
      _
    // Predicated region
    $region54: #{rk_module_forward.1} parent=1 // pred_check
      _
    $region55: #{rk_module_forward.1} parent=1 // pred_check_branch
      %105 = sbr.rel (0) target = $region57
    $region56: #{rk_module_forward.1} parent=1 // pred_region
      %106 = dma.done [#allocation11], 32
    $region57: #{rk_module_forward.1} parent=1 // pred_fallthru
      _
    %v108 = vld [vmem:[#allocation2] sm:$0xff]
    %v109 = vld [vmem:[#allocation2 + $0x8] sm:$0xff]
    %v110 = vld [vmem:[%s2] sm:$0xff]
    %v111 = vld [vmem:[%s2 + $0x8] sm:$0xff]
    %v112 = vlaneseq
    %v113 = vand.u32 %v112, 127
    %v114 = vlaneseq
    %v115 = vshrl.u32 %v114, 7
    %v116 = vsub.s32 0, %v115
    %v117 = vrot.slane %v108, %v116
    %119 = vbcast.lane.b32.xlu0 %v117, 256
    %v120 = vpop.permute.xlu0 %119
    %v121 = vlaneseq
    %v122 = vshrl.u32 %v121, 7
    %v123 = vsub.s32 1, %v122
    %v124 = vrot.slane %v108, %v123
    %126 = vbcast.lane.b32.xlu0 %v124, 256
    %v127 = vpop.permute.xlu0 %126
    %v128 = vlaneseq
    %v129 = vshrl.u32 %v128, 7
    %v130 = vsub.s32 2, %v129
    %v131 = vrot.slane %v108, %v130
    %133 = vbcast.lane.b32.xlu0 %v131, 256
    %v134 = vpop.permute.xlu0 %133
    %v135 = vlaneseq
    %v136 = vshrl.u32 %v135, 7
    %v137 = vsub.s32 3, %v136
    %v138 = vrot.slane %v108, %v137
    %140 = vbcast.lane.b32.xlu0 %v138, 256
    %v141 = vpop.permute.xlu0 %140
    %v142 = vlaneseq
    %v143 = vshrl.u32 %v142, 7
    %v144 = vsub.s32 4, %v143
    %v145 = vrot.slane %v108, %v144
    %147 = vbcast.lane.b32.xlu0 %v145, 256
    %v148 = vpop.permute.xlu0 %147
    %v149 = vlaneseq
    %v150 = vshrl.u32 %v149, 7
    %v151 = vsub.s32 5, %v150
    %v152 = vrot.slane %v108, %v151
    %154 = vbcast.lane.b32.xlu0 %v152, 256
    %v155 = vpop.permute.xlu0 %154
    %v156 = vlaneseq
    %v157 = vshrl.u32 %v156, 7
    %v158 = vsub.s32 6, %v157
    %v159 = vrot.slane %v108, %v158
    %161 = vbcast.lane.b32.xlu0 %v159, 256
    %v162 = vpop.permute.xlu0 %161
    %v163 = vlaneseq
    %v164 = vshrl.u32 %v163, 7
    %v165 = vsub.s32 7, %v164
    %v166 = vrot.slane %v108, %v165
    %168 = vbcast.lane.b32.xlu0 %v166, 256
    %v169 = vpop.permute.xlu0 %168
    %v170 = vlaneseq
    %v171 = vshrl.u32 %v170, 7
    %v172 = vsub.s32 0, %v171
    %v173 = vrot.slane %v109, %v172
    %175 = vbcast.lane.b32.xlu0 %v173, 256
    %v176 = vpop.permute.xlu0 %175
    %v177 = vlaneseq
    %v178 = vshrl.u32 %v177, 7
    %v179 = vsub.s32 1, %v178
    %v180 = vrot.slane %v109, %v179
    %182 = vbcast.lane.b32.xlu0 %v180, 256
    %v183 = vpop.permute.xlu0 %182
    %v184 = vlaneseq
    %v185 = vshrl.u32 %v184, 7
    %v186 = vsub.s32 2, %v185
    %v187 = vrot.slane %v109, %v186
    %189 = vbcast.lane.b32.xlu0 %v187, 256
    %v190 = vpop.permute.xlu0 %189
    %v191 = vlaneseq
    %v192 = vshrl.u32 %v191, 7
    %v193 = vsub.s32 3, %v192
    %v194 = vrot.slane %v109, %v193
    %196 = vbcast.lane.b32.xlu0 %v194, 256
    %v197 = vpop.permute.xlu0 %196
    %v198 = vlaneseq
    %v199 = vshrl.u32 %v198, 7
    %v200 = vsub.s32 4, %v199
    %v201 = vrot.slane %v109, %v200
    %203 = vbcast.lane.b32.xlu0 %v201, 256
    %v204 = vpop.permute.xlu0 %203
    %v205 = vlaneseq
    %v206 = vshrl.u32 %v205, 7
    %v207 = vsub.s32 5, %v206
    %v208 = vrot.slane %v109, %v207
    %210 = vbcast.lane.b32.xlu0 %v208, 256
    %v211 = vpop.permute.xlu0 %210
    %v212 = vlaneseq
    %v213 = vshrl.u32 %v212, 7
    %v214 = vsub.s32 6, %v213
    %v215 = vrot.slane %v109, %v214
    %217 = vbcast.lane.b32.xlu0 %v215, 256
    %v218 = vpop.permute.xlu0 %217
    %v219 = vlaneseq
    %v220 = vshrl.u32 %v219, 7
    %v221 = vsub.s32 7, %v220
    %v222 = vrot.slane %v109, %v221
    %224 = vbcast.lane.b32.xlu0 %v222, 256
    %v225 = vpop.permute.xlu0 %224
    %vm226 = vcmp.eq.s32.totalorder %v120, %v113
    %vm227 = vcmp.eq.s32.totalorder %v127, %v113
    %vm228 = vcmp.eq.s32.totalorder %v134, %v113
    %vm229 = vcmp.eq.s32.totalorder %v141, %v113
    %vm230 = vcmp.eq.s32.totalorder %v148, %v113
    %vm231 = vcmp.eq.s32.totalorder %v155, %v113
    %vm232 = vcmp.eq.s32.totalorder %v162, %v113
    %vm233 = vcmp.eq.s32.totalorder %v169, %v113
    %vm234 = vcmp.eq.s32.totalorder %v176, %v113
    %vm235 = vcmp.eq.s32.totalorder %v183, %v113
    %vm236 = vcmp.eq.s32.totalorder %v190, %v113
    %vm237 = vcmp.eq.s32.totalorder %v197, %v113
    %vm238 = vcmp.eq.s32.totalorder %v204, %v113
    %vm239 = vcmp.eq.s32.totalorder %v211, %v113
    %vm240 = vcmp.eq.s32.totalorder %v218, %v113
    %vm241 = vcmp.eq.s32.totalorder %v225, %v113
    %v242 = vlaneseq
    %v243 = vshrl.u32 %v242, 7
    %v244 = vsub.s32 0, %v243
    %v245 = vrot.slane %v110, %v244
    %247 = vbcast.lane.b32.xlu0 %v245, 256
    %v248 = vpop.permute.xlu0 %247
    %v249 = vlaneseq
    %v250 = vshrl.u32 %v249, 7
    %v251 = vsub.s32 1, %v250
    %v252 = vrot.slane %v110, %v251
    %254 = vbcast.lane.b32.xlu0 %v252, 256
    %v255 = vpop.permute.xlu0 %254
    %v256 = vlaneseq
    %v257 = vshrl.u32 %v256, 7
    %v258 = vsub.s32 2, %v257
    %v259 = vrot.slane %v110, %v258
    %261 = vbcast.lane.b32.xlu0 %v259, 256
    %v262 = vpop.permute.xlu0 %261
    %v263 = vlaneseq
    %v264 = vshrl.u32 %v263, 7
    %v265 = vsub.s32 3, %v264
    %v266 = vrot.slane %v110, %v265
    %268 = vbcast.lane.b32.xlu0 %v266, 256
    %v269 = vpop.permute.xlu0 %268
    %v270 = vlaneseq
    %v271 = vshrl.u32 %v270, 7
    %v272 = vsub.s32 4, %v271
    %v273 = vrot.slane %v110, %v272
    %275 = vbcast.lane.b32.xlu0 %v273, 256
    %v276 = vpop.permute.xlu0 %275
    %v277 = vlaneseq
    %v278 = vshrl.u32 %v277, 7
    %v279 = vsub.s32 5, %v278
    %v280 = vrot.slane %v110, %v279
    %282 = vbcast.lane.b32.xlu0 %v280, 256
    %v283 = vpop.permute.xlu0 %282
    %v284 = vlaneseq
    %v285 = vshrl.u32 %v284, 7
    %v286 = vsub.s32 6, %v285
    %v287 = vrot.slane %v110, %v286
    %289 = vbcast.lane.b32.xlu0 %v287, 256
    %v290 = vpop.permute.xlu0 %289
    %v291 = vlaneseq
    %v292 = vshrl.u32 %v291, 7
    %v293 = vsub.s32 7, %v292
    %v294 = vrot.slane %v110, %v293
    %296 = vbcast.lane.b32.xlu0 %v294, 256
    %v297 = vpop.permute.xlu0 %296
    %v298 = vlaneseq
    %v299 = vshrl.u32 %v298, 7
    %v300 = vsub.s32 0, %v299
    %v301 = vrot.slane %v111, %v300
    %303 = vbcast.lane.b32.xlu0 %v301, 256
    %v304 = vpop.permute.xlu0 %303
    %v305 = vlaneseq
    %v306 = vshrl.u32 %v305, 7
    %v307 = vsub.s32 1, %v306
    %v308 = vrot.slane %v111, %v307
    %310 = vbcast.lane.b32.xlu0 %v308, 256
    %v311 = vpop.permute.xlu0 %310
    %v312 = vlaneseq
    %v313 = vshrl.u32 %v312, 7
    %v314 = vsub.s32 2, %v313
    %v315 = vrot.slane %v111, %v314
    %317 = vbcast.lane.b32.xlu0 %v315, 256
    %v318 = vpop.permute.xlu0 %317
    %v319 = vlaneseq
    %v320 = vshrl.u32 %v319, 7
    %v321 = vsub.s32 3, %v320
    %v322 = vrot.slane %v111, %v321
    %324 = vbcast.lane.b32.xlu0 %v322, 256
    %v325 = vpop.permute.xlu0 %324
    %v326 = vlaneseq
    %v327 = vshrl.u32 %v326, 7
    %v328 = vsub.s32 4, %v327
    %v329 = vrot.slane %v111, %v328
    %331 = vbcast.lane.b32.xlu0 %v329, 256
    %v332 = vpop.permute.xlu0 %331
    %v333 = vlaneseq
    %v334 = vshrl.u32 %v333, 7
    %v335 = vsub.s32 5, %v334
    %v336 = vrot.slane %v111, %v335
    %338 = vbcast.lane.b32.xlu0 %v336, 256
    %v339 = vpop.permute.xlu0 %338
    %v340 = vlaneseq
    %v341 = vshrl.u32 %v340, 7
    %v342 = vsub.s32 6, %v341
    %v343 = vrot.slane %v111, %v342
    %345 = vbcast.lane.b32.xlu0 %v343, 256
    %v346 = vpop.permute.xlu0 %345
    %v347 = vlaneseq
    %v348 = vshrl.u32 %v347, 7
    %v349 = vsub.s32 7, %v348
    %v350 = vrot.slane %v111, %v349
    %352 = vbcast.lane.b32.xlu0 %v350, 256
    %v353 = vpop.permute.xlu0 %352
    %v354 = vsel %vm226, %v248, 0.0
    %v355 = vsel %vm227, %v255, 0.0
    %v356 = vsel %vm228, %v262, 0.0
    %v357 = vsel %vm229, %v269, 0.0
    %v358 = vsel %vm230, %v276, 0.0
    %v359 = vsel %vm231, %v283, 0.0
    %v360 = vsel %vm232, %v290, 0.0
    %v361 = vsel %vm233, %v297, 0.0
    %v362 = vsel %vm234, %v304, 0.0
    %v363 = vsel %vm235, %v311, 0.0
    %v364 = vsel %vm236, %v318, 0.0
    %v365 = vsel %vm237, %v325, 0.0
    %v366 = vsel %vm238, %v332, 0.0
    %v367 = vsel %vm239, %v339, 0.0
    %v368 = vsel %vm240, %v346, 0.0
    %v369 = vsel %vm241, %v353, 0.0
    %v370 = vrot.slane %v354, 4
    %v371 = vadd.f32 %v354, %v370
    %v372 = vrot.slane %v371, 2
    %v373 = vadd.f32 %v371, %v372
    %v374 = vrot.slane %v373, 1
    %v375 = vadd.f32 %v373, %v374
    %v376 = vrot.slane %v355, 4
    %v377 = vadd.f32 %v355, %v376
    %v378 = vrot.slane %v377, 2
    %v379 = vadd.f32 %v377, %v378
    %v380 = vrot.slane %v379, 1
    %v381 = vadd.f32 %v379, %v380
    %v382 = vrot.slane %v356, 4
    %v383 = vadd.f32 %v356, %v382
    %v384 = vrot.slane %v383, 2
    %v385 = vadd.f32 %v383, %v384
    %v386 = vrot.slane %v385, 1
    %v387 = vadd.f32 %v385, %v386
    %v388 = vrot.slane %v357, 4
    %v389 = vadd.f32 %v357, %v388
    %v390 = vrot.slane %v389, 2
    %v391 = vadd.f32 %v389, %v390
    %v392 = vrot.slane %v391, 1
    %v393 = vadd.f32 %v391, %v392
    %v394 = vrot.slane %v358, 4
    %v395 = vadd.f32 %v358, %v394
    %v396 = vrot.slane %v395, 2
    %v397 = vadd.f32 %v395, %v396
    %v398 = vrot.slane %v397, 1
    %v399 = vadd.f32 %v397, %v398
    %v400 = vrot.slane %v359, 4
    %v401 = vadd.f32 %v359, %v400
    %v402 = vrot.slane %v401, 2
    %v403 = vadd.f32 %v401, %v402
    %v404 = vrot.slane %v403, 1
    %v405 = vadd.f32 %v403, %v404
    %v406 = vrot.slane %v360, 4
    %v407 = vadd.f32 %v360, %v406
    %v408 = vrot.slane %v407, 2
    %v409 = vadd.f32 %v407, %v408
    %v410 = vrot.slane %v409, 1
    %v411 = vadd.f32 %v409, %v410
    %v412 = vrot.slane %v361, 4
    %v413 = vadd.f32 %v361, %v412
    %v414 = vrot.slane %v413, 2
    %v415 = vadd.f32 %v413, %v414
    %v416 = vrot.slane %v415, 1
    %v417 = vadd.f32 %v415, %v416
    %v418 = vrot.slane %v362, 4
    %v419 = vadd.f32 %v362, %v418
    %v420 = vrot.slane %v419, 2
    %v421 = vadd.f32 %v419, %v420
    %v422 = vrot.slane %v421, 1
    %v423 = vadd.f32 %v421, %v422
    %v424 = vrot.slane %v363, 4
    %v425 = vadd.f32 %v363, %v424
    %v426 = vrot.slane %v425, 2
    %v427 = vadd.f32 %v425, %v426
    %v428 = vrot.slane %v427, 1
    %v429 = vadd.f32 %v427, %v428
    %v430 = vrot.slane %v364, 4
    %v431 = vadd.f32 %v364, %v430
    %v432 = vrot.slane %v431, 2
    %v433 = vadd.f32 %v431, %v432
    %v434 = vrot.slane %v433, 1
    %v435 = vadd.f32 %v433, %v434
    %v436 = vrot.slane %v365, 4
    %v437 = vadd.f32 %v365, %v436
    %v438 = vrot.slane %v437, 2
    %v439 = vadd.f32 %v437, %v438
    %v440 = vrot.slane %v439, 1
    %v441 = vadd.f32 %v439, %v440
    %v442 = vrot.slane %v366, 4
    %v443 = vadd.f32 %v366, %v442
    %v444 = vrot.slane %v443, 2
    %v445 = vadd.f32 %v443, %v444
    %v446 = vrot.slane %v445, 1
    %v447 = vadd.f32 %v445, %v446
    %v448 = vrot.slane %v367, 4
    %v449 = vadd.f32 %v367, %v448
    %v450 = vrot.slane %v449, 2
    %v451 = vadd.f32 %v449, %v450
    %v452 = vrot.slane %v451, 1
    %v453 = vadd.f32 %v451, %v452
    %v454 = vrot.slane %v368, 4
    %v455 = vadd.f32 %v368, %v454
    %v456 = vrot.slane %v455, 2
    %v457 = vadd.f32 %v455, %v456
    %v458 = vrot.slane %v457, 1
    %v459 = vadd.f32 %v457, %v458
    %v460 = vrot.slane %v369, 4
    %v461 = vadd.f32 %v369, %v460
    %v462 = vrot.slane %v461, 2
    %v463 = vadd.f32 %v461, %v462
    %v464 = vrot.slane %v463, 1
    %v465 = vadd.f32 %v463, %v464
    %vm466 = vcmask 64512
    %v467 = vsel %vm466, %v110, 0.0
    %468 = vadd.xlane.f32.xlu0 %v467
    %v469 = vpop.xlane.xlu0 %468
    %v470 = vsel %vm466, %v111, 0.0
    %471 = vadd.xlane.f32.xlu0 %v470
    %v472 = vpop.xlane.xlu0 %471
    %v473 = vmax.f32 %v469, 1.0
    %v474 = vmax.f32 %v472, 1.0
    %v475 = vrcp.pop %v473
    %v476 = vrcp.pop %v474
    %v479 = vrot.slane %v475, 1
    %v480 = vrot.slane %v475, 2
    %v481 = vrot.slane %v475, 3
    %v482 = vrot.slane %v475, 4
    %v483 = vrot.slane %v475, 5
    %v484 = vrot.slane %v475, 6
    %v485 = vrot.slane %v475, 7
    %v486 = vrot.slane %v476, 1
    %v487 = vrot.slane %v476, 2
    %v488 = vrot.slane %v476, 3
    %v489 = vrot.slane %v476, 4
    %v490 = vrot.slane %v476, 5
    %v491 = vrot.slane %v476, 6
    %v492 = vrot.slane %v476, 7
    %v509 = vmul.f32 %v375, %v475
    %v510 = vmul.f32 %v381, %v479
    %v511 = vmul.f32 %v387, %v480
    %v512 = vmul.f32 %v393, %v481
    %v513 = vmul.f32 %v399, %v482
    %v514 = vmul.f32 %v405, %v483
    %v515 = vmul.f32 %v411, %v484
    %v516 = vmul.f32 %v417, %v485
    %v517 = vmul.f32 %v423, %v476
    %v518 = vmul.f32 %v429, %v486
    %v519 = vmul.f32 %v435, %v487
    %v520 = vmul.f32 %v441, %v488
    %v521 = vmul.f32 %v447, %v489
    %v522 = vmul.f32 %v453, %v490
    %v523 = vmul.f32 %v459, %v491
    %v524 = vmul.f32 %v465, %v492
    %v525 = vpack.c.bf16 %v509, %v509
    %v526 = vpack.c.bf16 %v510, %v510
    %v527 = vpack.c.bf16 %v511, %v511
    %v528 = vpack.c.bf16 %v512, %v512
    %v529 = vpack.c.bf16 %v513, %v513
    %v530 = vpack.c.bf16 %v514, %v514
    %v531 = vpack.c.bf16 %v515, %v515
    %v532 = vpack.c.bf16 %v516, %v516
    %v533 = vpack.c.bf16 %v517, %v517
    %v534 = vpack.c.bf16 %v518, %v518
    %v535 = vpack.c.bf16 %v519, %v519
    %v536 = vpack.c.bf16 %v520, %v520
    %v537 = vpack.c.bf16 %v521, %v521
    %v538 = vpack.c.bf16 %v522, %v522
    %v539 = vpack.c.bf16 %v523, %v523
    %v540 = vpack.c.bf16 %v524, %v524
    %v541 = vld [vmem:[%s0] sm:$0x3]
    %v542 = vsub.s32 %v541, 1
    %vm543 = vcmp.gt.s32.totalorder %v542, 0
    %v544 = vsel %vm543, %v542, 0
    %vm545 = vcmp.lt.s32.totalorder %v544, 7
    %v546 = vsel %vm545, %v544, 7
    %v547 = vlaneseq
    %v548 = vshrl.u32 %v547, 7
    %v549 = vmul.u32 %v548, 8
    %vm550 = vcmp.eq.s32.totalorder %v113, %v549
    %v551 = vsel %vm550, 1, 0
    %v552 = vcvt.s32.f32 %v551
    %v553 = vpack.c.bf16 %v552, %v552
    %v554 = vadd.s32 %v549, %v546
    %555 = vset.pattern.permute.xlu0 0
    %556 = vperm.xlu0 %555, %v554
    %v557 = vpop.permute.xlu0 %556
    %vm558 = vcmp.eq.s32.totalorder %v113, %v557
    %v559 = vsel %vm558, 1, 0
    %v560 = vcvt.s32.f32 %v559
    %v561 = vpack.c.bf16 %v560, %v560
    %v563 = vrot.slane %v561, 7
    %vm564 = vcmask 1040384
    %v567 = vsel %vm564, %v553, %v563
    %v584 = vunpack.c.l.b16 %v525
    %v585 = vunpack.c.l.b16 %v526
    %v586 = vunpack.c.l.b16 %v527
    %v587 = vunpack.c.l.b16 %v528
    %v588 = vunpack.c.l.b16 %v529
    %v589 = vunpack.c.l.b16 %v530
    %v590 = vunpack.c.l.b16 %v531
    %v591 = vunpack.c.l.b16 %v532
    %v592 = vunpack.c.l.b16 %v533
    %v593 = vunpack.c.l.b16 %v534
    %v594 = vunpack.c.l.b16 %v535
    %v595 = vunpack.c.l.b16 %v536
    %v596 = vunpack.c.l.b16 %v537
    %v597 = vunpack.c.l.b16 %v538
    %v598 = vunpack.c.l.b16 %v539
    %v599 = vunpack.c.l.b16 %v540
    %v600 = vrot.slane %v585, 7
    %vm601 = vcmask 1041409
    %v602 = vsel %vm601, %v600, %v584
    %v603 = vrot.slane %v586, 6
    %vm604 = vcmask 1042434
    %v605 = vsel %vm604, %v603, %v602
    %v606 = vrot.slane %v587, 5
    %vm607 = vcmask 1043459
    %v608 = vsel %vm607, %v606, %v605
    %v609 = vrot.slane %v588, 4
    %vm610 = vcmask 1044484
    %v611 = vsel %vm610, %v609, %v608
    %v612 = vrot.slane %v589, 3
    %vm613 = vcmask 1045509
    %v614 = vsel %vm613, %v612, %v611
    %v615 = vrot.slane %v590, 2
    %vm616 = vcmask 1046534
    %v617 = vsel %vm616, %v615, %v614
    %v618 = vrot.slane %v591, 1
    %vm619 = vcmask 1047559
    %v620 = vsel %vm619, %v618, %v617
    %v621 = vrot.slane %v593, 7
    %v622 = vsel %vm601, %v621, %v592
    %v623 = vrot.slane %v594, 6
    %v624 = vsel %vm604, %v623, %v622
    %v625 = vrot.slane %v595, 5
    %v626 = vsel %vm607, %v625, %v624
    %v627 = vrot.slane %v596, 4
    %v628 = vsel %vm610, %v627, %v626
    %v629 = vrot.slane %v597, 3
    %v630 = vsel %vm613, %v629, %v628
    %v631 = vrot.slane %v598, 2
    %v632 = vsel %vm616, %v631, %v630
    %v633 = vrot.slane %v599, 1
    %v634 = vsel %vm619, %v633, %v632
    %v635 = vpack.c.b16 %v634, %v620
    %vm637 = vcmask 130048
    %v638 = vsel %vm637, %v567, 0
    %640 = vmatprep.subr.bf16.mxu0 0
    %641 = vmatpush1.bf16.msra.mxu0 0
    %642 = vmatprep.subr.bf16.mxu0 0
    %643 = vmatpush1.bf16.msra.mxu0 0
    %644 = vmatprep.subr.bf16.mxu0 0
    %645 = vmatpush1.bf16.msra.mxu0 0
    %646 = vmatprep.subr.bf16.mxu0 0
    %647 = vmatpush1.bf16.msra.mxu0 0
    %648 = vmatprep.subr.bf16.mxu0 0
    %649 = vmatpush1.bf16.msra.mxu0 0
    %650 = vmatprep.subr.bf16.mxu0 0
    %651 = vmatpush1.bf16.msra.mxu0 0
    %652 = vmatprep.subr.bf16.mxu0 0
    %653 = vmatpush1.bf16.msra.mxu0 0
    %654 = vmatprep.subr.bf16.mxu0 0
    %655 = vmatpush1.bf16.msra.mxu0 %v635
    %656 = vmatprep.subr.bf16.mxu0 0
    %657 = vmatpush2.bf16.msra.mxu0 0
    %658 = vmatprep.subr.bf16.mxu0 0
    %659 = vmatpush2.bf16.msra.mxu0 0
    %660 = vmatprep.subr.bf16.mxu0 0
    %661 = vmatpush2.bf16.msra.mxu0 0
    %662 = vmatprep.subr.bf16.mxu0 0
    %663 = vmatpush2.bf16.msra.mxu0 0
    %664 = vmatprep.subr.bf16.mxu0 0
    %665 = vmatpush2.bf16.msra.mxu0 0
    %666 = vmatprep.subr.bf16.mxu0 0
    %667 = vmatpush2.bf16.msra.mxu0 0
    %668 = vmatprep.subr.bf16.mxu0 0
    %669 = vmatpush2.bf16.msra.mxu0 0
    %670 = vmatprep.subr.bf16.mxu0 0
    %671 = vmatpush2.bf16.msra.mxu0 0
    %672 = vmatprep.mubr.bf16.mxu0 0
    %673 = vmatmul.mubr.bf16.gmra.mxu0 %v638
    %v674 = vpop.f32.mrf.mxu0
    %v675 = vadd.f32 0.0, %v674
    %v676 = vpop.f32.mrf.mxu0
    %v677 = vpop.f32.mrf.mxu0
    %v678 = vpop.f32.mrf.mxu0
    %679 = vdwg.mxu0
    %v680 = vpack.c.bf16 %v675, %v675
    %v681 = vld [vmem:[#allocation4] sm:$0xff]
    %v682 = vld [vmem:[#allocation4 + $0x8] sm:$0xff]
    %v683 = vld [vmem:[#allocation4 + $0x10] sm:$0xff]
    %v684 = vld [vmem:[#allocation4 + $0x18] sm:$0xff]
    %v685 = vld [vmem:[#allocation4 + $0x20] sm:$0xff]
    %v686 = vld [vmem:[#allocation4 + $0x28] sm:$0xff]
    %v687 = vld [vmem:[#allocation4 + $0x30] sm:$0xff]
    %v688 = vld [vmem:[#allocation4 + $0x38] sm:$0xff]
    %v689 = vld [vmem:[#allocation4 + $0x40] sm:$0xff]
    %v690 = vld [vmem:[#allocation4 + $0x48] sm:$0xff]
    %v691 = vld [vmem:[#allocation4 + $0x50] sm:$0xff]
    %v692 = vld [vmem:[#allocation4 + $0x58] sm:$0xff]
    %v693 = vld [vmem:[#allocation4 + $0x60] sm:$0xff]
    %v694 = vld [vmem:[#allocation4 + $0x68] sm:$0xff]
    %v695 = vld [vmem:[#allocation4 + $0x70] sm:$0xff]
    %v696 = vld [vmem:[#allocation4 + $0x78] sm:$0xff]
    %v697 = vld [vmem:[#allocation4 + $0x80] sm:$0xff]
    %v698 = vld [vmem:[#allocation4 + $0x88] sm:$0xff]
    %v699 = vld [vmem:[#allocation4 + $0x90] sm:$0xff]
    %v700 = vld [vmem:[#allocation4 + $0x98] sm:$0xff]
    %v701 = vld [vmem:[#allocation4 + $0xa0] sm:$0xff]
    %v702 = vld [vmem:[#allocation4 + $0xa8] sm:$0xff]
    %v703 = vld [vmem:[#allocation4 + $0xb0] sm:$0xff]
    %v704 = vld [vmem:[#allocation4 + $0xb8] sm:$0xff]
    %v705 = vld [vmem:[#allocation4 + $0xc0] sm:$0xff]
    %v706 = vld [vmem:[#allocation4 + $0xc8] sm:$0xff]
    %v707 = vld [vmem:[#allocation4 + $0xd0] sm:$0xff]
    %v708 = vld [vmem:[#allocation4 + $0xd8] sm:$0xff]
    %v709 = vld [vmem:[#allocation4 + $0xe0] sm:$0xff]
    %v710 = vld [vmem:[#allocation4 + $0xe8] sm:$0xff]
    %v711 = vld [vmem:[#allocation4 + $0xf0] sm:$0xff]
    %v712 = vld [vmem:[#allocation4 + $0xf8] sm:$0xff]
    %v713 = vld [vmem:[#allocation4 + $0x100] sm:$0xff]
    %v714 = vld [vmem:[#allocation4 + $0x108] sm:$0xff]
    %v715 = vld [vmem:[#allocation4 + $0x110] sm:$0xff]
    %v716 = vld [vmem:[#allocation4 + $0x118] sm:$0xff]
    %v717 = vld [vmem:[#allocation4 + $0x120] sm:$0xff]
    %v718 = vld [vmem:[#allocation4 + $0x128] sm:$0xff]
    %v719 = vld [vmem:[#allocation4 + $0x130] sm:$0xff]
    %v720 = vld [vmem:[#allocation4 + $0x138] sm:$0xff]
    %v721 = vld [vmem:[#allocation4 + $0x140] sm:$0xff]
    %v722 = vld [vmem:[#allocation4 + $0x148] sm:$0xff]
    %v723 = vld [vmem:[#allocation4 + $0x150] sm:$0xff]
    %v724 = vld [vmem:[#allocation4 + $0x158] sm:$0xff]
    %v725 = vld [vmem:[#allocation4 + $0x160] sm:$0xff]
    %v726 = vld [vmem:[#allocation4 + $0x168] sm:$0xff]
    %v727 = vld [vmem:[#allocation4 + $0x170] sm:$0xff]
    %v728 = vld [vmem:[#allocation4 + $0x178] sm:$0xff]
    %v777 = vunpack.c.l.b16 %v681
    %v778 = vunpack.c.h.b16 %v681
    %v779 = vunpack.c.l.b16 %v682
    %v780 = vunpack.c.h.b16 %v682
    %v781 = vunpack.c.l.b16 %v683
    %v782 = vunpack.c.h.b16 %v683
    %v783 = vunpack.c.l.b16 %v684
    %v784 = vunpack.c.h.b16 %v684
    %v785 = vunpack.c.l.b16 %v685
    %v786 = vunpack.c.h.b16 %v685
    %v787 = vunpack.c.l.b16 %v686
    %v788 = vunpack.c.h.b16 %v686
    %v789 = vunpack.c.l.b16 %v687
    %v790 = vunpack.c.h.b16 %v687
    %v791 = vunpack.c.l.b16 %v688
    %v792 = vunpack.c.h.b16 %v688
    %v793 = vunpack.c.l.b16 %v689
    %v794 = vunpack.c.h.b16 %v689
    %v795 = vunpack.c.l.b16 %v690
    %v796 = vunpack.c.h.b16 %v690
    %v797 = vunpack.c.l.b16 %v691
    %v798 = vunpack.c.h.b16 %v691
    %v799 = vunpack.c.l.b16 %v692
    %v800 = vunpack.c.h.b16 %v692
    %v801 = vunpack.c.l.b16 %v693
    %v802 = vunpack.c.h.b16 %v693
    %v803 = vunpack.c.l.b16 %v694
    %v804 = vunpack.c.h.b16 %v694
    %v805 = vunpack.c.l.b16 %v695
    %v806 = vunpack.c.h.b16 %v695
    %v807 = vunpack.c.l.b16 %v696
    %v808 = vunpack.c.h.b16 %v696
    %v809 = vunpack.c.l.b16 %v697
    %v810 = vunpack.c.h.b16 %v697
    %v811 = vunpack.c.l.b16 %v698
    %v812 = vunpack.c.h.b16 %v698
    %v813 = vunpack.c.l.b16 %v699
    %v814 = vunpack.c.h.b16 %v699
    %v815 = vunpack.c.l.b16 %v700
    %v816 = vunpack.c.h.b16 %v700
    %v817 = vunpack.c.l.b16 %v701
    %v818 = vunpack.c.h.b16 %v701
    %v819 = vunpack.c.l.b16 %v702
    %v820 = vunpack.c.h.b16 %v702
    %v821 = vunpack.c.l.b16 %v703
    %v822 = vunpack.c.h.b16 %v703
    %v823 = vunpack.c.l.b16 %v704
    %v824 = vunpack.c.h.b16 %v704
    %v825 = vunpack.c.l.b16 %v705
    %v826 = vunpack.c.h.b16 %v705
    %v827 = vunpack.c.l.b16 %v706
    %v828 = vunpack.c.h.b16 %v706
    %v829 = vunpack.c.l.b16 %v707
    %v830 = vunpack.c.h.b16 %v707
    %v831 = vunpack.c.l.b16 %v708
    %v832 = vunpack.c.h.b16 %v708
    %v833 = vunpack.c.l.b16 %v709
    %v834 = vunpack.c.h.b16 %v709
    %v835 = vunpack.c.l.b16 %v710
    %v836 = vunpack.c.h.b16 %v710
    %v837 = vunpack.c.l.b16 %v711
    %v838 = vunpack.c.h.b16 %v711
    %v839 = vunpack.c.l.b16 %v712
    %v840 = vunpack.c.h.b16 %v712
    %v841 = vunpack.c.l.b16 %v713
    %v842 = vunpack.c.h.b16 %v713
    %v843 = vunpack.c.l.b16 %v714
    %v844 = vunpack.c.h.b16 %v714
    %v845 = vunpack.c.l.b16 %v715
    %v846 = vunpack.c.h.b16 %v715
    %v847 = vunpack.c.l.b16 %v716
    %v848 = vunpack.c.h.b16 %v716
    %v849 = vunpack.c.l.b16 %v717
    %v850 = vunpack.c.h.b16 %v717
    %v851 = vunpack.c.l.b16 %v718
    %v852 = vunpack.c.h.b16 %v718
    %v853 = vunpack.c.l.b16 %v719
    %v854 = vunpack.c.h.b16 %v719
    %v855 = vunpack.c.l.b16 %v720
    %v856 = vunpack.c.h.b16 %v720
    %v857 = vunpack.c.l.b16 %v721
    %v858 = vunpack.c.h.b16 %v721
    %v859 = vunpack.c.l.b16 %v722
    %v860 = vunpack.c.h.b16 %v722
    %v861 = vunpack.c.l.b16 %v723
    %v862 = vunpack.c.h.b16 %v723
    %v863 = vunpack.c.l.b16 %v724
    %v864 = vunpack.c.h.b16 %v724
    %v865 = vunpack.c.l.b16 %v725
    %v866 = vunpack.c.h.b16 %v725
    %v867 = vunpack.c.l.b16 %v726
    %v868 = vunpack.c.h.b16 %v726
    %v869 = vunpack.c.l.b16 %v727
    %v870 = vunpack.c.h.b16 %v727
    %v871 = vunpack.c.l.b16 %v728
    %v872 = vunpack.c.h.b16 %v728
    %v873 = vpack.c.b16 %v783, %v777
    %v874 = vpack.c.b16 %v784, %v778
    %v875 = vpack.c.b16 %v785, %v779
    %v876 = vpack.c.b16 %v786, %v780
    %v877 = vpack.c.b16 %v787, %v781
    %v878 = vpack.c.b16 %v788, %v782
    %v879 = vpack.c.b16 %v795, %v789
    %v880 = vpack.c.b16 %v796, %v790
    %v881 = vpack.c.b16 %v797, %v791
    %v882 = vpack.c.b16 %v798, %v792
    %v883 = vpack.c.b16 %v799, %v793
    %v884 = vpack.c.b16 %v800, %v794
    %v885 = vpack.c.b16 %v807, %v801
    %v886 = vpack.c.b16 %v808, %v802
    %v887 = vpack.c.b16 %v809, %v803
    %v888 = vpack.c.b16 %v810, %v804
    %v889 = vpack.c.b16 %v811, %v805
    %v890 = vpack.c.b16 %v812, %v806
    %v891 = vpack.c.b16 %v819, %v813
    %v892 = vpack.c.b16 %v820, %v814
    %v893 = vpack.c.b16 %v821, %v815
    %v894 = vpack.c.b16 %v822, %v816
    %v895 = vpack.c.b16 %v823, %v817
    %v896 = vpack.c.b16 %v824, %v818
    %v897 = vpack.c.b16 %v831, %v825
    %v898 = vpack.c.b16 %v832, %v826
    %v899 = vpack.c.b16 %v833, %v827
    %v900 = vpack.c.b16 %v834, %v828
    %v901 = vpack.c.b16 %v835, %v829
    %v902 = vpack.c.b16 %v836, %v830
    %v903 = vpack.c.b16 %v843, %v837
    %v904 = vpack.c.b16 %v844, %v838
    %v905 = vpack.c.b16 %v845, %v839
    %v906 = vpack.c.b16 %v846, %v840
    %v907 = vpack.c.b16 %v847, %v841
    %v908 = vpack.c.b16 %v848, %v842
    %v909 = vpack.c.b16 %v855, %v849
    %v910 = vpack.c.b16 %v856, %v850
    %v911 = vpack.c.b16 %v857, %v851
    %v912 = vpack.c.b16 %v858, %v852
    %v913 = vpack.c.b16 %v859, %v853
    %v914 = vpack.c.b16 %v860, %v854
    %v915 = vpack.c.b16 %v867, %v861
    %v916 = vpack.c.b16 %v868, %v862
    %v917 = vpack.c.b16 %v869, %v863
    %v918 = vpack.c.b16 %v870, %v864
    %v919 = vpack.c.b16 %v871, %v865
    %v920 = vpack.c.b16 %v872, %v866
    %969 = vmatprep.subr.bf16.mxu0 %v916
    %970 = vmatpush1.bf16.msra.mxu0 %v915
    %971 = vmatprep.subr.bf16.mxu0 %v910
    %972 = vmatpush1.bf16.msra.mxu0 %v909
    %973 = vmatprep.subr.bf16.mxu0 %v904
    %974 = vmatpush1.bf16.msra.mxu0 %v903
    %975 = vmatprep.subr.bf16.mxu0 %v898
    %976 = vmatpush1.bf16.msra.mxu0 %v897
    %977 = vmatprep.subr.bf16.mxu0 %v892
    %978 = vmatpush1.bf16.msra.mxu0 %v891
    %979 = vmatprep.subr.bf16.mxu0 %v886
    %980 = vmatpush1.bf16.msra.mxu0 %v885
    %981 = vmatprep.subr.bf16.mxu0 %v880
    %982 = vmatpush1.bf16.msra.mxu0 %v879
    %983 = vmatprep.subr.bf16.mxu0 %v874
    %984 = vmatpush1.bf16.msra.mxu0 %v873
    %985 = vmatprep.subr.bf16.mxu0 0
    %986 = vmatpush2.bf16.msra.mxu0 0
    %987 = vmatprep.subr.bf16.mxu0 0
    %988 = vmatpush2.bf16.msra.mxu0 0
    %989 = vmatprep.subr.bf16.mxu0 0
    %990 = vmatpush2.bf16.msra.mxu0 0
    %991 = vmatprep.subr.bf16.mxu0 0
    %992 = vmatpush2.bf16.msra.mxu0 0
    %993 = vmatprep.subr.bf16.mxu0 0
    %994 = vmatpush2.bf16.msra.mxu0 0
    %995 = vmatprep.subr.bf16.mxu0 0
    %996 = vmatpush2.bf16.msra.mxu0 0
    %997 = vmatprep.subr.bf16.mxu0 0
    %998 = vmatpush2.bf16.msra.mxu0 0
    %999 = vmatprep.subr.bf16.mxu0 0
    %1000 = vmatpush2.bf16.msra.mxu0 0
    %1001 = vmatprep.mubr.bf16.mxu0 0
    %1002 = vmatmul.mubr.bf16.gmra.mxu0 %v680
    %v1003 = vpop.f32.mrf.mxu0
    %v1004 = vadd.f32 0.0, %v1003
    %v1005 = vpop.f32.mrf.mxu0
    %v1006 = vadd.f32 0.0, %v1005
    %v1007 = vpop.f32.mrf.mxu0
    %v1008 = vpop.f32.mrf.mxu0
    %1009 = vdwg.mxu0
    %1010 = vmatprep.subr.bf16.mxu0 %v918
    %1011 = vmatpush1.bf16.msra.mxu0 %v917
    %1012 = vmatprep.subr.bf16.mxu0 %v912
    %1013 = vmatpush1.bf16.msra.mxu0 %v911
    %1014 = vmatprep.subr.bf16.mxu0 %v906
    %1015 = vmatpush1.bf16.msra.mxu0 %v905
    %1016 = vmatprep.subr.bf16.mxu0 %v900
    %1017 = vmatpush1.bf16.msra.mxu0 %v899
    %1018 = vmatprep.subr.bf16.mxu0 %v894
    %1019 = vmatpush1.bf16.msra.mxu0 %v893
    %1020 = vmatprep.subr.bf16.mxu0 %v888
    %1021 = vmatpush1.bf16.msra.mxu0 %v887
    %1022 = vmatprep.subr.bf16.mxu0 %v882
    %1023 = vmatpush1.bf16.msra.mxu0 %v881
    %1024 = vmatprep.subr.bf16.mxu0 %v876
    %1025 = vmatpush1.bf16.msra.mxu0 %v875
    %1026 = vmatprep.subr.bf16.mxu0 0
    %1027 = vmatpush2.bf16.msra.mxu0 0
    %1028 = vmatprep.subr.bf16.mxu0 0
    %1029 = vmatpush2.bf16.msra.mxu0 0
    %1030 = vmatprep.subr.bf16.mxu0 0
    %1031 = vmatpush2.bf16.msra.mxu0 0
    %1032 = vmatprep.subr.bf16.mxu0 0
    %1033 = vmatpush2.bf16.msra.mxu0 0
    %1034 = vmatprep.subr.bf16.mxu0 0
    %1035 = vmatpush2.bf16.msra.mxu0 0
    %1036 = vmatprep.subr.bf16.mxu0 0
    %1037 = vmatpush2.bf16.msra.mxu0 0
    %1038 = vmatprep.subr.bf16.mxu0 0
    %1039 = vmatpush2.bf16.msra.mxu0 0
    %1040 = vmatprep.subr.bf16.mxu0 0
    %1041 = vmatpush2.bf16.msra.mxu0 0
    %1042 = vmatprep.mubr.bf16.mxu0 0
    %1043 = vmatmul.mubr.bf16.gmra.mxu0 %v680
    %v1044 = vpop.f32.mrf.mxu0
    %v1045 = vadd.f32 0.0, %v1044
    %v1046 = vpop.f32.mrf.mxu0
    %v1047 = vadd.f32 0.0, %v1046
    %v1048 = vpop.f32.mrf.mxu0
    %v1049 = vpop.f32.mrf.mxu0
    %1050 = vdwg.mxu0
    %1051 = vmatprep.subr.bf16.mxu0 %v920
    %1052 = vmatpush1.bf16.msra.mxu0 %v919
    %1053 = vmatprep.subr.bf16.mxu0 %v914
    %1054 = vmatpush1.bf16.msra.mxu0 %v913
    %1055 = vmatprep.subr.bf16.mxu0 %v908
    %1056 = vmatpush1.bf16.msra.mxu0 %v907
    %1057 = vmatprep.subr.bf16.mxu0 %v902
    %1058 = vmatpush1.bf16.msra.mxu0 %v901
    %1059 = vmatprep.subr.bf16.mxu0 %v896
    %1060 = vmatpush1.bf16.msra.mxu0 %v895
    %1061 = vmatprep.subr.bf16.mxu0 %v890
    %1062 = vmatpush1.bf16.msra.mxu0 %v889
    %1063 = vmatprep.subr.bf16.mxu0 %v884
    %1064 = vmatpush1.bf16.msra.mxu0 %v883
    %1065 = vmatprep.subr.bf16.mxu0 %v878
    %1066 = vmatpush1.bf16.msra.mxu0 %v877
    %1067 = vmatprep.subr.bf16.mxu0 0
    %1068 = vmatpush2.bf16.msra.mxu0 0
    %1069 = vmatprep.subr.bf16.mxu0 0
    %1070 = vmatpush2.bf16.msra.mxu0 0
    %1071 = vmatprep.subr.bf16.mxu0 0
    %1072 = vmatpush2.bf16.msra.mxu0 0
    %1073 = vmatprep.subr.bf16.mxu0 0
    %1074 = vmatpush2.bf16.msra.mxu0 0
    %1075 = vmatprep.subr.bf16.mxu0 0
    %1076 = vmatpush2.bf16.msra.mxu0 0
    %1077 = vmatprep.subr.bf16.mxu0 0
    %1078 = vmatpush2.bf16.msra.mxu0 0
    %1079 = vmatprep.subr.bf16.mxu0 0
    %1080 = vmatpush2.bf16.msra.mxu0 0
    %1081 = vmatprep.subr.bf16.mxu0 0
    %1082 = vmatpush2.bf16.msra.mxu0 0
    %1083 = vmatprep.mubr.bf16.mxu0 0
    %1084 = vmatmul.mubr.bf16.gmra.mxu0 %v680
    %v1085 = vpop.f32.mrf.mxu0
    %v1086 = vadd.f32 0.0, %v1085
    %v1087 = vpop.f32.mrf.mxu0
    %v1088 = vadd.f32 0.0, %v1087
    %v1089 = vpop.f32.mrf.mxu0
    %v1090 = vpop.f32.mrf.mxu0
    %1091 = vdwg.mxu0
    %v1092 = vpack.c.bf16 %v1004, %v1004
    %v1093 = vpack.c.bf16 %v1006, %v1006
    %v1094 = vpack.c.bf16 %v1045, %v1045
    %v1095 = vpack.c.bf16 %v1047, %v1047
    %v1096 = vpack.c.bf16 %v1086, %v1086
    %v1097 = vpack.c.bf16 %v1088, %v1088
    %v1098 = vld [vmem:[#allocation6] sm:$0xff]
    %v1099 = vld [vmem:[#allocation6 + $0x8] sm:$0xff]
    %v1100 = vld [vmem:[#allocation6 + $0x10] sm:$0xff]
    %v1101 = vld [vmem:[#allocation6 + $0x18] sm:$0xff]
    %v1102 = vld [vmem:[#allocation6 + $0x20] sm:$0xff]
    %v1103 = vld [vmem:[#allocation6 + $0x28] sm:$0xff]
    %v1104 = vld [vmem:[#allocation6 + $0x30] sm:$0xff]
    %v1105 = vld [vmem:[#allocation6 + $0x38] sm:$0xff]
    %v1106 = vld [vmem:[#allocation6 + $0x40] sm:$0xff]
    %v1107 = vld [vmem:[#allocation6 + $0x48] sm:$0xff]
    %v1108 = vld [vmem:[#allocation6 + $0x50] sm:$0xff]
    %v1109 = vld [vmem:[#allocation6 + $0x58] sm:$0xff]
    %v1110 = vld [vmem:[#allocation6 + $0x60] sm:$0xff]
    %v1111 = vld [vmem:[#allocation6 + $0x68] sm:$0xff]
    %v1112 = vld [vmem:[#allocation6 + $0x70] sm:$0xff]
    %v1113 = vld [vmem:[#allocation6 + $0x78] sm:$0xff]
    %v1114 = vld [vmem:[#allocation6 + $0x80] sm:$0xff]
    %v1115 = vld [vmem:[#allocation6 + $0x88] sm:$0xff]
    %v1116 = vld [vmem:[#allocation6 + $0x90] sm:$0xff]
    %v1117 = vld [vmem:[#allocation6 + $0x98] sm:$0xff]
    %v1118 = vld [vmem:[#allocation6 + $0xa0] sm:$0xff]
    %v1119 = vld [vmem:[#allocation6 + $0xa8] sm:$0xff]
    %v1120 = vld [vmem:[#allocation6 + $0xb0] sm:$0xff]
    %v1121 = vld [vmem:[#allocation6 + $0xb8] sm:$0xff]
    %v1122 = vld [vmem:[#allocation6 + $0xc0] sm:$0xff]
    %v1123 = vld [vmem:[#allocation6 + $0xc8] sm:$0xff]
    %v1124 = vld [vmem:[#allocation6 + $0xd0] sm:$0xff]
    %v1125 = vld [vmem:[#allocation6 + $0xd8] sm:$0xff]
    %v1126 = vld [vmem:[#allocation6 + $0xe0] sm:$0xff]
    %v1127 = vld [vmem:[#allocation6 + $0xe8] sm:$0xff]
    %v1128 = vld [vmem:[#allocation6 + $0xf0] sm:$0xff]
    %v1129 = vld [vmem:[#allocation6 + $0xf8] sm:$0xff]
    %v1130 = vld [vmem:[#allocation6 + $0x100] sm:$0xff]
    %v1131 = vld [vmem:[#allocation6 + $0x108] sm:$0xff]
    %v1132 = vld [vmem:[#allocation6 + $0x110] sm:$0xff]
    %v1133 = vld [vmem:[#allocation6 + $0x118] sm:$0xff]
    %v1134 = vld [vmem:[#allocation6 + $0x120] sm:$0xff]
    %v1135 = vld [vmem:[#allocation6 + $0x128] sm:$0xff]
    %v1136 = vld [vmem:[#allocation6 + $0x130] sm:$0xff]
    %v1137 = vld [vmem:[#allocation6 + $0x138] sm:$0xff]
    %v1138 = vld [vmem:[#allocation6 + $0x140] sm:$0xff]
    %v1139 = vld [vmem:[#allocation6 + $0x148] sm:$0xff]
    %v1140 = vld [vmem:[#allocation6 + $0x150] sm:$0xff]
    %v1141 = vld [vmem:[#allocation6 + $0x158] sm:$0xff]
    %v1142 = vld [vmem:[#allocation6 + $0x160] sm:$0xff]
    %v1143 = vld [vmem:[#allocation6 + $0x168] sm:$0xff]
    %v1144 = vld [vmem:[#allocation6 + $0x170] sm:$0xff]
    %v1145 = vld [vmem:[#allocation6 + $0x178] sm:$0xff]
    %v1146 = vld [vmem:[#allocation6 + $0x180] sm:$0xff]
    %v1147 = vld [vmem:[#allocation6 + $0x188] sm:$0xff]
    %v1148 = vld [vmem:[#allocation6 + $0x190] sm:$0xff]
    %v1149 = vld [vmem:[#allocation6 + $0x198] sm:$0xff]
    %v1150 = vld [vmem:[#allocation6 + $0x1a0] sm:$0xff]
    %v1151 = vld [vmem:[#allocation6 + $0x1a8] sm:$0xff]
    %v1152 = vld [vmem:[#allocation6 + $0x1b0] sm:$0xff]
    %v1153 = vld [vmem:[#allocation6 + $0x1b8] sm:$0xff]
    %v1154 = vld [vmem:[#allocation6 + $0x1c0] sm:$0xff]
    %v1155 = vld [vmem:[#allocation6 + $0x1c8] sm:$0xff]
    %v1156 = vld [vmem:[#allocation6 + $0x1d0] sm:$0xff]
    %v1157 = vld [vmem:[#allocation6 + $0x1d8] sm:$0xff]
    %v1158 = vld [vmem:[#allocation6 + $0x1e0] sm:$0xff]
    %v1159 = vld [vmem:[#allocation6 + $0x1e8] sm:$0xff]
    %v1160 = vld [vmem:[#allocation6 + $0x1f0] sm:$0xff]
    %v1161 = vld [vmem:[#allocation6 + $0x1f8] sm:$0xff]
    %v1162 = vld [vmem:[#allocation6 + $0x200] sm:$0xff]
    %v1163 = vld [vmem:[#allocation6 + $0x208] sm:$0xff]
    %v1164 = vld [vmem:[#allocation6 + $0x210] sm:$0xff]
    %v1165 = vld [vmem:[#allocation6 + $0x218] sm:$0xff]
    %v1166 = vld [vmem:[#allocation6 + $0x220] sm:$0xff]
    %v1167 = vld [vmem:[#allocation6 + $0x228] sm:$0xff]
    %v1168 = vld [vmem:[#allocation6 + $0x230] sm:$0xff]
    %v1169 = vld [vmem:[#allocation6 + $0x238] sm:$0xff]
    %v1170 = vld [vmem:[#allocation6 + $0x240] sm:$0xff]
    %v1171 = vld [vmem:[#allocation6 + $0x248] sm:$0xff]
    %v1172 = vld [vmem:[#allocation6 + $0x250] sm:$0xff]
    %v1173 = vld [vmem:[#allocation6 + $0x258] sm:$0xff]
    %v1174 = vld [vmem:[#allocation6 + $0x260] sm:$0xff]
    %v1175 = vld [vmem:[#allocation6 + $0x268] sm:$0xff]
    %v1176 = vld [vmem:[#allocation6 + $0x270] sm:$0xff]
    %v1177 = vld [vmem:[#allocation6 + $0x278] sm:$0xff]
    %v1178 = vld [vmem:[#allocation6 + $0x280] sm:$0xff]
    %v1179 = vld [vmem:[#allocation6 + $0x288] sm:$0xff]
    %v1180 = vld [vmem:[#allocation6 + $0x290] sm:$0xff]
    %v1181 = vld [vmem:[#allocation6 + $0x298] sm:$0xff]
    %v1182 = vld [vmem:[#allocation6 + $0x2a0] sm:$0xff]
    %v1183 = vld [vmem:[#allocation6 + $0x2a8] sm:$0xff]
    %v1184 = vld [vmem:[#allocation6 + $0x2b0] sm:$0xff]
    %v1185 = vld [vmem:[#allocation6 + $0x2b8] sm:$0xff]
    %v1186 = vld [vmem:[#allocation6 + $0x2c0] sm:$0xff]
    %v1187 = vld [vmem:[#allocation6 + $0x2c8] sm:$0xff]
    %v1188 = vld [vmem:[#allocation6 + $0x2d0] sm:$0xff]
    %v1189 = vld [vmem:[#allocation6 + $0x2d8] sm:$0xff]
    %v1190 = vld [vmem:[#allocation6 + $0x2e0] sm:$0xff]
    %v1191 = vld [vmem:[#allocation6 + $0x2e8] sm:$0xff]
    %v1192 = vld [vmem:[#allocation6 + $0x2f0] sm:$0xff]
    %v1193 = vld [vmem:[#allocation6 + $0x2f8] sm:$0xff]
    %v1194 = vld [vmem:[#allocation6 + $0x300] sm:$0xff]
    %v1195 = vld [vmem:[#allocation6 + $0x308] sm:$0xff]
    %v1196 = vld [vmem:[#allocation6 + $0x310] sm:$0xff]
    %v1197 = vld [vmem:[#allocation6 + $0x318] sm:$0xff]
    %v1198 = vld [vmem:[#allocation6 + $0x320] sm:$0xff]
    %v1199 = vld [vmem:[#allocation6 + $0x328] sm:$0xff]
    %v1200 = vld [vmem:[#allocation6 + $0x330] sm:$0xff]
    %v1201 = vld [vmem:[#allocation6 + $0x338] sm:$0xff]
    %v1202 = vld [vmem:[#allocation6 + $0x340] sm:$0xff]
    %v1203 = vld [vmem:[#allocation6 + $0x348] sm:$0xff]
    %v1204 = vld [vmem:[#allocation6 + $0x350] sm:$0xff]
    %v1205 = vld [vmem:[#allocation6 + $0x358] sm:$0xff]
    %v1206 = vld [vmem:[#allocation6 + $0x360] sm:$0xff]
    %v1207 = vld [vmem:[#allocation6 + $0x368] sm:$0xff]
    %v1208 = vld [vmem:[#allocation6 + $0x370] sm:$0xff]
    %v1209 = vld [vmem:[#allocation6 + $0x378] sm:$0xff]
    %v1210 = vld [vmem:[#allocation6 + $0x380] sm:$0xff]
    %v1211 = vld [vmem:[#allocation6 + $0x388] sm:$0xff]
    %v1212 = vld [vmem:[#allocation6 + $0x390] sm:$0xff]
    %v1213 = vld [vmem:[#allocation6 + $0x398] sm:$0xff]
    %v1214 = vld [vmem:[#allocation6 + $0x3a0] sm:$0xff]
    %v1215 = vld [vmem:[#allocation6 + $0x3a8] sm:$0xff]
    %v1216 = vld [vmem:[#allocation6 + $0x3b0] sm:$0xff]
    %v1217 = vld [vmem:[#allocation6 + $0x3b8] sm:$0xff]
    %v1218 = vld [vmem:[#allocation6 + $0x3c0] sm:$0xff]
    %v1219 = vld [vmem:[#allocation6 + $0x3c8] sm:$0xff]
    %v1220 = vld [vmem:[#allocation6 + $0x3d0] sm:$0xff]
    %v1221 = vld [vmem:[#allocation6 + $0x3d8] sm:$0xff]
    %v1222 = vld [vmem:[#allocation6 + $0x3e0] sm:$0xff]
    %v1223 = vld [vmem:[#allocation6 + $0x3e8] sm:$0xff]
    %v1224 = vld [vmem:[#allocation6 + $0x3f0] sm:$0xff]
    %v1225 = vld [vmem:[#allocation6 + $0x3f8] sm:$0xff]
    %v1226 = vld [vmem:[#allocation6 + $0x400] sm:$0xff]
    %v1227 = vld [vmem:[#allocation6 + $0x408] sm:$0xff]
    %v1228 = vld [vmem:[#allocation6 + $0x410] sm:$0xff]
    %v1229 = vld [vmem:[#allocation6 + $0x418] sm:$0xff]
    %v1230 = vld [vmem:[#allocation6 + $0x420] sm:$0xff]
    %v1231 = vld [vmem:[#allocation6 + $0x428] sm:$0xff]
    %v1232 = vld [vmem:[#allocation6 + $0x430] sm:$0xff]
    %v1233 = vld [vmem:[#allocation6 + $0x438] sm:$0xff]
    %v1234 = vld [vmem:[#allocation6 + $0x440] sm:$0xff]
    %v1235 = vld [vmem:[#allocation6 + $0x448] sm:$0xff]
    %v1236 = vld [vmem:[#allocation6 + $0x450] sm:$0xff]
    %v1237 = vld [vmem:[#allocation6 + $0x458] sm:$0xff]
    %v1238 = vld [vmem:[#allocation6 + $0x460] sm:$0xff]
    %v1239 = vld [vmem:[#allocation6 + $0x468] sm:$0xff]
    %v1240 = vld [vmem:[#allocation6 + $0x470] sm:$0xff]
    %v1241 = vld [vmem:[#allocation6 + $0x478] sm:$0xff]
    %v1242 = vld [vmem:[#allocation6 + $0x480] sm:$0xff]
    %v1243 = vld [vmem:[#allocation6 + $0x488] sm:$0xff]
    %v1244 = vld [vmem:[#allocation6 + $0x490] sm:$0xff]
    %v1245 = vld [vmem:[#allocation6 + $0x498] sm:$0xff]
    %v1246 = vld [vmem:[#allocation6 + $0x4a0] sm:$0xff]
    %v1247 = vld [vmem:[#allocation6 + $0x4a8] sm:$0xff]
    %v1248 = vld [vmem:[#allocation6 + $0x4b0] sm:$0xff]
    %v1249 = vld [vmem:[#allocation6 + $0x4b8] sm:$0xff]
    %v1250 = vld [vmem:[#allocation6 + $0x4c0] sm:$0xff]
    %v1251 = vld [vmem:[#allocation6 + $0x4c8] sm:$0xff]
    %v1252 = vld [vmem:[#allocation6 + $0x4d0] sm:$0xff]
    %v1253 = vld [vmem:[#allocation6 + $0x4d8] sm:$0xff]
    %v1254 = vld [vmem:[#allocation6 + $0x4e0] sm:$0xff]
    %v1255 = vld [vmem:[#allocation6 + $0x4e8] sm:$0xff]
    %v1256 = vld [vmem:[#allocation6 + $0x4f0] sm:$0xff]
    %v1257 = vld [vmem:[#allocation6 + $0x4f8] sm:$0xff]
    %v1258 = vld [vmem:[#allocation6 + $0x500] sm:$0xff]
    %v1259 = vld [vmem:[#allocation6 + $0x508] sm:$0xff]
    %v1260 = vld [vmem:[#allocation6 + $0x510] sm:$0xff]
    %v1261 = vld [vmem:[#allocation6 + $0x518] sm:$0xff]
    %v1262 = vld [vmem:[#allocation6 + $0x520] sm:$0xff]
    %v1263 = vld [vmem:[#allocation6 + $0x528] sm:$0xff]
    %v1264 = vld [vmem:[#allocation6 + $0x530] sm:$0xff]
    %v1265 = vld [vmem:[#allocation6 + $0x538] sm:$0xff]
    %v1266 = vld [vmem:[#allocation6 + $0x540] sm:$0xff]
    %v1267 = vld [vmem:[#allocation6 + $0x548] sm:$0xff]
    %v1268 = vld [vmem:[#allocation6 + $0x550] sm:$0xff]
    %v1269 = vld [vmem:[#allocation6 + $0x558] sm:$0xff]
    %v1270 = vld [vmem:[#allocation6 + $0x560] sm:$0xff]
    %v1271 = vld [vmem:[#allocation6 + $0x568] sm:$0xff]
    %v1272 = vld [vmem:[#allocation6 + $0x570] sm:$0xff]
    %v1273 = vld [vmem:[#allocation6 + $0x578] sm:$0xff]
    %v1274 = vld [vmem:[#allocation6 + $0x580] sm:$0xff]
    %v1275 = vld [vmem:[#allocation6 + $0x588] sm:$0xff]
    %v1276 = vld [vmem:[#allocation6 + $0x590] sm:$0xff]
    %v1277 = vld [vmem:[#allocation6 + $0x598] sm:$0xff]
    %v1278 = vld [vmem:[#allocation6 + $0x5a0] sm:$0xff]
    %v1279 = vld [vmem:[#allocation6 + $0x5a8] sm:$0xff]
    %v1280 = vld [vmem:[#allocation6 + $0x5b0] sm:$0xff]
    %v1281 = vld [vmem:[#allocation6 + $0x5b8] sm:$0xff]
    %v1282 = vld [vmem:[#allocation6 + $0x5c0] sm:$0xff]
    %v1283 = vld [vmem:[#allocation6 + $0x5c8] sm:$0xff]
    %v1284 = vld [vmem:[#allocation6 + $0x5d0] sm:$0xff]
    %v1285 = vld [vmem:[#allocation6 + $0x5d8] sm:$0xff]
    %v1286 = vld [vmem:[#allocation6 + $0x5e0] sm:$0xff]
    %v1287 = vld [vmem:[#allocation6 + $0x5e8] sm:$0xff]
    %v1288 = vld [vmem:[#allocation6 + $0x5f0] sm:$0xff]
    %v1289 = vld [vmem:[#allocation6 + $0x5f8] sm:$0xff]
    %v1290 = vld [vmem:[#allocation6 + $0x600] sm:$0xff]
    %v1291 = vld [vmem:[#allocation6 + $0x608] sm:$0xff]
    %v1292 = vld [vmem:[#allocation6 + $0x610] sm:$0xff]
    %v1293 = vld [vmem:[#allocation6 + $0x618] sm:$0xff]
    %v1294 = vld [vmem:[#allocation6 + $0x620] sm:$0xff]
    %v1295 = vld [vmem:[#allocation6 + $0x628] sm:$0xff]
    %v1296 = vld [vmem:[#allocation6 + $0x630] sm:$0xff]
    %v1297 = vld [vmem:[#allocation6 + $0x638] sm:$0xff]
    %v1298 = vld [vmem:[#allocation6 + $0x640] sm:$0xff]
    %v1299 = vld [vmem:[#allocation6 + $0x648] sm:$0xff]
    %v1300 = vld [vmem:[#allocation6 + $0x650] sm:$0xff]
    %v1301 = vld [vmem:[#allocation6 + $0x658] sm:$0xff]
    %v1302 = vld [vmem:[#allocation6 + $0x660] sm:$0xff]
    %v1303 = vld [vmem:[#allocation6 + $0x668] sm:$0xff]
    %v1304 = vld [vmem:[#allocation6 + $0x670] sm:$0xff]
    %v1305 = vld [vmem:[#allocation6 + $0x678] sm:$0xff]
    %v1306 = vld [vmem:[#allocation6 + $0x680] sm:$0xff]
    %v1307 = vld [vmem:[#allocation6 + $0x688] sm:$0xff]
    %v1308 = vld [vmem:[#allocation6 + $0x690] sm:$0xff]
    %v1309 = vld [vmem:[#allocation6 + $0x698] sm:$0xff]
    %v1310 = vld [vmem:[#allocation6 + $0x6a0] sm:$0xff]
    %v1311 = vld [vmem:[#allocation6 + $0x6a8] sm:$0xff]
    %v1312 = vld [vmem:[#allocation6 + $0x6b0] sm:$0xff]
    %v1313 = vld [vmem:[#allocation6 + $0x6b8] sm:$0xff]
    %v1314 = vld [vmem:[#allocation6 + $0x6c0] sm:$0xff]
    %v1315 = vld [vmem:[#allocation6 + $0x6c8] sm:$0xff]
    %v1316 = vld [vmem:[#allocation6 + $0x6d0] sm:$0xff]
    %v1317 = vld [vmem:[#allocation6 + $0x6d8] sm:$0xff]
    %v1318 = vld [vmem:[#allocation6 + $0x6e0] sm:$0xff]
    %v1319 = vld [vmem:[#allocation6 + $0x6e8] sm:$0xff]
    %v1320 = vld [vmem:[#allocation6 + $0x6f0] sm:$0xff]
    %v1321 = vld [vmem:[#allocation6 + $0x6f8] sm:$0xff]
    %v1322 = vld [vmem:[#allocation6 + $0x700] sm:$0xff]
    %v1323 = vld [vmem:[#allocation6 + $0x708] sm:$0xff]
    %v1324 = vld [vmem:[#allocation6 + $0x710] sm:$0xff]
    %v1325 = vld [vmem:[#allocation6 + $0x718] sm:$0xff]
    %v1326 = vld [vmem:[#allocation6 + $0x720] sm:$0xff]
    %v1327 = vld [vmem:[#allocation6 + $0x728] sm:$0xff]
    %v1328 = vld [vmem:[#allocation6 + $0x730] sm:$0xff]
    %v1329 = vld [vmem:[#allocation6 + $0x738] sm:$0xff]
    %v1330 = vld [vmem:[#allocation6 + $0x740] sm:$0xff]
    %v1331 = vld [vmem:[#allocation6 + $0x748] sm:$0xff]
    %v1332 = vld [vmem:[#allocation6 + $0x750] sm:$0xff]
    %v1333 = vld [vmem:[#allocation6 + $0x758] sm:$0xff]
    %v1334 = vld [vmem:[#allocation6 + $0x760] sm:$0xff]
    %v1335 = vld [vmem:[#allocation6 + $0x768] sm:$0xff]
    %v1336 = vld [vmem:[#allocation6 + $0x770] sm:$0xff]
    %v1337 = vld [vmem:[#allocation6 + $0x778] sm:$0xff]
    %v1338 = vld [vmem:[#allocation6 + $0x780] sm:$0xff]
    %v1339 = vld [vmem:[#allocation6 + $0x788] sm:$0xff]
    %v1340 = vld [vmem:[#allocation6 + $0x790] sm:$0xff]
    %v1341 = vld [vmem:[#allocation6 + $0x798] sm:$0xff]
    %v1342 = vld [vmem:[#allocation6 + $0x7a0] sm:$0xff]
    %v1343 = vld [vmem:[#allocation6 + $0x7a8] sm:$0xff]
    %v1344 = vld [vmem:[#allocation6 + $0x7b0] sm:$0xff]
    %v1345 = vld [vmem:[#allocation6 + $0x7b8] sm:$0xff]
    %v1346 = vld [vmem:[#allocation6 + $0x7c0] sm:$0xff]
    %v1347 = vld [vmem:[#allocation6 + $0x7c8] sm:$0xff]
    %v1348 = vld [vmem:[#allocation6 + $0x7d0] sm:$0xff]
    %v1349 = vld [vmem:[#allocation6 + $0x7d8] sm:$0xff]
    %v1350 = vld [vmem:[#allocation6 + $0x7e0] sm:$0xff]
    %v1351 = vld [vmem:[#allocation6 + $0x7e8] sm:$0xff]
    %v1352 = vld [vmem:[#allocation6 + $0x7f0] sm:$0xff]
    %v1353 = vld [vmem:[#allocation6 + $0x7f8] sm:$0xff]
    %v1354 = vld [vmem:[#allocation6 + $0x800] sm:$0xff]
    %v1355 = vld [vmem:[#allocation6 + $0x808] sm:$0xff]
    %v1356 = vld [vmem:[#allocation6 + $0x810] sm:$0xff]
    %v1357 = vld [vmem:[#allocation6 + $0x818] sm:$0xff]
    %v1358 = vld [vmem:[#allocation6 + $0x820] sm:$0xff]
    %v1359 = vld [vmem:[#allocation6 + $0x828] sm:$0xff]
    %v1360 = vld [vmem:[#allocation6 + $0x830] sm:$0xff]
    %v1361 = vld [vmem:[#allocation6 + $0x838] sm:$0xff]
    %v1362 = vld [vmem:[#allocation6 + $0x840] sm:$0xff]
    %v1363 = vld [vmem:[#allocation6 + $0x848] sm:$0xff]
    %v1364 = vld [vmem:[#allocation6 + $0x850] sm:$0xff]
    %v1365 = vld [vmem:[#allocation6 + $0x858] sm:$0xff]
    %v1366 = vld [vmem:[#allocation6 + $0x860] sm:$0xff]
    %v1367 = vld [vmem:[#allocation6 + $0x868] sm:$0xff]
    %v1368 = vld [vmem:[#allocation6 + $0x870] sm:$0xff]
    %v1369 = vld [vmem:[#allocation6 + $0x878] sm:$0xff]
    %v1370 = vld [vmem:[#allocation6 + $0x880] sm:$0xff]
    %v1371 = vld [vmem:[#allocation6 + $0x888] sm:$0xff]
    %v1372 = vld [vmem:[#allocation6 + $0x890] sm:$0xff]
    %v1373 = vld [vmem:[#allocation6 + $0x898] sm:$0xff]
    %v1374 = vld [vmem:[#allocation6 + $0x8a0] sm:$0xff]
    %v1375 = vld [vmem:[#allocation6 + $0x8a8] sm:$0xff]
    %v1376 = vld [vmem:[#allocation6 + $0x8b0] sm:$0xff]
    %v1377 = vld [vmem:[#allocation6 + $0x8b8] sm:$0xff]
    %v1378 = vld [vmem:[#allocation6 + $0x8c0] sm:$0xff]
    %v1379 = vld [vmem:[#allocation6 + $0x8c8] sm:$0xff]
    %v1380 = vld [vmem:[#allocation6 + $0x8d0] sm:$0xff]
    %v1381 = vld [vmem:[#allocation6 + $0x8d8] sm:$0xff]
    %v1382 = vld [vmem:[#allocation6 + $0x8e0] sm:$0xff]
    %v1383 = vld [vmem:[#allocation6 + $0x8e8] sm:$0xff]
    %v1384 = vld [vmem:[#allocation6 + $0x8f0] sm:$0xff]
    %v1385 = vld [vmem:[#allocation6 + $0x8f8] sm:$0xff]
    %v1386 = vld [vmem:[#allocation7] sm:$0x3f]
    %v1388 = vlaneseq
    %v1389 = vshrl.u32 %v1388, 7
    %v1390 = vsub.s32 0, %v1389
    %v1391 = vrot.slane %v1386, %v1390
    %v1392 = vlaneseq
    %v1393 = vshrl.u32 %v1392, 7
    %v1394 = vsub.s32 1, %v1393
    %v1395 = vrot.slane %v1386, %v1394
    %v1396 = vlaneseq
    %v1397 = vshrl.u32 %v1396, 7
    %v1398 = vsub.s32 2, %v1397
    %v1399 = vrot.slane %v1386, %v1398
    %v1400 = vlaneseq
    %v1401 = vshrl.u32 %v1400, 7
    %v1402 = vsub.s32 3, %v1401
    %v1403 = vrot.slane %v1386, %v1402
    %v1404 = vlaneseq
    %v1405 = vshrl.u32 %v1404, 7
    %v1406 = vsub.s32 4, %v1405
    %v1407 = vrot.slane %v1386, %v1406
    %v1408 = vlaneseq
    %v1409 = vshrl.u32 %v1408, 7
    %v1410 = vsub.s32 5, %v1409
    %v1411 = vrot.slane %v1386, %v1410
    %v1706 = vunpack.c.l.b16 %v1098
    %v1707 = vunpack.c.h.b16 %v1098
    %v1708 = vunpack.c.l.b16 %v1099
    %v1709 = vunpack.c.h.b16 %v1099
    %v1710 = vunpack.c.l.b16 %v1100
    %v1711 = vunpack.c.h.b16 %v1100
    %v1712 = vunpack.c.l.b16 %v1101
    %v1713 = vunpack.c.h.b16 %v1101
    %v1714 = vunpack.c.l.b16 %v1102
    %v1715 = vunpack.c.h.b16 %v1102
    %v1716 = vunpack.c.l.b16 %v1103
    %v1717 = vunpack.c.h.b16 %v1103
    %v1718 = vunpack.c.l.b16 %v1104
    %v1719 = vunpack.c.h.b16 %v1104
    %v1720 = vunpack.c.l.b16 %v1105
    %v1721 = vunpack.c.h.b16 %v1105
    %v1722 = vunpack.c.l.b16 %v1106
    %v1723 = vunpack.c.h.b16 %v1106
    %v1724 = vunpack.c.l.b16 %v1107
    %v1725 = vunpack.c.h.b16 %v1107
    %v1726 = vunpack.c.l.b16 %v1108
    %v1727 = vunpack.c.h.b16 %v1108
    %v1728 = vunpack.c.l.b16 %v1109
    %v1729 = vunpack.c.h.b16 %v1109
    %v1730 = vunpack.c.l.b16 %v1110
    %v1731 = vunpack.c.h.b16 %v1110
    %v1732 = vunpack.c.l.b16 %v1111
    %v1733 = vunpack.c.h.b16 %v1111
    %v1734 = vunpack.c.l.b16 %v1112
    %v1735 = vunpack.c.h.b16 %v1112
    %v1736 = vunpack.c.l.b16 %v1113
    %v1737 = vunpack.c.h.b16 %v1113
    %v1738 = vunpack.c.l.b16 %v1114
    %v1739 = vunpack.c.h.b16 %v1114
    %v1740 = vunpack.c.l.b16 %v1115
    %v1741 = vunpack.c.h.b16 %v1115
    %v1742 = vunpack.c.l.b16 %v1116
    %v1743 = vunpack.c.h.b16 %v1116
    %v1744 = vunpack.c.l.b16 %v1117
    %v1745 = vunpack.c.h.b16 %v1117
    %v1746 = vunpack.c.l.b16 %v1118
    %v1747 = vunpack.c.h.b16 %v1118
    %v1748 = vunpack.c.l.b16 %v1119
    %v1749 = vunpack.c.h.b16 %v1119
    %v1750 = vunpack.c.l.b16 %v1120
    %v1751 = vunpack.c.h.b16 %v1120
    %v1752 = vunpack.c.l.b16 %v1121
    %v1753 = vunpack.c.h.b16 %v1121
    %v1754 = vunpack.c.l.b16 %v1122
    %v1755 = vunpack.c.h.b16 %v1122
    %v1756 = vunpack.c.l.b16 %v1123
    %v1757 = vunpack.c.h.b16 %v1123
    %v1758 = vunpack.c.l.b16 %v1124
    %v1759 = vunpack.c.h.b16 %v1124
    %v1760 = vunpack.c.l.b16 %v1125
    %v1761 = vunpack.c.h.b16 %v1125
    %v1762 = vunpack.c.l.b16 %v1126
    %v1763 = vunpack.c.h.b16 %v1126
    %v1764 = vunpack.c.l.b16 %v1127
    %v1765 = vunpack.c.h.b16 %v1127
    %v1766 = vunpack.c.l.b16 %v1128
    %v1767 = vunpack.c.h.b16 %v1128
    %v1768 = vunpack.c.l.b16 %v1129
    %v1769 = vunpack.c.h.b16 %v1129
    %v1770 = vunpack.c.l.b16 %v1130
    %v1771 = vunpack.c.h.b16 %v1130
    %v1772 = vunpack.c.l.b16 %v1131
    %v1773 = vunpack.c.h.b16 %v1131
    %v1774 = vunpack.c.l.b16 %v1132
    %v1775 = vunpack.c.h.b16 %v1132
    %v1776 = vunpack.c.l.b16 %v1133
    %v1777 = vunpack.c.h.b16 %v1133
    %v1778 = vunpack.c.l.b16 %v1134
    %v1779 = vunpack.c.h.b16 %v1134
    %v1780 = vunpack.c.l.b16 %v1135
    %v1781 = vunpack.c.h.b16 %v1135
    %v1782 = vunpack.c.l.b16 %v1136
    %v1783 = vunpack.c.h.b16 %v1136
    %v1784 = vunpack.c.l.b16 %v1137
    %v1785 = vunpack.c.h.b16 %v1137
    %v1786 = vunpack.c.l.b16 %v1138
    %v1787 = vunpack.c.h.b16 %v1138
    %v1788 = vunpack.c.l.b16 %v1139
    %v1789 = vunpack.c.h.b16 %v1139
    %v1790 = vunpack.c.l.b16 %v1140
    %v1791 = vunpack.c.h.b16 %v1140
    %v1792 = vunpack.c.l.b16 %v1141
    %v1793 = vunpack.c.h.b16 %v1141
    %v1794 = vunpack.c.l.b16 %v1142
    %v1795 = vunpack.c.h.b16 %v1142
    %v1796 = vunpack.c.l.b16 %v1143
    %v1797 = vunpack.c.h.b16 %v1143
    %v1798 = vunpack.c.l.b16 %v1144
    %v1799 = vunpack.c.h.b16 %v1144
    %v1800 = vunpack.c.l.b16 %v1145
    %v1801 = vunpack.c.h.b16 %v1145
    %v1802 = vunpack.c.l.b16 %v1146
    %v1803 = vunpack.c.h.b16 %v1146
    %v1804 = vunpack.c.l.b16 %v1147
    %v1805 = vunpack.c.h.b16 %v1147
    %v1806 = vunpack.c.l.b16 %v1148
    %v1807 = vunpack.c.h.b16 %v1148
    %v1808 = vunpack.c.l.b16 %v1149
    %v1809 = vunpack.c.h.b16 %v1149
    %v1810 = vunpack.c.l.b16 %v1150
    %v1811 = vunpack.c.h.b16 %v1150
    %v1812 = vunpack.c.l.b16 %v1151
    %v1813 = vunpack.c.h.b16 %v1151
    %v1814 = vunpack.c.l.b16 %v1152
    %v1815 = vunpack.c.h.b16 %v1152
    %v1816 = vunpack.c.l.b16 %v1153
    %v1817 = vunpack.c.h.b16 %v1153
    %v1818 = vunpack.c.l.b16 %v1154
    %v1819 = vunpack.c.h.b16 %v1154
    %v1820 = vunpack.c.l.b16 %v1155
    %v1821 = vunpack.c.h.b16 %v1155
    %v1822 = vunpack.c.l.b16 %v1156
    %v1823 = vunpack.c.h.b16 %v1156
    %v1824 = vunpack.c.l.b16 %v1157
    %v1825 = vunpack.c.h.b16 %v1157
    %v1826 = vunpack.c.l.b16 %v1158
    %v1827 = vunpack.c.h.b16 %v1158
    %v1828 = vunpack.c.l.b16 %v1159
    %v1829 = vunpack.c.h.b16 %v1159
    %v1830 = vunpack.c.l.b16 %v1160
    %v1831 = vunpack.c.h.b16 %v1160
    %v1832 = vunpack.c.l.b16 %v1161
    %v1833 = vunpack.c.h.b16 %v1161
    %v1834 = vunpack.c.l.b16 %v1162
    %v1835 = vunpack.c.h.b16 %v1162
    %v1836 = vunpack.c.l.b16 %v1163
    %v1837 = vunpack.c.h.b16 %v1163
    %v1838 = vunpack.c.l.b16 %v1164
    %v1839 = vunpack.c.h.b16 %v1164
    %v1840 = vunpack.c.l.b16 %v1165
    %v1841 = vunpack.c.h.b16 %v1165
    %v1842 = vunpack.c.l.b16 %v1166
    %v1843 = vunpack.c.h.b16 %v1166
    %v1844 = vunpack.c.l.b16 %v1167
    %v1845 = vunpack.c.h.b16 %v1167
    %v1846 = vunpack.c.l.b16 %v1168
    %v1847 = vunpack.c.h.b16 %v1168
    %v1848 = vunpack.c.l.b16 %v1169
    %v1849 = vunpack.c.h.b16 %v1169
    %v1850 = vunpack.c.l.b16 %v1170
    %v1851 = vunpack.c.h.b16 %v1170
    %v1852 = vunpack.c.l.b16 %v1171
    %v1853 = vunpack.c.h.b16 %v1171
    %v1854 = vunpack.c.l.b16 %v1172
    %v1855 = vunpack.c.h.b16 %v1172
    %v1856 = vunpack.c.l.b16 %v1173
    %v1857 = vunpack.c.h.b16 %v1173
    %v1858 = vunpack.c.l.b16 %v1174
    %v1859 = vunpack.c.h.b16 %v1174
    %v1860 = vunpack.c.l.b16 %v1175
    %v1861 = vunpack.c.h.b16 %v1175
    %v1862 = vunpack.c.l.b16 %v1176
    %v1863 = vunpack.c.h.b16 %v1176
    %v1864 = vunpack.c.l.b16 %v1177
    %v1865 = vunpack.c.h.b16 %v1177
    %v1866 = vunpack.c.l.b16 %v1178
    %v1867 = vunpack.c.h.b16 %v1178
    %v1868 = vunpack.c.l.b16 %v1179
    %v1869 = vunpack.c.h.b16 %v1179
    %v1870 = vunpack.c.l.b16 %v1180
    %v1871 = vunpack.c.h.b16 %v1180
    %v1872 = vunpack.c.l.b16 %v1181
    %v1873 = vunpack.c.h.b16 %v1181
    %v1874 = vunpack.c.l.b16 %v1182
    %v1875 = vunpack.c.h.b16 %v1182
    %v1876 = vunpack.c.l.b16 %v1183
    %v1877 = vunpack.c.h.b16 %v1183
    %v1878 = vunpack.c.l.b16 %v1184
    %v1879 = vunpack.c.h.b16 %v1184
    %v1880 = vunpack.c.l.b16 %v1185
    %v1881 = vunpack.c.h.b16 %v1185
    %v1882 = vunpack.c.l.b16 %v1186
    %v1883 = vunpack.c.h.b16 %v1186
    %v1884 = vunpack.c.l.b16 %v1187
    %v1885 = vunpack.c.h.b16 %v1187
    %v1886 = vunpack.c.l.b16 %v1188
    %v1887 = vunpack.c.h.b16 %v1188
    %v1888 = vunpack.c.l.b16 %v1189
    %v1889 = vunpack.c.h.b16 %v1189
    %v1890 = vunpack.c.l.b16 %v1190
    %v1891 = vunpack.c.h.b16 %v1190
    %v1892 = vunpack.c.l.b16 %v1191
    %v1893 = vunpack.c.h.b16 %v1191
    %v1894 = vunpack.c.l.b16 %v1192
    %v1895 = vunpack.c.h.b16 %v1192
    %v1896 = vunpack.c.l.b16 %v1193
    %v1897 = vunpack.c.h.b16 %v1193
    %v1898 = vunpack.c.l.b16 %v1194
    %v1899 = vunpack.c.h.b16 %v1194
    %v1900 = vunpack.c.l.b16 %v1195
    %v1901 = vunpack.c.h.b16 %v1195
    %v1902 = vunpack.c.l.b16 %v1196
    %v1903 = vunpack.c.h.b16 %v1196
    %v1904 = vunpack.c.l.b16 %v1197
    %v1905 = vunpack.c.h.b16 %v1197
    %v1906 = vunpack.c.l.b16 %v1198
    %v1907 = vunpack.c.h.b16 %v1198
    %v1908 = vunpack.c.l.b16 %v1199
    %v1909 = vunpack.c.h.b16 %v1199
    %v1910 = vunpack.c.l.b16 %v1200
    %v1911 = vunpack.c.h.b16 %v1200
    %v1912 = vunpack.c.l.b16 %v1201
    %v1913 = vunpack.c.h.b16 %v1201
    %v1914 = vunpack.c.l.b16 %v1202
    %v1915 = vunpack.c.h.b16 %v1202
    %v1916 = vunpack.c.l.b16 %v1203
    %v1917 = vunpack.c.h.b16 %v1203
    %v1918 = vunpack.c.l.b16 %v1204
    %v1919 = vunpack.c.h.b16 %v1204
    %v1920 = vunpack.c.l.b16 %v1205
    %v1921 = vunpack.c.h.b16 %v1205
    %v1922 = vunpack.c.l.b16 %v1206
    %v1923 = vunpack.c.h.b16 %v1206
    %v1924 = vunpack.c.l.b16 %v1207
    %v1925 = vunpack.c.h.b16 %v1207
    %v1926 = vunpack.c.l.b16 %v1208
    %v1927 = vunpack.c.h.b16 %v1208
    %v1928 = vunpack.c.l.b16 %v1209
    %v1929 = vunpack.c.h.b16 %v1209
    %v1930 = vunpack.c.l.b16 %v1210
    %v1931 = vunpack.c.h.b16 %v1210
    %v1932 = vunpack.c.l.b16 %v1211
    %v1933 = vunpack.c.h.b16 %v1211
    %v1934 = vunpack.c.l.b16 %v1212
    %v1935 = vunpack.c.h.b16 %v1212
    %v1936 = vunpack.c.l.b16 %v1213
    %v1937 = vunpack.c.h.b16 %v1213
    %v1938 = vunpack.c.l.b16 %v1214
    %v1939 = vunpack.c.h.b16 %v1214
    %v1940 = vunpack.c.l.b16 %v1215
    %v1941 = vunpack.c.h.b16 %v1215
    %v1942 = vunpack.c.l.b16 %v1216
    %v1943 = vunpack.c.h.b16 %v1216
    %v1944 = vunpack.c.l.b16 %v1217
    %v1945 = vunpack.c.h.b16 %v1217
    %v1946 = vunpack.c.l.b16 %v1218
    %v1947 = vunpack.c.h.b16 %v1218
    %v1948 = vunpack.c.l.b16 %v1219
    %v1949 = vunpack.c.h.b16 %v1219
    %v1950 = vunpack.c.l.b16 %v1220
    %v1951 = vunpack.c.h.b16 %v1220
    %v1952 = vunpack.c.l.b16 %v1221
    %v1953 = vunpack.c.h.b16 %v1221
    %v1954 = vunpack.c.l.b16 %v1222
    %v1955 = vunpack.c.h.b16 %v1222
    %v1956 = vunpack.c.l.b16 %v1223
    %v1957 = vunpack.c.h.b16 %v1223
    %v1958 = vunpack.c.l.b16 %v1224
    %v1959 = vunpack.c.h.b16 %v1224
    %v1960 = vunpack.c.l.b16 %v1225
    %v1961 = vunpack.c.h.b16 %v1225
    %v1962 = vunpack.c.l.b16 %v1226
    %v1963 = vunpack.c.h.b16 %v1226
    %v1964 = vunpack.c.l.b16 %v1227
    %v1965 = vunpack.c.h.b16 %v1227
    %v1966 = vunpack.c.l.b16 %v1228
    %v1967 = vunpack.c.h.b16 %v1228
    %v1968 = vunpack.c.l.b16 %v1229
    %v1969 = vunpack.c.h.b16 %v1229
    %v1970 = vunpack.c.l.b16 %v1230
    %v1971 = vunpack.c.h.b16 %v1230
    %v1972 = vunpack.c.l.b16 %v1231
    %v1973 = vunpack.c.h.b16 %v1231
    %v1974 = vunpack.c.l.b16 %v1232
    %v1975 = vunpack.c.h.b16 %v1232
    %v1976 = vunpack.c.l.b16 %v1233
    %v1977 = vunpack.c.h.b16 %v1233
    %v1978 = vunpack.c.l.b16 %v1234
    %v1979 = vunpack.c.h.b16 %v1234
    %v1980 = vunpack.c.l.b16 %v1235
    %v1981 = vunpack.c.h.b16 %v1235
    %v1982 = vunpack.c.l.b16 %v1236
    %v1983 = vunpack.c.h.b16 %v1236
    %v1984 = vunpack.c.l.b16 %v1237
    %v1985 = vunpack.c.h.b16 %v1237
    %v1986 = vunpack.c.l.b16 %v1238
    %v1987 = vunpack.c.h.b16 %v1238
    %v1988 = vunpack.c.l.b16 %v1239
    %v1989 = vunpack.c.h.b16 %v1239
    %v1990 = vunpack.c.l.b16 %v1240
    %v1991 = vunpack.c.h.b16 %v1240
    %v1992 = vunpack.c.l.b16 %v1241
    %v1993 = vunpack.c.h.b16 %v1241
    %v1994 = vunpack.c.l.b16 %v1242
    %v1995 = vunpack.c.h.b16 %v1242
    %v1996 = vunpack.c.l.b16 %v1243
    %v1997 = vunpack.c.h.b16 %v1243
    %v1998 = vunpack.c.l.b16 %v1244
    %v1999 = vunpack.c.h.b16 %v1244
    %v2000 = vunpack.c.l.b16 %v1245
    %v2001 = vunpack.c.h.b16 %v1245
    %v2002 = vunpack.c.l.b16 %v1246
    %v2003 = vunpack.c.h.b16 %v1246
    %v2004 = vunpack.c.l.b16 %v1247
    %v2005 = vunpack.c.h.b16 %v1247
    %v2006 = vunpack.c.l.b16 %v1248
    %v2007 = vunpack.c.h.b16 %v1248
    %v2008 = vunpack.c.l.b16 %v1249
    %v2009 = vunpack.c.h.b16 %v1249
    %v2010 = vunpack.c.l.b16 %v1250
    %v2011 = vunpack.c.h.b16 %v1250
    %v2012 = vunpack.c.l.b16 %v1251
    %v2013 = vunpack.c.h.b16 %v1251
    %v2014 = vunpack.c.l.b16 %v1252
    %v2015 = vunpack.c.h.b16 %v1252
    %v2016 = vunpack.c.l.b16 %v1253
    %v2017 = vunpack.c.h.b16 %v1253
    %v2018 = vunpack.c.l.b16 %v1254
    %v2019 = vunpack.c.h.b16 %v1254
    %v2020 = vunpack.c.l.b16 %v1255
    %v2021 = vunpack.c.h.b16 %v1255
    %v2022 = vunpack.c.l.b16 %v1256
    %v2023 = vunpack.c.h.b16 %v1256
    %v2024 = vunpack.c.l.b16 %v1257
    %v2025 = vunpack.c.h.b16 %v1257
    %v2026 = vunpack.c.l.b16 %v1258
    %v2027 = vunpack.c.h.b16 %v1258
    %v2028 = vunpack.c.l.b16 %v1259
    %v2029 = vunpack.c.h.b16 %v1259
    %v2030 = vunpack.c.l.b16 %v1260
    %v2031 = vunpack.c.h.b16 %v1260
    %v2032 = vunpack.c.l.b16 %v1261
    %v2033 = vunpack.c.h.b16 %v1261
    %v2034 = vunpack.c.l.b16 %v1262
    %v2035 = vunpack.c.h.b16 %v1262
    %v2036 = vunpack.c.l.b16 %v1263
    %v2037 = vunpack.c.h.b16 %v1263
    %v2038 = vunpack.c.l.b16 %v1264
    %v2039 = vunpack.c.h.b16 %v1264
    %v2040 = vunpack.c.l.b16 %v1265
    %v2041 = vunpack.c.h.b16 %v1265
    %v2042 = vunpack.c.l.b16 %v1266
    %v2043 = vunpack.c.h.b16 %v1266
    %v2044 = vunpack.c.l.b16 %v1267
    %v2045 = vunpack.c.h.b16 %v1267
    %v2046 = vunpack.c.l.b16 %v1268
    %v2047 = vunpack.c.h.b16 %v1268
    %v2048 = vunpack.c.l.b16 %v1269
    %v2049 = vunpack.c.h.b16 %v1269
    %v2050 = vunpack.c.l.b16 %v1270
    %v2051 = vunpack.c.h.b16 %v1270
    %v2052 = vunpack.c.l.b16 %v1271
    %v2053 = vunpack.c.h.b16 %v1271
    %v2054 = vunpack.c.l.b16 %v1272
    %v2055 = vunpack.c.h.b16 %v1272
    %v2056 = vunpack.c.l.b16 %v1273
    %v2057 = vunpack.c.h.b16 %v1273
    %v2058 = vunpack.c.l.b16 %v1274
    %v2059 = vunpack.c.h.b16 %v1274
    %v2060 = vunpack.c.l.b16 %v1275
    %v2061 = vunpack.c.h.b16 %v1275
    %v2062 = vunpack.c.l.b16 %v1276
    %v2063 = vunpack.c.h.b16 %v1276
    %v2064 = vunpack.c.l.b16 %v1277
    %v2065 = vunpack.c.h.b16 %v1277
    %v2066 = vunpack.c.l.b16 %v1278
    %v2067 = vunpack.c.h.b16 %v1278
    %v2068 = vunpack.c.l.b16 %v1279
    %v2069 = vunpack.c.h.b16 %v1279
    %v2070 = vunpack.c.l.b16 %v1280
    %v2071 = vunpack.c.h.b16 %v1280
    %v2072 = vunpack.c.l.b16 %v1281
    %v2073 = vunpack.c.h.b16 %v1281
    %v2074 = vunpack.c.l.b16 %v1282
    %v2075 = vunpack.c.h.b16 %v1282
    %v2076 = vunpack.c.l.b16 %v1283
    %v2077 = vunpack.c.h.b16 %v1283
    %v2078 = vunpack.c.l.b16 %v1284
    %v2079 = vunpack.c.h.b16 %v1284
    %v2080 = vunpack.c.l.b16 %v1285
    %v2081 = vunpack.c.h.b16 %v1285
    %v2082 = vunpack.c.l.b16 %v1286
    %v2083 = vunpack.c.h.b16 %v1286
    %v2084 = vunpack.c.l.b16 %v1287
    %v2085 = vunpack.c.h.b16 %v1287
    %v2086 = vunpack.c.l.b16 %v1288
    %v2087 = vunpack.c.h.b16 %v1288
    %v2088 = vunpack.c.l.b16 %v1289
    %v2089 = vunpack.c.h.b16 %v1289
    %v2090 = vunpack.c.l.b16 %v1290
    %v2091 = vunpack.c.h.b16 %v1290
    %v2092 = vunpack.c.l.b16 %v1291
    %v2093 = vunpack.c.h.b16 %v1291
    %v2094 = vunpack.c.l.b16 %v1292
    %v2095 = vunpack.c.h.b16 %v1292
    %v2096 = vunpack.c.l.b16 %v1293
    %v2097 = vunpack.c.h.b16 %v1293
    %v2098 = vunpack.c.l.b16 %v1294
    %v2099 = vunpack.c.h.b16 %v1294
    %v2100 = vunpack.c.l.b16 %v1295
    %v2101 = vunpack.c.h.b16 %v1295
    %v2102 = vunpack.c.l.b16 %v1296
    %v2103 = vunpack.c.h.b16 %v1296
    %v2104 = vunpack.c.l.b16 %v1297
    %v2105 = vunpack.c.h.b16 %v1297
    %v2106 = vunpack.c.l.b16 %v1298
    %v2107 = vunpack.c.h.b16 %v1298
    %v2108 = vunpack.c.l.b16 %v1299
    %v2109 = vunpack.c.h.b16 %v1299
    %v2110 = vunpack.c.l.b16 %v1300
    %v2111 = vunpack.c.h.b16 %v1300
    %v2112 = vunpack.c.l.b16 %v1301
    %v2113 = vunpack.c.h.b16 %v1301
    %v2114 = vunpack.c.l.b16 %v1302
    %v2115 = vunpack.c.h.b16 %v1302
    %v2116 = vunpack.c.l.b16 %v1303
    %v2117 = vunpack.c.h.b16 %v1303
    %v2118 = vunpack.c.l.b16 %v1304
    %v2119 = vunpack.c.h.b16 %v1304
    %v2120 = vunpack.c.l.b16 %v1305
    %v2121 = vunpack.c.h.b16 %v1305
    %v2122 = vunpack.c.l.b16 %v1306
    %v2123 = vunpack.c.h.b16 %v1306
    %v2124 = vunpack.c.l.b16 %v1307
    %v2125 = vunpack.c.h.b16 %v1307
    %v2126 = vunpack.c.l.b16 %v1308
    %v2127 = vunpack.c.h.b16 %v1308
    %v2128 = vunpack.c.l.b16 %v1309
    %v2129 = vunpack.c.h.b16 %v1309
    %v2130 = vunpack.c.l.b16 %v1310
    %v2131 = vunpack.c.h.b16 %v1310
    %v2132 = vunpack.c.l.b16 %v1311
    %v2133 = vunpack.c.h.b16 %v1311
    %v2134 = vunpack.c.l.b16 %v1312
    %v2135 = vunpack.c.h.b16 %v1312
    %v2136 = vunpack.c.l.b16 %v1313
    %v2137 = vunpack.c.h.b16 %v1313
    %v2138 = vunpack.c.l.b16 %v1314
    %v2139 = vunpack.c.h.b16 %v1314
    %v2140 = vunpack.c.l.b16 %v1315
    %v2141 = vunpack.c.h.b16 %v1315
    %v2142 = vunpack.c.l.b16 %v1316
    %v2143 = vunpack.c.h.b16 %v1316
    %v2144 = vunpack.c.l.b16 %v1317
    %v2145 = vunpack.c.h.b16 %v1317
    %v2146 = vunpack.c.l.b16 %v1318
    %v2147 = vunpack.c.h.b16 %v1318
    %v2148 = vunpack.c.l.b16 %v1319
    %v2149 = vunpack.c.h.b16 %v1319
    %v2150 = vunpack.c.l.b16 %v1320
    %v2151 = vunpack.c.h.b16 %v1320
    %v2152 = vunpack.c.l.b16 %v1321
    %v2153 = vunpack.c.h.b16 %v1321
    %v2154 = vunpack.c.l.b16 %v1322
    %v2155 = vunpack.c.h.b16 %v1322
    %v2156 = vunpack.c.l.b16 %v1323
    %v2157 = vunpack.c.h.b16 %v1323
    %v2158 = vunpack.c.l.b16 %v1324
    %v2159 = vunpack.c.h.b16 %v1324
    %v2160 = vunpack.c.l.b16 %v1325
    %v2161 = vunpack.c.h.b16 %v1325
    %v2162 = vunpack.c.l.b16 %v1326
    %v2163 = vunpack.c.h.b16 %v1326
    %v2164 = vunpack.c.l.b16 %v1327
    %v2165 = vunpack.c.h.b16 %v1327
    %v2166 = vunpack.c.l.b16 %v1328
    %v2167 = vunpack.c.h.b16 %v1328
    %v2168 = vunpack.c.l.b16 %v1329
    %v2169 = vunpack.c.h.b16 %v1329
    %v2170 = vunpack.c.l.b16 %v1330
    %v2171 = vunpack.c.h.b16 %v1330
    %v2172 = vunpack.c.l.b16 %v1331
    %v2173 = vunpack.c.h.b16 %v1331
    %v2174 = vunpack.c.l.b16 %v1332
    %v2175 = vunpack.c.h.b16 %v1332
    %v2176 = vunpack.c.l.b16 %v1333
    %v2177 = vunpack.c.h.b16 %v1333
    %v2178 = vunpack.c.l.b16 %v1334
    %v2179 = vunpack.c.h.b16 %v1334
    %v2180 = vunpack.c.l.b16 %v1335
    %v2181 = vunpack.c.h.b16 %v1335
    %v2182 = vunpack.c.l.b16 %v1336
    %v2183 = vunpack.c.h.b16 %v1336
    %v2184 = vunpack.c.l.b16 %v1337
    %v2185 = vunpack.c.h.b16 %v1337
    %v2186 = vunpack.c.l.b16 %v1338
    %v2187 = vunpack.c.h.b16 %v1338
    %v2188 = vunpack.c.l.b16 %v1339
    %v2189 = vunpack.c.h.b16 %v1339
    %v2190 = vunpack.c.l.b16 %v1340
    %v2191 = vunpack.c.h.b16 %v1340
    %v2192 = vunpack.c.l.b16 %v1341
    %v2193 = vunpack.c.h.b16 %v1341
    %v2194 = vunpack.c.l.b16 %v1342
    %v2195 = vunpack.c.h.b16 %v1342
    %v2196 = vunpack.c.l.b16 %v1343
    %v2197 = vunpack.c.h.b16 %v1343
    %v2198 = vunpack.c.l.b16 %v1344
    %v2199 = vunpack.c.h.b16 %v1344
    %v2200 = vunpack.c.l.b16 %v1345
    %v2201 = vunpack.c.h.b16 %v1345
    %v2202 = vunpack.c.l.b16 %v1346
    %v2203 = vunpack.c.h.b16 %v1346
    %v2204 = vunpack.c.l.b16 %v1347
    %v2205 = vunpack.c.h.b16 %v1347
    %v2206 = vunpack.c.l.b16 %v1348
    %v2207 = vunpack.c.h.b16 %v1348
    %v2208 = vunpack.c.l.b16 %v1349
    %v2209 = vunpack.c.h.b16 %v1349
    %v2210 = vunpack.c.l.b16 %v1350
    %v2211 = vunpack.c.h.b16 %v1350
    %v2212 = vunpack.c.l.b16 %v1351
    %v2213 = vunpack.c.h.b16 %v1351
    %v2214 = vunpack.c.l.b16 %v1352
    %v2215 = vunpack.c.h.b16 %v1352
    %v2216 = vunpack.c.l.b16 %v1353
    %v2217 = vunpack.c.h.b16 %v1353
    %v2218 = vunpack.c.l.b16 %v1354
    %v2219 = vunpack.c.h.b16 %v1354
    %v2220 = vunpack.c.l.b16 %v1355
    %v2221 = vunpack.c.h.b16 %v1355
    %v2222 = vunpack.c.l.b16 %v1356
    %v2223 = vunpack.c.h.b16 %v1356
    %v2224 = vunpack.c.l.b16 %v1357
    %v2225 = vunpack.c.h.b16 %v1357
    %v2226 = vunpack.c.l.b16 %v1358
    %v2227 = vunpack.c.h.b16 %v1358
    %v2228 = vunpack.c.l.b16 %v1359
    %v2229 = vunpack.c.h.b16 %v1359
    %v2230 = vunpack.c.l.b16 %v1360
    %v2231 = vunpack.c.h.b16 %v1360
    %v2232 = vunpack.c.l.b16 %v1361
    %v2233 = vunpack.c.h.b16 %v1361
    %v2234 = vunpack.c.l.b16 %v1362
    %v2235 = vunpack.c.h.b16 %v1362
    %v2236 = vunpack.c.l.b16 %v1363
    %v2237 = vunpack.c.h.b16 %v1363
    %v2238 = vunpack.c.l.b16 %v1364
    %v2239 = vunpack.c.h.b16 %v1364
    %v2240 = vunpack.c.l.b16 %v1365
    %v2241 = vunpack.c.h.b16 %v1365
    %v2242 = vunpack.c.l.b16 %v1366
    %v2243 = vunpack.c.h.b16 %v1366
    %v2244 = vunpack.c.l.b16 %v1367
    %v2245 = vunpack.c.h.b16 %v1367
    %v2246 = vunpack.c.l.b16 %v1368
    %v2247 = vunpack.c.h.b16 %v1368
    %v2248 = vunpack.c.l.b16 %v1369
    %v2249 = vunpack.c.h.b16 %v1369
    %v2250 = vunpack.c.l.b16 %v1370
    %v2251 = vunpack.c.h.b16 %v1370
    %v2252 = vunpack.c.l.b16 %v1371
    %v2253 = vunpack.c.h.b16 %v1371
    %v2254 = vunpack.c.l.b16 %v1372
    %v2255 = vunpack.c.h.b16 %v1372
    %v2256 = vunpack.c.l.b16 %v1373
    %v2257 = vunpack.c.h.b16 %v1373
    %v2258 = vunpack.c.l.b16 %v1374
    %v2259 = vunpack.c.h.b16 %v1374
    %v2260 = vunpack.c.l.b16 %v1375
    %v2261 = vunpack.c.h.b16 %v1375
    %v2262 = vunpack.c.l.b16 %v1376
    %v2263 = vunpack.c.h.b16 %v1376
    %v2264 = vunpack.c.l.b16 %v1377
    %v2265 = vunpack.c.h.b16 %v1377
    %v2266 = vunpack.c.l.b16 %v1378
    %v2267 = vunpack.c.h.b16 %v1378
    %v2268 = vunpack.c.l.b16 %v1379
    %v2269 = vunpack.c.h.b16 %v1379
    %v2270 = vunpack.c.l.b16 %v1380
    %v2271 = vunpack.c.h.b16 %v1380
    %v2272 = vunpack.c.l.b16 %v1381
    %v2273 = vunpack.c.h.b16 %v1381
    %v2274 = vunpack.c.l.b16 %v1382
    %v2275 = vunpack.c.h.b16 %v1382
    %v2276 = vunpack.c.l.b16 %v1383
    %v2277 = vunpack.c.h.b16 %v1383
    %v2278 = vunpack.c.l.b16 %v1384
    %v2279 = vunpack.c.h.b16 %v1384
    %v2280 = vunpack.c.l.b16 %v1385
    %v2281 = vunpack.c.h.b16 %v1385
    %v2282 = vpack.c.b16 %v1712, %v1706
    %v2283 = vpack.c.b16 %v1713, %v1707
    %v2284 = vpack.c.b16 %v1714, %v1708
    %v2285 = vpack.c.b16 %v1715, %v1709
    %v2286 = vpack.c.b16 %v1716, %v1710
    %v2287 = vpack.c.b16 %v1717, %v1711
    %v2288 = vpack.c.b16 %v1724, %v1718
    %v2289 = vpack.c.b16 %v1725, %v1719
    %v2290 = vpack.c.b16 %v1726, %v1720
    %v2291 = vpack.c.b16 %v1727, %v1721
    %v2292 = vpack.c.b16 %v1728, %v1722
    %v2293 = vpack.c.b16 %v1729, %v1723
    %v2294 = vpack.c.b16 %v1736, %v1730
    %v2295 = vpack.c.b16 %v1737, %v1731
    %v2296 = vpack.c.b16 %v1738, %v1732
    %v2297 = vpack.c.b16 %v1739, %v1733
    %v2298 = vpack.c.b16 %v1740, %v1734
    %v2299 = vpack.c.b16 %v1741, %v1735
    %v2300 = vpack.c.b16 %v1748, %v1742
    %v2301 = vpack.c.b16 %v1749, %v1743
    %v2302 = vpack.c.b16 %v1750, %v1744
    %v2303 = vpack.c.b16 %v1751, %v1745
    %v2304 = vpack.c.b16 %v1752, %v1746
    %v2305 = vpack.c.b16 %v1753, %v1747
    %v2306 = vpack.c.b16 %v1760, %v1754
    %v2307 = vpack.c.b16 %v1761, %v1755
    %v2308 = vpack.c.b16 %v1762, %v1756
    %v2309 = vpack.c.b16 %v1763, %v1757
    %v2310 = vpack.c.b16 %v1764, %v1758
    %v2311 = vpack.c.b16 %v1765, %v1759
    %v2312 = vpack.c.b16 %v1772, %v1766
    %v2313 = vpack.c.b16 %v1773, %v1767
    %v2314 = vpack.c.b16 %v1774, %v1768
    %v2315 = vpack.c.b16 %v1775, %v1769
    %v2316 = vpack.c.b16 %v1776, %v1770
    %v2317 = vpack.c.b16 %v1777, %v1771
    %v2318 = vpack.c.b16 %v1784, %v1778
    %v2319 = vpack.c.b16 %v1785, %v1779
    %v2320 = vpack.c.b16 %v1786, %v1780
    %v2321 = vpack.c.b16 %v1787, %v1781
    %v2322 = vpack.c.b16 %v1788, %v1782
    %v2323 = vpack.c.b16 %v1789, %v1783
    %v2324 = vpack.c.b16 %v1796, %v1790
    %v2325 = vpack.c.b16 %v1797, %v1791
    %v2326 = vpack.c.b16 %v1798, %v1792
    %v2327 = vpack.c.b16 %v1799, %v1793
    %v2328 = vpack.c.b16 %v1800, %v1794
    %v2329 = vpack.c.b16 %v1801, %v1795
    %v2330 = vpack.c.b16 %v1808, %v1802
    %v2331 = vpack.c.b16 %v1809, %v1803
    %v2332 = vpack.c.b16 %v1810, %v1804
    %v2333 = vpack.c.b16 %v1811, %v1805
    %v2334 = vpack.c.b16 %v1812, %v1806
    %v2335 = vpack.c.b16 %v1813, %v1807
    %v2336 = vpack.c.b16 %v1820, %v1814
    %v2337 = vpack.c.b16 %v1821, %v1815
    %v2338 = vpack.c.b16 %v1822, %v1816
    %v2339 = vpack.c.b16 %v1823, %v1817
    %v2340 = vpack.c.b16 %v1824, %v1818
    %v2341 = vpack.c.b16 %v1825, %v1819
    %v2342 = vpack.c.b16 %v1832, %v1826
    %v2343 = vpack.c.b16 %v1833, %v1827
    %v2344 = vpack.c.b16 %v1834, %v1828
    %v2345 = vpack.c.b16 %v1835, %v1829
    %v2346 = vpack.c.b16 %v1836, %v1830
    %v2347 = vpack.c.b16 %v1837, %v1831
    %v2348 = vpack.c.b16 %v1844, %v1838
    %v2349 = vpack.c.b16 %v1845, %v1839
    %v2350 = vpack.c.b16 %v1846, %v1840
    %v2351 = vpack.c.b16 %v1847, %v1841
    %v2352 = vpack.c.b16 %v1848, %v1842
    %v2353 = vpack.c.b16 %v1849, %v1843
    %v2354 = vpack.c.b16 %v1856, %v1850
    %v2355 = vpack.c.b16 %v1857, %v1851
    %v2356 = vpack.c.b16 %v1858, %v1852
    %v2357 = vpack.c.b16 %v1859, %v1853
    %v2358 = vpack.c.b16 %v1860, %v1854
    %v2359 = vpack.c.b16 %v1861, %v1855
    %v2360 = vpack.c.b16 %v1868, %v1862
    %v2361 = vpack.c.b16 %v1869, %v1863
    %v2362 = vpack.c.b16 %v1870, %v1864
    %v2363 = vpack.c.b16 %v1871, %v1865
    %v2364 = vpack.c.b16 %v1872, %v1866
    %v2365 = vpack.c.b16 %v1873, %v1867
    %v2366 = vpack.c.b16 %v1880, %v1874
    %v2367 = vpack.c.b16 %v1881, %v1875
    %v2368 = vpack.c.b16 %v1882, %v1876
    %v2369 = vpack.c.b16 %v1883, %v1877
    %v2370 = vpack.c.b16 %v1884, %v1878
    %v2371 = vpack.c.b16 %v1885, %v1879
    %v2372 = vpack.c.b16 %v1892, %v1886
    %v2373 = vpack.c.b16 %v1893, %v1887
    %v2374 = vpack.c.b16 %v1894, %v1888
    %v2375 = vpack.c.b16 %v1895, %v1889
    %v2376 = vpack.c.b16 %v1896, %v1890
    %v2377 = vpack.c.b16 %v1897, %v1891
    %v2378 = vpack.c.b16 %v1904, %v1898
    %v2379 = vpack.c.b16 %v1905, %v1899
    %v2380 = vpack.c.b16 %v1906, %v1900
    %v2381 = vpack.c.b16 %v1907, %v1901
    %v2382 = vpack.c.b16 %v1908, %v1902
    %v2383 = vpack.c.b16 %v1909, %v1903
    %v2384 = vpack.c.b16 %v1916, %v1910
    %v2385 = vpack.c.b16 %v1917, %v1911
    %v2386 = vpack.c.b16 %v1918, %v1912
    %v2387 = vpack.c.b16 %v1919, %v1913
    %v2388 = vpack.c.b16 %v1920, %v1914
    %v2389 = vpack.c.b16 %v1921, %v1915
    %v2390 = vpack.c.b16 %v1928, %v1922
    %v2391 = vpack.c.b16 %v1929, %v1923
    %v2392 = vpack.c.b16 %v1930, %v1924
    %v2393 = vpack.c.b16 %v1931, %v1925
    %v2394 = vpack.c.b16 %v1932, %v1926
    %v2395 = vpack.c.b16 %v1933, %v1927
    %v2396 = vpack.c.b16 %v1940, %v1934
    %v2397 = vpack.c.b16 %v1941, %v1935
    %v2398 = vpack.c.b16 %v1942, %v1936
    %v2399 = vpack.c.b16 %v1943, %v1937
    %v2400 = vpack.c.b16 %v1944, %v1938
    %v2401 = vpack.c.b16 %v1945, %v1939
    %v2402 = vpack.c.b16 %v1952, %v1946
    %v2403 = vpack.c.b16 %v1953, %v1947
    %v2404 = vpack.c.b16 %v1954, %v1948
    %v2405 = vpack.c.b16 %v1955, %v1949
    %v2406 = vpack.c.b16 %v1956, %v1950
    %v2407 = vpack.c.b16 %v1957, %v1951
    %v2408 = vpack.c.b16 %v1964, %v1958
    %v2409 = vpack.c.b16 %v1965, %v1959
    %v2410 = vpack.c.b16 %v1966, %v1960
    %v2411 = vpack.c.b16 %v1967, %v1961
    %v2412 = vpack.c.b16 %v1968, %v1962
    %v2413 = vpack.c.b16 %v1969, %v1963
    %v2414 = vpack.c.b16 %v1976, %v1970
    %v2415 = vpack.c.b16 %v1977, %v1971
    %v2416 = vpack.c.b16 %v1978, %v1972
    %v2417 = vpack.c.b16 %v1979, %v1973
    %v2418 = vpack.c.b16 %v1980, %v1974
    %v2419 = vpack.c.b16 %v1981, %v1975
    %v2420 = vpack.c.b16 %v1988, %v1982
    %v2421 = vpack.c.b16 %v1989, %v1983
    %v2422 = vpack.c.b16 %v1990, %v1984
    %v2423 = vpack.c.b16 %v1991, %v1985
    %v2424 = vpack.c.b16 %v1992, %v1986
    %v2425 = vpack.c.b16 %v1993, %v1987
    %v2426 = vpack.c.b16 %v2000, %v1994
    %v2427 = vpack.c.b16 %v2001, %v1995
    %v2428 = vpack.c.b16 %v2002, %v1996
    %v2429 = vpack.c.b16 %v2003, %v1997
    %v2430 = vpack.c.b16 %v2004, %v1998
    %v2431 = vpack.c.b16 %v2005, %v1999
    %v2432 = vpack.c.b16 %v2012, %v2006
    %v2433 = vpack.c.b16 %v2013, %v2007
    %v2434 = vpack.c.b16 %v2014, %v2008
    %v2435 = vpack.c.b16 %v2015, %v2009
    %v2436 = vpack.c.b16 %v2016, %v2010
    %v2437 = vpack.c.b16 %v2017, %v2011
    %v2438 = vpack.c.b16 %v2024, %v2018
    %v2439 = vpack.c.b16 %v2025, %v2019
    %v2440 = vpack.c.b16 %v2026, %v2020
    %v2441 = vpack.c.b16 %v2027, %v2021
    %v2442 = vpack.c.b16 %v2028, %v2022
    %v2443 = vpack.c.b16 %v2029, %v2023
    %v2444 = vpack.c.b16 %v2036, %v2030
    %v2445 = vpack.c.b16 %v2037, %v2031
    %v2446 = vpack.c.b16 %v2038, %v2032
    %v2447 = vpack.c.b16 %v2039, %v2033
    %v2448 = vpack.c.b16 %v2040, %v2034
    %v2449 = vpack.c.b16 %v2041, %v2035
    %v2450 = vpack.c.b16 %v2048, %v2042
    %v2451 = vpack.c.b16 %v2049, %v2043
    %v2452 = vpack.c.b16 %v2050, %v2044
    %v2453 = vpack.c.b16 %v2051, %v2045
    %v2454 = vpack.c.b16 %v2052, %v2046
    %v2455 = vpack.c.b16 %v2053, %v2047
    %v2456 = vpack.c.b16 %v2060, %v2054
    %v2457 = vpack.c.b16 %v2061, %v2055
    %v2458 = vpack.c.b16 %v2062, %v2056
    %v2459 = vpack.c.b16 %v2063, %v2057
    %v2460 = vpack.c.b16 %v2064, %v2058
    %v2461 = vpack.c.b16 %v2065, %v2059
    %v2462 = vpack.c.b16 %v2072, %v2066
    %v2463 = vpack.c.b16 %v2073, %v2067
    %v2464 = vpack.c.b16 %v2074, %v2068
    %v2465 = vpack.c.b16 %v2075, %v2069
    %v2466 = vpack.c.b16 %v2076, %v2070
    %v2467 = vpack.c.b16 %v2077, %v2071
    %v2468 = vpack.c.b16 %v2084, %v2078
    %v2469 = vpack.c.b16 %v2085, %v2079
    %v2470 = vpack.c.b16 %v2086, %v2080
    %v2471 = vpack.c.b16 %v2087, %v2081
    %v2472 = vpack.c.b16 %v2088, %v2082
    %v2473 = vpack.c.b16 %v2089, %v2083
    %v2474 = vpack.c.b16 %v2096, %v2090
    %v2475 = vpack.c.b16 %v2097, %v2091
    %v2476 = vpack.c.b16 %v2098, %v2092
    %v2477 = vpack.c.b16 %v2099, %v2093
    %v2478 = vpack.c.b16 %v2100, %v2094
    %v2479 = vpack.c.b16 %v2101, %v2095
    %v2480 = vpack.c.b16 %v2108, %v2102
    %v2481 = vpack.c.b16 %v2109, %v2103
    %v2482 = vpack.c.b16 %v2110, %v2104
    %v2483 = vpack.c.b16 %v2111, %v2105
    %v2484 = vpack.c.b16 %v2112, %v2106
    %v2485 = vpack.c.b16 %v2113, %v2107
    %v2486 = vpack.c.b16 %v2120, %v2114
    %v2487 = vpack.c.b16 %v2121, %v2115
    %v2488 = vpack.c.b16 %v2122, %v2116
    %v2489 = vpack.c.b16 %v2123, %v2117
    %v2490 = vpack.c.b16 %v2124, %v2118
    %v2491 = vpack.c.b16 %v2125, %v2119
    %v2492 = vpack.c.b16 %v2132, %v2126
    %v2493 = vpack.c.b16 %v2133, %v2127
    %v2494 = vpack.c.b16 %v2134, %v2128
    %v2495 = vpack.c.b16 %v2135, %v2129
    %v2496 = vpack.c.b16 %v2136, %v2130
    %v2497 = vpack.c.b16 %v2137, %v2131
    %v2498 = vpack.c.b16 %v2144, %v2138
    %v2499 = vpack.c.b16 %v2145, %v2139
    %v2500 = vpack.c.b16 %v2146, %v2140
    %v2501 = vpack.c.b16 %v2147, %v2141
    %v2502 = vpack.c.b16 %v2148, %v2142
    %v2503 = vpack.c.b16 %v2149, %v2143
    %v2504 = vpack.c.b16 %v2156, %v2150
    %v2505 = vpack.c.b16 %v2157, %v2151
    %v2506 = vpack.c.b16 %v2158, %v2152
    %v2507 = vpack.c.b16 %v2159, %v2153
    %v2508 = vpack.c.b16 %v2160, %v2154
    %v2509 = vpack.c.b16 %v2161, %v2155
    %v2510 = vpack.c.b16 %v2168, %v2162
    %v2511 = vpack.c.b16 %v2169, %v2163
    %v2512 = vpack.c.b16 %v2170, %v2164
    %v2513 = vpack.c.b16 %v2171, %v2165
    %v2514 = vpack.c.b16 %v2172, %v2166
    %v2515 = vpack.c.b16 %v2173, %v2167
    %v2516 = vpack.c.b16 %v2180, %v2174
    %v2517 = vpack.c.b16 %v2181, %v2175
    %v2518 = vpack.c.b16 %v2182, %v2176
    %v2519 = vpack.c.b16 %v2183, %v2177
    %v2520 = vpack.c.b16 %v2184, %v2178
    %v2521 = vpack.c.b16 %v2185, %v2179
    %v2522 = vpack.c.b16 %v2192, %v2186
    %v2523 = vpack.c.b16 %v2193, %v2187
    %v2524 = vpack.c.b16 %v2194, %v2188
    %v2525 = vpack.c.b16 %v2195, %v2189
    %v2526 = vpack.c.b16 %v2196, %v2190
    %v2527 = vpack.c.b16 %v2197, %v2191
    %v2528 = vpack.c.b16 %v2204, %v2198
    %v2529 = vpack.c.b16 %v2205, %v2199
    %v2530 = vpack.c.b16 %v2206, %v2200
    %v2531 = vpack.c.b16 %v2207, %v2201
    %v2532 = vpack.c.b16 %v2208, %v2202
    %v2533 = vpack.c.b16 %v2209, %v2203
    %v2534 = vpack.c.b16 %v2216, %v2210
    %v2535 = vpack.c.b16 %v2217, %v2211
    %v2536 = vpack.c.b16 %v2218, %v2212
    %v2537 = vpack.c.b16 %v2219, %v2213
    %v2538 = vpack.c.b16 %v2220, %v2214
    %v2539 = vpack.c.b16 %v2221, %v2215
    %v2540 = vpack.c.b16 %v2228, %v2222
    %v2541 = vpack.c.b16 %v2229, %v2223
    %v2542 = vpack.c.b16 %v2230, %v2224
    %v2543 = vpack.c.b16 %v2231, %v2225
    %v2544 = vpack.c.b16 %v2232, %v2226
    %v2545 = vpack.c.b16 %v2233, %v2227
    %v2546 = vpack.c.b16 %v2240, %v2234
    %v2547 = vpack.c.b16 %v2241, %v2235
    %v2548 = vpack.c.b16 %v2242, %v2236
    %v2549 = vpack.c.b16 %v2243, %v2237
    %v2550 = vpack.c.b16 %v2244, %v2238
    %v2551 = vpack.c.b16 %v2245, %v2239
    %v2552 = vpack.c.b16 %v2252, %v2246
    %v2553 = vpack.c.b16 %v2253, %v2247
    %v2554 = vpack.c.b16 %v2254, %v2248
    %v2555 = vpack.c.b16 %v2255, %v2249
    %v2556 = vpack.c.b16 %v2256, %v2250
    %v2557 = vpack.c.b16 %v2257, %v2251
    %v2558 = vpack.c.b16 %v2264, %v2258
    %v2559 = vpack.c.b16 %v2265, %v2259
    %v2560 = vpack.c.b16 %v2266, %v2260
    %v2561 = vpack.c.b16 %v2267, %v2261
    %v2562 = vpack.c.b16 %v2268, %v2262
    %v2563 = vpack.c.b16 %v2269, %v2263
    %v2564 = vpack.c.b16 %v2276, %v2270
    %v2565 = vpack.c.b16 %v2277, %v2271
    %v2566 = vpack.c.b16 %v2278, %v2272
    %v2567 = vpack.c.b16 %v2279, %v2273
    %v2568 = vpack.c.b16 %v2280, %v2274
    %v2569 = vpack.c.b16 %v2281, %v2275
    %2858 = vmatprep.subr.bf16.mxu0 %v2325
    %2859 = vmatpush1.bf16.msra.mxu0 %v2324
    %2860 = vmatprep.subr.bf16.mxu0 %v2319
    %2861 = vmatpush1.bf16.msra.mxu0 %v2318
    %2862 = vmatprep.subr.bf16.mxu0 %v2313
    %2863 = vmatpush1.bf16.msra.mxu0 %v2312
    %2864 = vmatprep.subr.bf16.mxu0 %v2307
    %2865 = vmatpush1.bf16.msra.mxu0 %v2306
    %2866 = vmatprep.subr.bf16.mxu0 %v2301
    %2867 = vmatpush1.bf16.msra.mxu0 %v2300
    %2868 = vmatprep.subr.bf16.mxu0 %v2295
    %2869 = vmatpush1.bf16.msra.mxu0 %v2294
    %2870 = vmatprep.subr.bf16.mxu0 %v2289
    %2871 = vmatpush1.bf16.msra.mxu0 %v2288
    %2872 = vmatprep.subr.bf16.mxu0 %v2283
    %2873 = vmatpush1.bf16.msra.mxu0 %v2282
    %2874 = vmatprep.subr.bf16.mxu0 %v2373
    %2875 = vmatpush2.bf16.msra.mxu0 %v2372
    %2876 = vmatprep.subr.bf16.mxu0 %v2367
    %2877 = vmatpush2.bf16.msra.mxu0 %v2366
    %2878 = vmatprep.subr.bf16.mxu0 %v2361
    %2879 = vmatpush2.bf16.msra.mxu0 %v2360
    %2880 = vmatprep.subr.bf16.mxu0 %v2355
    %2881 = vmatpush2.bf16.msra.mxu0 %v2354
    %2882 = vmatprep.subr.bf16.mxu0 %v2349
    %2883 = vmatpush2.bf16.msra.mxu0 %v2348
    %2884 = vmatprep.subr.bf16.mxu0 %v2343
    %2885 = vmatpush2.bf16.msra.mxu0 %v2342
    %2886 = vmatprep.subr.bf16.mxu0 %v2337
    %2887 = vmatpush2.bf16.msra.mxu0 %v2336
    %2888 = vmatprep.subr.bf16.mxu0 %v2331
    %2889 = vmatpush2.bf16.msra.mxu0 %v2330
    %2890 = vmatprep.mubr.bf16.mxu0 %v1093
    %2891 = vmatmul.mubr.bf16.gmra.mxu0 %v1092
    %v2892 = vpop.f32.mrf.mxu0
    %v2893 = vadd.f32 %v1391, %v2892
    %v2894 = vpop.f32.mrf.mxu0
    %v2895 = vadd.f32 %v1395, %v2894
    %v2896 = vpop.f32.mrf.mxu0
    %v2897 = vpop.f32.mrf.mxu0
    %2898 = vdwg.mxu0
    %2899 = vmatprep.subr.bf16.mxu0 %v2421
    %2900 = vmatpush1.bf16.msra.mxu0 %v2420
    %2901 = vmatprep.subr.bf16.mxu0 %v2415
    %2902 = vmatpush1.bf16.msra.mxu0 %v2414
    %2903 = vmatprep.subr.bf16.mxu0 %v2409
    %2904 = vmatpush1.bf16.msra.mxu0 %v2408
    %2905 = vmatprep.subr.bf16.mxu0 %v2403
    %2906 = vmatpush1.bf16.msra.mxu0 %v2402
    %2907 = vmatprep.subr.bf16.mxu0 %v2397
    %2908 = vmatpush1.bf16.msra.mxu0 %v2396
    %2909 = vmatprep.subr.bf16.mxu0 %v2391
    %2910 = vmatpush1.bf16.msra.mxu0 %v2390
    %2911 = vmatprep.subr.bf16.mxu0 %v2385
    %2912 = vmatpush1.bf16.msra.mxu0 %v2384
    %2913 = vmatprep.subr.bf16.mxu0 %v2379
    %2914 = vmatpush1.bf16.msra.mxu0 %v2378
    %2915 = vmatprep.subr.bf16.mxu0 %v2469
    %2916 = vmatpush2.bf16.msra.mxu0 %v2468
    %2917 = vmatprep.subr.bf16.mxu0 %v2463
    %2918 = vmatpush2.bf16.msra.mxu0 %v2462
    %2919 = vmatprep.subr.bf16.mxu0 %v2457
    %2920 = vmatpush2.bf16.msra.mxu0 %v2456
    %2921 = vmatprep.subr.bf16.mxu0 %v2451
    %2922 = vmatpush2.bf16.msra.mxu0 %v2450
    %2923 = vmatprep.subr.bf16.mxu0 %v2445
    %2924 = vmatpush2.bf16.msra.mxu0 %v2444
    %2925 = vmatprep.subr.bf16.mxu0 %v2439
    %2926 = vmatpush2.bf16.msra.mxu0 %v2438
    %2927 = vmatprep.subr.bf16.mxu0 %v2433
    %2928 = vmatpush2.bf16.msra.mxu0 %v2432
    %2929 = vmatprep.subr.bf16.mxu0 %v2427
    %2930 = vmatpush2.bf16.msra.mxu0 %v2426
    %2931 = vmatprep.mubr.bf16.mxu0 %v1095
    %2932 = vmatmul.mubr.bf16.gmra.mxu0 %v1094
    %v2933 = vpop.f32.mrf.mxu0
    %v2934 = vadd.f32 %v2893, %v2933
    %v2935 = vpop.f32.mrf.mxu0
    %v2936 = vadd.f32 %v2895, %v2935
    %v2937 = vpop.f32.mrf.mxu0
    %v2938 = vpop.f32.mrf.mxu0
    %2939 = vdwg.mxu0
    %2940 = vmatprep.subr.bf16.mxu0 %v2517
    %2941 = vmatpush1.bf16.msra.mxu0 %v2516
    %2942 = vmatprep.subr.bf16.mxu0 %v2511
    %2943 = vmatpush1.bf16.msra.mxu0 %v2510
    %2944 = vmatprep.subr.bf16.mxu0 %v2505
    %2945 = vmatpush1.bf16.msra.mxu0 %v2504
    %2946 = vmatprep.subr.bf16.mxu0 %v2499
    %2947 = vmatpush1.bf16.msra.mxu0 %v2498
    %2948 = vmatprep.subr.bf16.mxu0 %v2493
    %2949 = vmatpush1.bf16.msra.mxu0 %v2492
    %2950 = vmatprep.subr.bf16.mxu0 %v2487
    %2951 = vmatpush1.bf16.msra.mxu0 %v2486
    %2952 = vmatprep.subr.bf16.mxu0 %v2481
    %2953 = vmatpush1.bf16.msra.mxu0 %v2480
    %2954 = vmatprep.subr.bf16.mxu0 %v2475
    %2955 = vmatpush1.bf16.msra.mxu0 %v2474
    %2956 = vmatprep.subr.bf16.mxu0 %v2565
    %2957 = vmatpush2.bf16.msra.mxu0 %v2564
    %2958 = vmatprep.subr.bf16.mxu0 %v2559
    %2959 = vmatpush2.bf16.msra.mxu0 %v2558
    %2960 = vmatprep.subr.bf16.mxu0 %v2553
    %2961 = vmatpush2.bf16.msra.mxu0 %v2552
    %2962 = vmatprep.subr.bf16.mxu0 %v2547
    %2963 = vmatpush2.bf16.msra.mxu0 %v2546
    %2964 = vmatprep.subr.bf16.mxu0 %v2541
    %2965 = vmatpush2.bf16.msra.mxu0 %v2540
    %2966 = vmatprep.subr.bf16.mxu0 %v2535
    %2967 = vmatpush2.bf16.msra.mxu0 %v2534
    %2968 = vmatprep.subr.bf16.mxu0 %v2529
    %2969 = vmatpush2.bf16.msra.mxu0 %v2528
    %2970 = vmatprep.subr.bf16.mxu0 %v2523
    %2971 = vmatpush2.bf16.msra.mxu0 %v2522
    %2972 = vmatprep.mubr.bf16.mxu0 %v1097
    %2973 = vmatmul.mubr.bf16.gmra.mxu0 %v1096
    %v2974 = vpop.f32.mrf.mxu0
    %v2975 = vadd.f32 %v2934, %v2974
    %v2976 = vpop.f32.mrf.mxu0
    %v2977 = vadd.f32 %v2936, %v2976
    %v2978 = vpop.f32.mrf.mxu0
    %v2979 = vpop.f32.mrf.mxu0
    %2980 = vdwg.mxu0
    %2981 = vmatprep.subr.bf16.mxu0 %v2327
    %2982 = vmatpush1.bf16.msra.mxu0 %v2326
    %2983 = vmatprep.subr.bf16.mxu0 %v2321
    %2984 = vmatpush1.bf16.msra.mxu0 %v2320
    %2985 = vmatprep.subr.bf16.mxu0 %v2315
    %2986 = vmatpush1.bf16.msra.mxu0 %v2314
    %2987 = vmatprep.subr.bf16.mxu0 %v2309
    %2988 = vmatpush1.bf16.msra.mxu0 %v2308
    %2989 = vmatprep.subr.bf16.mxu0 %v2303
    %2990 = vmatpush1.bf16.msra.mxu0 %v2302
    %2991 = vmatprep.subr.bf16.mxu0 %v2297
    %2992 = vmatpush1.bf16.msra.mxu0 %v2296
    %2993 = vmatprep.subr.bf16.mxu0 %v2291
    %2994 = vmatpush1.bf16.msra.mxu0 %v2290
    %2995 = vmatprep.subr.bf16.mxu0 %v2285
    %2996 = vmatpush1.bf16.msra.mxu0 %v2284
    %2997 = vmatprep.subr.bf16.mxu0 %v2375
    %2998 = vmatpush2.bf16.msra.mxu0 %v2374
    %2999 = vmatprep.subr.bf16.mxu0 %v2369
    %3000 = vmatpush2.bf16.msra.mxu0 %v2368
    %3001 = vmatprep.subr.bf16.mxu0 %v2363
    %3002 = vmatpush2.bf16.msra.mxu0 %v2362
    %3003 = vmatprep.subr.bf16.mxu0 %v2357
    %3004 = vmatpush2.bf16.msra.mxu0 %v2356
    %3005 = vmatprep.subr.bf16.mxu0 %v2351
    %3006 = vmatpush2.bf16.msra.mxu0 %v2350
    %3007 = vmatprep.subr.bf16.mxu0 %v2345
    %3008 = vmatpush2.bf16.msra.mxu0 %v2344
    %3009 = vmatprep.subr.bf16.mxu0 %v2339
    %3010 = vmatpush2.bf16.msra.mxu0 %v2338
    %3011 = vmatprep.subr.bf16.mxu0 %v2333
    %3012 = vmatpush2.bf16.msra.mxu0 %v2332
    %3013 = vmatprep.mubr.bf16.mxu0 %v1093
    %3014 = vmatmul.mubr.bf16.gmra.mxu0 %v1092
    %v3015 = vpop.f32.mrf.mxu0
    %v3016 = vadd.f32 %v1399, %v3015
    %v3017 = vpop.f32.mrf.mxu0
    %v3018 = vadd.f32 %v1403, %v3017
    %v3019 = vpop.f32.mrf.mxu0
    %v3020 = vpop.f32.mrf.mxu0
    %3021 = vdwg.mxu0
    %3022 = vmatprep.subr.bf16.mxu0 %v2423
    %3023 = vmatpush1.bf16.msra.mxu0 %v2422
    %3024 = vmatprep.subr.bf16.mxu0 %v2417
    %3025 = vmatpush1.bf16.msra.mxu0 %v2416
    %3026 = vmatprep.subr.bf16.mxu0 %v2411
    %3027 = vmatpush1.bf16.msra.mxu0 %v2410
    %3028 = vmatprep.subr.bf16.mxu0 %v2405
    %3029 = vmatpush1.bf16.msra.mxu0 %v2404
    %3030 = vmatprep.subr.bf16.mxu0 %v2399
    %3031 = vmatpush1.bf16.msra.mxu0 %v2398
    %3032 = vmatprep.subr.bf16.mxu0 %v2393
    %3033 = vmatpush1.bf16.msra.mxu0 %v2392
    %3034 = vmatprep.subr.bf16.mxu0 %v2387
    %3035 = vmatpush1.bf16.msra.mxu0 %v2386
    %3036 = vmatprep.subr.bf16.mxu0 %v2381
    %3037 = vmatpush1.bf16.msra.mxu0 %v2380
    %3038 = vmatprep.subr.bf16.mxu0 %v2471
    %3039 = vmatpush2.bf16.msra.mxu0 %v2470
    %3040 = vmatprep.subr.bf16.mxu0 %v2465
    %3041 = vmatpush2.bf16.msra.mxu0 %v2464
    %3042 = vmatprep.subr.bf16.mxu0 %v2459
    %3043 = vmatpush2.bf16.msra.mxu0 %v2458
    %3044 = vmatprep.subr.bf16.mxu0 %v2453
    %3045 = vmatpush2.bf16.msra.mxu0 %v2452
    %3046 = vmatprep.subr.bf16.mxu0 %v2447
    %3047 = vmatpush2.bf16.msra.mxu0 %v2446
    %3048 = vmatprep.subr.bf16.mxu0 %v2441
    %3049 = vmatpush2.bf16.msra.mxu0 %v2440
    %3050 = vmatprep.subr.bf16.mxu0 %v2435
    %3051 = vmatpush2.bf16.msra.mxu0 %v2434
    %3052 = vmatprep.subr.bf16.mxu0 %v2429
    %3053 = vmatpush2.bf16.msra.mxu0 %v2428
    %3054 = vmatprep.mubr.bf16.mxu0 %v1095
    %3055 = vmatmul.mubr.bf16.gmra.mxu0 %v1094
    %v3056 = vpop.f32.mrf.mxu0
    %v3057 = vadd.f32 %v3016, %v3056
    %v3058 = vpop.f32.mrf.mxu0
    %v3059 = vadd.f32 %v3018, %v3058
    %v3060 = vpop.f32.mrf.mxu0
    %v3061 = vpop.f32.mrf.mxu0
    %3062 = vdwg.mxu0
    %3063 = vmatprep.subr.bf16.mxu0 %v2519
    %3064 = vmatpush1.bf16.msra.mxu0 %v2518
    %3065 = vmatprep.subr.bf16.mxu0 %v2513
    %3066 = vmatpush1.bf16.msra.mxu0 %v2512
    %3067 = vmatprep.subr.bf16.mxu0 %v2507
    %3068 = vmatpush1.bf16.msra.mxu0 %v2506
    %3069 = vmatprep.subr.bf16.mxu0 %v2501
    %3070 = vmatpush1.bf16.msra.mxu0 %v2500
    %3071 = vmatprep.subr.bf16.mxu0 %v2495
    %3072 = vmatpush1.bf16.msra.mxu0 %v2494
    %3073 = vmatprep.subr.bf16.mxu0 %v2489
    %3074 = vmatpush1.bf16.msra.mxu0 %v2488
    %3075 = vmatprep.subr.bf16.mxu0 %v2483
    %3076 = vmatpush1.bf16.msra.mxu0 %v2482
    %3077 = vmatprep.subr.bf16.mxu0 %v2477
    %3078 = vmatpush1.bf16.msra.mxu0 %v2476
    %3079 = vmatprep.subr.bf16.mxu0 %v2567
    %3080 = vmatpush2.bf16.msra.mxu0 %v2566
    %3081 = vmatprep.subr.bf16.mxu0 %v2561
    %3082 = vmatpush2.bf16.msra.mxu0 %v2560
    %3083 = vmatprep.subr.bf16.mxu0 %v2555
    %3084 = vmatpush2.bf16.msra.mxu0 %v2554
    %3085 = vmatprep.subr.bf16.mxu0 %v2549
    %3086 = vmatpush2.bf16.msra.mxu0 %v2548
    %3087 = vmatprep.subr.bf16.mxu0 %v2543
    %3088 = vmatpush2.bf16.msra.mxu0 %v2542
    %3089 = vmatprep.subr.bf16.mxu0 %v2537
    %3090 = vmatpush2.bf16.msra.mxu0 %v2536
    %3091 = vmatprep.subr.bf16.mxu0 %v2531
    %3092 = vmatpush2.bf16.msra.mxu0 %v2530
    %3093 = vmatprep.subr.bf16.mxu0 %v2525
    %3094 = vmatpush2.bf16.msra.mxu0 %v2524
    %3095 = vmatprep.mubr.bf16.mxu0 %v1097
    %3096 = vmatmul.mubr.bf16.gmra.mxu0 %v1096
    %v3097 = vpop.f32.mrf.mxu0
    %v3098 = vadd.f32 %v3057, %v3097
    %v3099 = vpop.f32.mrf.mxu0
    %v3100 = vadd.f32 %v3059, %v3099
    %v3101 = vpop.f32.mrf.mxu0
    %v3102 = vpop.f32.mrf.mxu0
    %3103 = vdwg.mxu0
    %3104 = vmatprep.subr.bf16.mxu0 %v2329
    %3105 = vmatpush1.bf16.msra.mxu0 %v2328
    %3106 = vmatprep.subr.bf16.mxu0 %v2323
    %3107 = vmatpush1.bf16.msra.mxu0 %v2322
    %3108 = vmatprep.subr.bf16.mxu0 %v2317
    %3109 = vmatpush1.bf16.msra.mxu0 %v2316
    %3110 = vmatprep.subr.bf16.mxu0 %v2311
    %3111 = vmatpush1.bf16.msra.mxu0 %v2310
    %3112 = vmatprep.subr.bf16.mxu0 %v2305
    %3113 = vmatpush1.bf16.msra.mxu0 %v2304
    %3114 = vmatprep.subr.bf16.mxu0 %v2299
    %3115 = vmatpush1.bf16.msra.mxu0 %v2298
    %3116 = vmatprep.subr.bf16.mxu0 %v2293
    %3117 = vmatpush1.bf16.msra.mxu0 %v2292
    %3118 = vmatprep.subr.bf16.mxu0 %v2287
    %3119 = vmatpush1.bf16.msra.mxu0 %v2286
    %3120 = vmatprep.subr.bf16.mxu0 %v2377
    %3121 = vmatpush2.bf16.msra.mxu0 %v2376
    %3122 = vmatprep.subr.bf16.mxu0 %v2371
    %3123 = vmatpush2.bf16.msra.mxu0 %v2370
    %3124 = vmatprep.subr.bf16.mxu0 %v2365
    %3125 = vmatpush2.bf16.msra.mxu0 %v2364
    %3126 = vmatprep.subr.bf16.mxu0 %v2359
    %3127 = vmatpush2.bf16.msra.mxu0 %v2358
    %3128 = vmatprep.subr.bf16.mxu0 %v2353
    %3129 = vmatpush2.bf16.msra.mxu0 %v2352
    %3130 = vmatprep.subr.bf16.mxu0 %v2347
    %3131 = vmatpush2.bf16.msra.mxu0 %v2346
    %3132 = vmatprep.subr.bf16.mxu0 %v2341
    %3133 = vmatpush2.bf16.msra.mxu0 %v2340
    %3134 = vmatprep.subr.bf16.mxu0 %v2335
    %3135 = vmatpush2.bf16.msra.mxu0 %v2334
    %3136 = vmatprep.mubr.bf16.mxu0 %v1093
    %3137 = vmatmul.mubr.bf16.gmra.mxu0 %v1092
    %v3138 = vpop.f32.mrf.mxu0
    %v3139 = vadd.f32 %v1407, %v3138
    %v3140 = vpop.f32.mrf.mxu0
    %v3141 = vadd.f32 %v1411, %v3140
    %v3142 = vpop.f32.mrf.mxu0
    %v3143 = vpop.f32.mrf.mxu0
    %3144 = vdwg.mxu0
    %3145 = vmatprep.subr.bf16.mxu0 %v2425
    %3146 = vmatpush1.bf16.msra.mxu0 %v2424
    %3147 = vmatprep.subr.bf16.mxu0 %v2419
    %3148 = vmatpush1.bf16.msra.mxu0 %v2418
    %3149 = vmatprep.subr.bf16.mxu0 %v2413
    %3150 = vmatpush1.bf16.msra.mxu0 %v2412
    %3151 = vmatprep.subr.bf16.mxu0 %v2407
    %3152 = vmatpush1.bf16.msra.mxu0 %v2406
    %3153 = vmatprep.subr.bf16.mxu0 %v2401
    %3154 = vmatpush1.bf16.msra.mxu0 %v2400
    %3155 = vmatprep.subr.bf16.mxu0 %v2395
    %3156 = vmatpush1.bf16.msra.mxu0 %v2394
    %3157 = vmatprep.subr.bf16.mxu0 %v2389
    %3158 = vmatpush1.bf16.msra.mxu0 %v2388
    %3159 = vmatprep.subr.bf16.mxu0 %v2383
    %3160 = vmatpush1.bf16.msra.mxu0 %v2382
    %3161 = vmatprep.subr.bf16.mxu0 %v2473
    %3162 = vmatpush2.bf16.msra.mxu0 %v2472
    %3163 = vmatprep.subr.bf16.mxu0 %v2467
    %3164 = vmatpush2.bf16.msra.mxu0 %v2466
    %3165 = vmatprep.subr.bf16.mxu0 %v2461
    %3166 = vmatpush2.bf16.msra.mxu0 %v2460
    %3167 = vmatprep.subr.bf16.mxu0 %v2455
    %3168 = vmatpush2.bf16.msra.mxu0 %v2454
    %3169 = vmatprep.subr.bf16.mxu0 %v2449
    %3170 = vmatpush2.bf16.msra.mxu0 %v2448
    %3171 = vmatprep.subr.bf16.mxu0 %v2443
    %3172 = vmatpush2.bf16.msra.mxu0 %v2442
    %3173 = vmatprep.subr.bf16.mxu0 %v2437
    %3174 = vmatpush2.bf16.msra.mxu0 %v2436
    %3175 = vmatprep.subr.bf16.mxu0 %v2431
    %3176 = vmatpush2.bf16.msra.mxu0 %v2430
    %3177 = vmatprep.mubr.bf16.mxu0 %v1095
    %3178 = vmatmul.mubr.bf16.gmra.mxu0 %v1094
    %v3179 = vpop.f32.mrf.mxu0
    %v3180 = vadd.f32 %v3139, %v3179
    %v3181 = vpop.f32.mrf.mxu0
    %v3182 = vadd.f32 %v3141, %v3181
    %v3183 = vpop.f32.mrf.mxu0
    %v3184 = vpop.f32.mrf.mxu0
    %3185 = vdwg.mxu0
    %3186 = vmatprep.subr.bf16.mxu0 %v2521
    %3187 = vmatpush1.bf16.msra.mxu0 %v2520
    %3188 = vmatprep.subr.bf16.mxu0 %v2515
    %3189 = vmatpush1.bf16.msra.mxu0 %v2514
    %3190 = vmatprep.subr.bf16.mxu0 %v2509
    %3191 = vmatpush1.bf16.msra.mxu0 %v2508
    %3192 = vmatprep.subr.bf16.mxu0 %v2503
    %3193 = vmatpush1.bf16.msra.mxu0 %v2502
    %3194 = vmatprep.subr.bf16.mxu0 %v2497
    %3195 = vmatpush1.bf16.msra.mxu0 %v2496
    %3196 = vmatprep.subr.bf16.mxu0 %v2491
    %3197 = vmatpush1.bf16.msra.mxu0 %v2490
    %3198 = vmatprep.subr.bf16.mxu0 %v2485
    %3199 = vmatpush1.bf16.msra.mxu0 %v2484
    %3200 = vmatprep.subr.bf16.mxu0 %v2479
    %3201 = vmatpush1.bf16.msra.mxu0 %v2478
    %3202 = vmatprep.subr.bf16.mxu0 %v2569
    %3203 = vmatpush2.bf16.msra.mxu0 %v2568
    %3204 = vmatprep.subr.bf16.mxu0 %v2563
    %3205 = vmatpush2.bf16.msra.mxu0 %v2562
    %3206 = vmatprep.subr.bf16.mxu0 %v2557
    %3207 = vmatpush2.bf16.msra.mxu0 %v2556
    %3208 = vmatprep.subr.bf16.mxu0 %v2551
    %3209 = vmatpush2.bf16.msra.mxu0 %v2550
    %3210 = vmatprep.subr.bf16.mxu0 %v2545
    %3211 = vmatpush2.bf16.msra.mxu0 %v2544
    %3212 = vmatprep.subr.bf16.mxu0 %v2539
    %3213 = vmatpush2.bf16.msra.mxu0 %v2538
    %3214 = vmatprep.subr.bf16.mxu0 %v2533
    %3215 = vmatpush2.bf16.msra.mxu0 %v2532
    %3216 = vmatprep.subr.bf16.mxu0 %v2527
    %3217 = vmatpush2.bf16.msra.mxu0 %v2526
    %3218 = vmatprep.mubr.bf16.mxu0 %v1097
    %3219 = vmatmul.mubr.bf16.gmra.mxu0 %v1096
    %v3220 = vpop.f32.mrf.mxu0
    %v3221 = vadd.f32 %v3180, %v3220
    %v3222 = vpop.f32.mrf.mxu0
    %v3223 = vadd.f32 %v3182, %v3222
    %v3224 = vpop.f32.mrf.mxu0
    %v3225 = vpop.f32.mrf.mxu0
    %3226 = vdwg.mxu0
    %v3227 = vtanh.pop %v2975
    %v3228 = vtanh.pop %v2977
    %v3229 = vtanh.pop %v3098
    %v3230 = vtanh.pop %v3100
    %v3231 = vtanh.pop %v3221
    %v3232 = vtanh.pop %v3223
    %v3233 = vpack.c.bf16 %v3227, %v3227
    %v3234 = vpack.c.bf16 %v3228, %v3228
    %v3235 = vpack.c.bf16 %v3229, %v3229
    %v3236 = vpack.c.bf16 %v3230, %v3230
    %v3237 = vpack.c.bf16 %v3231, %v3231
    %v3238 = vpack.c.bf16 %v3232, %v3232
    %v3239 = vld [vmem:[#allocation9] sm:$0xff]
    %v3240 = vld [vmem:[#allocation9 + $0x8] sm:$0xff]
    %v3241 = vld [vmem:[#allocation9 + $0x10] sm:$0xff]
    %v3242 = vld [vmem:[#allocation9 + $0x18] sm:$0xff]
    %v3243 = vld [vmem:[#allocation9 + $0x20] sm:$0xff]
    %v3244 = vld [vmem:[#allocation9 + $0x28] sm:$0xff]
    %v3245 = vld [vmem:[#allocation9 + $0x30] sm:$0xff]
    %v3246 = vld [vmem:[#allocation9 + $0x38] sm:$0xff]
    %v3247 = vld [vmem:[#allocation9 + $0x40] sm:$0xff]
    %v3248 = vld [vmem:[#allocation9 + $0x48] sm:$0xff]
    %v3249 = vld [vmem:[#allocation9 + $0x50] sm:$0xff]
    %v3250 = vld [vmem:[#allocation9 + $0x58] sm:$0xff]
    %v3251 = vld [vmem:[#allocation9 + $0x60] sm:$0xff]
    %v3252 = vld [vmem:[#allocation9 + $0x68] sm:$0xff]
    %v3253 = vld [vmem:[#allocation9 + $0x70] sm:$0xff]
    %v3254 = vld [vmem:[#allocation9 + $0x78] sm:$0xff]
    %v3255 = vld [vmem:[#allocation9 + $0x80] sm:$0xff]
    %v3256 = vld [vmem:[#allocation9 + $0x88] sm:$0xff]
    %v3257 = vld [vmem:[#allocation9 + $0x90] sm:$0xff]
    %v3258 = vld [vmem:[#allocation9 + $0x98] sm:$0xff]
    %v3259 = vld [vmem:[#allocation9 + $0xa0] sm:$0xff]
    %v3260 = vld [vmem:[#allocation9 + $0xa8] sm:$0xff]
    %v3261 = vld [vmem:[#allocation9 + $0xb0] sm:$0xff]
    %v3262 = vld [vmem:[#allocation9 + $0xb8] sm:$0xff]
    %v3263 = vld [vmem:[#allocation9 + $0xc0] sm:$0xff]
    %v3264 = vld [vmem:[#allocation9 + $0xc8] sm:$0xff]
    %v3265 = vld [vmem:[#allocation9 + $0xd0] sm:$0xff]
    %v3266 = vld [vmem:[#allocation9 + $0xd8] sm:$0xff]
    %v3267 = vld [vmem:[#allocation9 + $0xe0] sm:$0xff]
    %v3268 = vld [vmem:[#allocation9 + $0xe8] sm:$0xff]
    %v3269 = vld [vmem:[#allocation9 + $0xf0] sm:$0xff]
    %v3270 = vld [vmem:[#allocation9 + $0xf8] sm:$0xff]
    %v3271 = vld [vmem:[#allocation9 + $0x100] sm:$0xff]
    %v3272 = vld [vmem:[#allocation9 + $0x108] sm:$0xff]
    %v3273 = vld [vmem:[#allocation9 + $0x110] sm:$0xff]
    %v3274 = vld [vmem:[#allocation9 + $0x118] sm:$0xff]
    %v3275 = vld [vmem:[#allocation9 + $0x120] sm:$0xff]
    %v3276 = vld [vmem:[#allocation9 + $0x128] sm:$0xff]
    %v3277 = vld [vmem:[#allocation9 + $0x130] sm:$0xff]
    %v3278 = vld [vmem:[#allocation9 + $0x138] sm:$0xff]
    %v3279 = vld [vmem:[#allocation9 + $0x140] sm:$0xff]
    %v3280 = vld [vmem:[#allocation9 + $0x148] sm:$0xff]
    %v3281 = vld [vmem:[#allocation9 + $0x150] sm:$0xff]
    %v3282 = vld [vmem:[#allocation9 + $0x158] sm:$0xff]
    %v3283 = vld [vmem:[#allocation9 + $0x160] sm:$0xff]
    %v3284 = vld [vmem:[#allocation9 + $0x168] sm:$0xff]
    %v3285 = vld [vmem:[#allocation9 + $0x170] sm:$0xff]
    %v3286 = vld [vmem:[#allocation9 + $0x178] sm:$0xff]
    %v3287 = vld [vmem:[#allocation9 + $0x180] sm:$0xff]
    %v3288 = vld [vmem:[#allocation9 + $0x188] sm:$0xff]
    %v3289 = vld [vmem:[#allocation9 + $0x190] sm:$0xff]
    %v3290 = vld [vmem:[#allocation9 + $0x198] sm:$0xff]
    %v3291 = vld [vmem:[#allocation9 + $0x1a0] sm:$0xff]
    %v3292 = vld [vmem:[#allocation9 + $0x1a8] sm:$0xff]
    %v3293 = vld [vmem:[#allocation9 + $0x1b0] sm:$0xff]
    %v3294 = vld [vmem:[#allocation9 + $0x1b8] sm:$0xff]
    %v3295 = vld [vmem:[#allocation9 + $0x1c0] sm:$0xff]
    %v3296 = vld [vmem:[#allocation9 + $0x1c8] sm:$0xff]
    %v3297 = vld [vmem:[#allocation9 + $0x1d0] sm:$0xff]
    %v3298 = vld [vmem:[#allocation9 + $0x1d8] sm:$0xff]
    %v3299 = vld [vmem:[#allocation9 + $0x1e0] sm:$0xff]
    %v3300 = vld [vmem:[#allocation9 + $0x1e8] sm:$0xff]
    %v3301 = vld [vmem:[#allocation9 + $0x1f0] sm:$0xff]
    %v3302 = vld [vmem:[#allocation9 + $0x1f8] sm:$0xff]
    %v3303 = vld [vmem:[#allocation9 + $0x200] sm:$0xff]
    %v3304 = vld [vmem:[#allocation9 + $0x208] sm:$0xff]
    %v3305 = vld [vmem:[#allocation9 + $0x210] sm:$0xff]
    %v3306 = vld [vmem:[#allocation9 + $0x218] sm:$0xff]
    %v3307 = vld [vmem:[#allocation9 + $0x220] sm:$0xff]
    %v3308 = vld [vmem:[#allocation9 + $0x228] sm:$0xff]
    %v3309 = vld [vmem:[#allocation9 + $0x230] sm:$0xff]
    %v3310 = vld [vmem:[#allocation9 + $0x238] sm:$0xff]
    %v3311 = vld [vmem:[#allocation9 + $0x240] sm:$0xff]
    %v3312 = vld [vmem:[#allocation9 + $0x248] sm:$0xff]
    %v3313 = vld [vmem:[#allocation9 + $0x250] sm:$0xff]
    %v3314 = vld [vmem:[#allocation9 + $0x258] sm:$0xff]
    %v3315 = vld [vmem:[#allocation9 + $0x260] sm:$0xff]
    %v3316 = vld [vmem:[#allocation9 + $0x268] sm:$0xff]
    %v3317 = vld [vmem:[#allocation9 + $0x270] sm:$0xff]
    %v3318 = vld [vmem:[#allocation9 + $0x278] sm:$0xff]
    %v3319 = vld [vmem:[#allocation9 + $0x280] sm:$0xff]
    %v3320 = vld [vmem:[#allocation9 + $0x288] sm:$0xff]
    %v3321 = vld [vmem:[#allocation9 + $0x290] sm:$0xff]
    %v3322 = vld [vmem:[#allocation9 + $0x298] sm:$0xff]
    %v3323 = vld [vmem:[#allocation9 + $0x2a0] sm:$0xff]
    %v3324 = vld [vmem:[#allocation9 + $0x2a8] sm:$0xff]
    %v3325 = vld [vmem:[#allocation9 + $0x2b0] sm:$0xff]
    %v3326 = vld [vmem:[#allocation9 + $0x2b8] sm:$0xff]
    %v3327 = vld [vmem:[#allocation9 + $0x2c0] sm:$0xff]
    %v3328 = vld [vmem:[#allocation9 + $0x2c8] sm:$0xff]
    %v3329 = vld [vmem:[#allocation9 + $0x2d0] sm:$0xff]
    %v3330 = vld [vmem:[#allocation9 + $0x2d8] sm:$0xff]
    %v3331 = vld [vmem:[#allocation9 + $0x2e0] sm:$0xff]
    %v3332 = vld [vmem:[#allocation9 + $0x2e8] sm:$0xff]
    %v3333 = vld [vmem:[#allocation9 + $0x2f0] sm:$0xff]
    %v3334 = vld [vmem:[#allocation9 + $0x2f8] sm:$0xff]
    %v3335 = vld [vmem:[#allocation10] sm:$0x3]
    %v3337 = vlaneseq
    %v3338 = vshrl.u32 %v3337, 7
    %v3339 = vsub.s32 0, %v3338
    %v3340 = vrot.slane %v3335, %v3339
    %v3341 = vlaneseq
    %v3342 = vshrl.u32 %v3341, 7
    %v3343 = vsub.s32 1, %v3342
    %v3344 = vrot.slane %v3335, %v3343
    %v3443 = vunpack.c.l.b16 %v3239
    %v3444 = vunpack.c.h.b16 %v3239
    %v3445 = vunpack.c.l.b16 %v3240
    %v3446 = vunpack.c.h.b16 %v3240
    %v3447 = vunpack.c.l.b16 %v3241
    %v3448 = vunpack.c.h.b16 %v3241
    %v3449 = vunpack.c.l.b16 %v3242
    %v3450 = vunpack.c.h.b16 %v3242
    %v3451 = vunpack.c.l.b16 %v3243
    %v3452 = vunpack.c.h.b16 %v3243
    %v3453 = vunpack.c.l.b16 %v3244
    %v3454 = vunpack.c.h.b16 %v3244
    %v3455 = vunpack.c.l.b16 %v3245
    %v3456 = vunpack.c.h.b16 %v3245
    %v3457 = vunpack.c.l.b16 %v3246
    %v3458 = vunpack.c.h.b16 %v3246
    %v3459 = vunpack.c.l.b16 %v3247
    %v3460 = vunpack.c.h.b16 %v3247
    %v3461 = vunpack.c.l.b16 %v3248
    %v3462 = vunpack.c.h.b16 %v3248
    %v3463 = vunpack.c.l.b16 %v3249
    %v3464 = vunpack.c.h.b16 %v3249
    %v3465 = vunpack.c.l.b16 %v3250
    %v3466 = vunpack.c.h.b16 %v3250
    %v3467 = vunpack.c.l.b16 %v3251
    %v3468 = vunpack.c.h.b16 %v3251
    %v3469 = vunpack.c.l.b16 %v3252
    %v3470 = vunpack.c.h.b16 %v3252
    %v3471 = vunpack.c.l.b16 %v3253
    %v3472 = vunpack.c.h.b16 %v3253
    %v3473 = vunpack.c.l.b16 %v3254
    %v3474 = vunpack.c.h.b16 %v3254
    %v3475 = vunpack.c.l.b16 %v3255
    %v3476 = vunpack.c.h.b16 %v3255
    %v3477 = vunpack.c.l.b16 %v3256
    %v3478 = vunpack.c.h.b16 %v3256
    %v3479 = vunpack.c.l.b16 %v3257
    %v3480 = vunpack.c.h.b16 %v3257
    %v3481 = vunpack.c.l.b16 %v3258
    %v3482 = vunpack.c.h.b16 %v3258
    %v3483 = vunpack.c.l.b16 %v3259
    %v3484 = vunpack.c.h.b16 %v3259
    %v3485 = vunpack.c.l.b16 %v3260
    %v3486 = vunpack.c.h.b16 %v3260
    %v3487 = vunpack.c.l.b16 %v3261
    %v3488 = vunpack.c.h.b16 %v3261
    %v3489 = vunpack.c.l.b16 %v3262
    %v3490 = vunpack.c.h.b16 %v3262
    %v3491 = vunpack.c.l.b16 %v3263
    %v3492 = vunpack.c.h.b16 %v3263
    %v3493 = vunpack.c.l.b16 %v3264
    %v3494 = vunpack.c.h.b16 %v3264
    %v3495 = vunpack.c.l.b16 %v3265
    %v3496 = vunpack.c.h.b16 %v3265
    %v3497 = vunpack.c.l.b16 %v3266
    %v3498 = vunpack.c.h.b16 %v3266
    %v3499 = vunpack.c.l.b16 %v3267
    %v3500 = vunpack.c.h.b16 %v3267
    %v3501 = vunpack.c.l.b16 %v3268
    %v3502 = vunpack.c.h.b16 %v3268
    %v3503 = vunpack.c.l.b16 %v3269
    %v3504 = vunpack.c.h.b16 %v3269
    %v3505 = vunpack.c.l.b16 %v3270
    %v3506 = vunpack.c.h.b16 %v3270
    %v3507 = vunpack.c.l.b16 %v3271
    %v3508 = vunpack.c.h.b16 %v3271
    %v3509 = vunpack.c.l.b16 %v3272
    %v3510 = vunpack.c.h.b16 %v3272
    %v3511 = vunpack.c.l.b16 %v3273
    %v3512 = vunpack.c.h.b16 %v3273
    %v3513 = vunpack.c.l.b16 %v3274
    %v3514 = vunpack.c.h.b16 %v3274
    %v3515 = vunpack.c.l.b16 %v3275
    %v3516 = vunpack.c.h.b16 %v3275
    %v3517 = vunpack.c.l.b16 %v3276
    %v3518 = vunpack.c.h.b16 %v3276
    %v3519 = vunpack.c.l.b16 %v3277
    %v3520 = vunpack.c.h.b16 %v3277
    %v3521 = vunpack.c.l.b16 %v3278
    %v3522 = vunpack.c.h.b16 %v3278
    %v3523 = vunpack.c.l.b16 %v3279
    %v3524 = vunpack.c.h.b16 %v3279
    %v3525 = vunpack.c.l.b16 %v3280
    %v3526 = vunpack.c.h.b16 %v3280
    %v3527 = vunpack.c.l.b16 %v3281
    %v3528 = vunpack.c.h.b16 %v3281
    %v3529 = vunpack.c.l.b16 %v3282
    %v3530 = vunpack.c.h.b16 %v3282
    %v3531 = vunpack.c.l.b16 %v3283
    %v3532 = vunpack.c.h.b16 %v3283
    %v3533 = vunpack.c.l.b16 %v3284
    %v3534 = vunpack.c.h.b16 %v3284
    %v3535 = vunpack.c.l.b16 %v3285
    %v3536 = vunpack.c.h.b16 %v3285
    %v3537 = vunpack.c.l.b16 %v3286
    %v3538 = vunpack.c.h.b16 %v3286
    %v3539 = vunpack.c.l.b16 %v3287
    %v3540 = vunpack.c.h.b16 %v3287
    %v3541 = vunpack.c.l.b16 %v3288
    %v3542 = vunpack.c.h.b16 %v3288
    %v3543 = vunpack.c.l.b16 %v3289
    %v3544 = vunpack.c.h.b16 %v3289
    %v3545 = vunpack.c.l.b16 %v3290
    %v3546 = vunpack.c.h.b16 %v3290
    %v3547 = vunpack.c.l.b16 %v3291
    %v3548 = vunpack.c.h.b16 %v3291
    %v3549 = vunpack.c.l.b16 %v3292
    %v3550 = vunpack.c.h.b16 %v3292
    %v3551 = vunpack.c.l.b16 %v3293
    %v3552 = vunpack.c.h.b16 %v3293
    %v3553 = vunpack.c.l.b16 %v3294
    %v3554 = vunpack.c.h.b16 %v3294
    %v3555 = vunpack.c.l.b16 %v3295
    %v3556 = vunpack.c.h.b16 %v3295
    %v3557 = vunpack.c.l.b16 %v3296
    %v3558 = vunpack.c.h.b16 %v3296
    %v3559 = vunpack.c.l.b16 %v3297
    %v3560 = vunpack.c.h.b16 %v3297
    %v3561 = vunpack.c.l.b16 %v3298
    %v3562 = vunpack.c.h.b16 %v3298
    %v3563 = vunpack.c.l.b16 %v3299
    %v3564 = vunpack.c.h.b16 %v3299
    %v3565 = vunpack.c.l.b16 %v3300
    %v3566 = vunpack.c.h.b16 %v3300
    %v3567 = vunpack.c.l.b16 %v3301
    %v3568 = vunpack.c.h.b16 %v3301
    %v3569 = vunpack.c.l.b16 %v3302
    %v3570 = vunpack.c.h.b16 %v3302
    %v3571 = vunpack.c.l.b16 %v3303
    %v3572 = vunpack.c.h.b16 %v3303
    %v3573 = vunpack.c.l.b16 %v3304
    %v3574 = vunpack.c.h.b16 %v3304
    %v3575 = vunpack.c.l.b16 %v3305
    %v3576 = vunpack.c.h.b16 %v3305
    %v3577 = vunpack.c.l.b16 %v3306
    %v3578 = vunpack.c.h.b16 %v3306
    %v3579 = vunpack.c.l.b16 %v3307
    %v3580 = vunpack.c.h.b16 %v3307
    %v3581 = vunpack.c.l.b16 %v3308
    %v3582 = vunpack.c.h.b16 %v3308
    %v3583 = vunpack.c.l.b16 %v3309
    %v3584 = vunpack.c.h.b16 %v3309
    %v3585 = vunpack.c.l.b16 %v3310
    %v3586 = vunpack.c.h.b16 %v3310
    %v3587 = vunpack.c.l.b16 %v3311
    %v3588 = vunpack.c.h.b16 %v3311
    %v3589 = vunpack.c.l.b16 %v3312
    %v3590 = vunpack.c.h.b16 %v3312
    %v3591 = vunpack.c.l.b16 %v3313
    %v3592 = vunpack.c.h.b16 %v3313
    %v3593 = vunpack.c.l.b16 %v3314
    %v3594 = vunpack.c.h.b16 %v3314
    %v3595 = vunpack.c.l.b16 %v3315
    %v3596 = vunpack.c.h.b16 %v3315
    %v3597 = vunpack.c.l.b16 %v3316
    %v3598 = vunpack.c.h.b16 %v3316
    %v3599 = vunpack.c.l.b16 %v3317
    %v3600 = vunpack.c.h.b16 %v3317
    %v3601 = vunpack.c.l.b16 %v3318
    %v3602 = vunpack.c.h.b16 %v3318
    %v3603 = vunpack.c.l.b16 %v3319
    %v3604 = vunpack.c.h.b16 %v3319
    %v3605 = vunpack.c.l.b16 %v3320
    %v3606 = vunpack.c.h.b16 %v3320
    %v3607 = vunpack.c.l.b16 %v3321
    %v3608 = vunpack.c.h.b16 %v3321
    %v3609 = vunpack.c.l.b16 %v3322
    %v3610 = vunpack.c.h.b16 %v3322
    %v3611 = vunpack.c.l.b16 %v3323
    %v3612 = vunpack.c.h.b16 %v3323
    %v3613 = vunpack.c.l.b16 %v3324
    %v3614 = vunpack.c.h.b16 %v3324
    %v3615 = vunpack.c.l.b16 %v3325
    %v3616 = vunpack.c.h.b16 %v3325
    %v3617 = vunpack.c.l.b16 %v3326
    %v3618 = vunpack.c.h.b16 %v3326
    %v3619 = vunpack.c.l.b16 %v3327
    %v3620 = vunpack.c.h.b16 %v3327
    %v3621 = vunpack.c.l.b16 %v3328
    %v3622 = vunpack.c.h.b16 %v3328
    %v3623 = vunpack.c.l.b16 %v3329
    %v3624 = vunpack.c.h.b16 %v3329
    %v3625 = vunpack.c.l.b16 %v3330
    %v3626 = vunpack.c.h.b16 %v3330
    %v3627 = vunpack.c.l.b16 %v3331
    %v3628 = vunpack.c.h.b16 %v3331
    %v3629 = vunpack.c.l.b16 %v3332
    %v3630 = vunpack.c.h.b16 %v3332
    %v3631 = vunpack.c.l.b16 %v3333
    %v3632 = vunpack.c.h.b16 %v3333
    %v3633 = vunpack.c.l.b16 %v3334
    %v3634 = vunpack.c.h.b16 %v3334
    %v3635 = vpack.c.b16 %v3445, %v3443
    %v3636 = vpack.c.b16 %v3446, %v3444
    %v3637 = vpack.c.b16 %v3449, %v3447
    %v3638 = vpack.c.b16 %v3450, %v3448
    %v3639 = vpack.c.b16 %v3453, %v3451
    %v3640 = vpack.c.b16 %v3454, %v3452
    %v3641 = vpack.c.b16 %v3457, %v3455
    %v3642 = vpack.c.b16 %v3458, %v3456
    %v3643 = vpack.c.b16 %v3461, %v3459
    %v3644 = vpack.c.b16 %v3462, %v3460
    %v3645 = vpack.c.b16 %v3465, %v3463
    %v3646 = vpack.c.b16 %v3466, %v3464
    %v3647 = vpack.c.b16 %v3469, %v3467
    %v3648 = vpack.c.b16 %v3470, %v3468
    %v3649 = vpack.c.b16 %v3473, %v3471
    %v3650 = vpack.c.b16 %v3474, %v3472
    %v3651 = vpack.c.b16 %v3477, %v3475
    %v3652 = vpack.c.b16 %v3478, %v3476
    %v3653 = vpack.c.b16 %v3481, %v3479
    %v3654 = vpack.c.b16 %v3482, %v3480
    %v3655 = vpack.c.b16 %v3485, %v3483
    %v3656 = vpack.c.b16 %v3486, %v3484
    %v3657 = vpack.c.b16 %v3489, %v3487
    %v3658 = vpack.c.b16 %v3490, %v3488
    %v3659 = vpack.c.b16 %v3493, %v3491
    %v3660 = vpack.c.b16 %v3494, %v3492
    %v3661 = vpack.c.b16 %v3497, %v3495
    %v3662 = vpack.c.b16 %v3498, %v3496
    %v3663 = vpack.c.b16 %v3501, %v3499
    %v3664 = vpack.c.b16 %v3502, %v3500
    %v3665 = vpack.c.b16 %v3505, %v3503
    %v3666 = vpack.c.b16 %v3506, %v3504
    %v3667 = vpack.c.b16 %v3509, %v3507
    %v3668 = vpack.c.b16 %v3510, %v3508
    %v3669 = vpack.c.b16 %v3513, %v3511
    %v3670 = vpack.c.b16 %v3514, %v3512
    %v3671 = vpack.c.b16 %v3517, %v3515
    %v3672 = vpack.c.b16 %v3518, %v3516
    %v3673 = vpack.c.b16 %v3521, %v3519
    %v3674 = vpack.c.b16 %v3522, %v3520
    %v3675 = vpack.c.b16 %v3525, %v3523
    %v3676 = vpack.c.b16 %v3526, %v3524
    %v3677 = vpack.c.b16 %v3529, %v3527
    %v3678 = vpack.c.b16 %v3530, %v3528
    %v3679 = vpack.c.b16 %v3533, %v3531
    %v3680 = vpack.c.b16 %v3534, %v3532
    %v3681 = vpack.c.b16 %v3537, %v3535
    %v3682 = vpack.c.b16 %v3538, %v3536
    %v3683 = vpack.c.b16 %v3541, %v3539
    %v3684 = vpack.c.b16 %v3542, %v3540
    %v3685 = vpack.c.b16 %v3545, %v3543
    %v3686 = vpack.c.b16 %v3546, %v3544
    %v3687 = vpack.c.b16 %v3549, %v3547
    %v3688 = vpack.c.b16 %v3550, %v3548
    %v3689 = vpack.c.b16 %v3553, %v3551
    %v3690 = vpack.c.b16 %v3554, %v3552
    %v3691 = vpack.c.b16 %v3557, %v3555
    %v3692 = vpack.c.b16 %v3558, %v3556
    %v3693 = vpack.c.b16 %v3561, %v3559
    %v3694 = vpack.c.b16 %v3562, %v3560
    %v3695 = vpack.c.b16 %v3565, %v3563
    %v3696 = vpack.c.b16 %v3566, %v3564
    %v3697 = vpack.c.b16 %v3569, %v3567
    %v3698 = vpack.c.b16 %v3570, %v3568
    %v3699 = vpack.c.b16 %v3573, %v3571
    %v3700 = vpack.c.b16 %v3574, %v3572
    %v3701 = vpack.c.b16 %v3577, %v3575
    %v3702 = vpack.c.b16 %v3578, %v3576
    %v3703 = vpack.c.b16 %v3581, %v3579
    %v3704 = vpack.c.b16 %v3582, %v3580
    %v3705 = vpack.c.b16 %v3585, %v3583
    %v3706 = vpack.c.b16 %v3586, %v3584
    %v3707 = vpack.c.b16 %v3589, %v3587
    %v3708 = vpack.c.b16 %v3590, %v3588
    %v3709 = vpack.c.b16 %v3593, %v3591
    %v3710 = vpack.c.b16 %v3594, %v3592
    %v3711 = vpack.c.b16 %v3597, %v3595
    %v3712 = vpack.c.b16 %v3598, %v3596
    %v3713 = vpack.c.b16 %v3601, %v3599
    %v3714 = vpack.c.b16 %v3602, %v3600
    %v3715 = vpack.c.b16 %v3605, %v3603
    %v3716 = vpack.c.b16 %v3606, %v3604
    %v3717 = vpack.c.b16 %v3609, %v3607
    %v3718 = vpack.c.b16 %v3610, %v3608
    %v3719 = vpack.c.b16 %v3613, %v3611
    %v3720 = vpack.c.b16 %v3614, %v3612
    %v3721 = vpack.c.b16 %v3617, %v3615
    %v3722 = vpack.c.b16 %v3618, %v3616
    %v3723 = vpack.c.b16 %v3621, %v3619
    %v3724 = vpack.c.b16 %v3622, %v3620
    %v3725 = vpack.c.b16 %v3625, %v3623
    %v3726 = vpack.c.b16 %v3626, %v3624
    %v3727 = vpack.c.b16 %v3629, %v3627
    %v3728 = vpack.c.b16 %v3630, %v3628
    %v3729 = vpack.c.b16 %v3633, %v3631
    %v3730 = vpack.c.b16 %v3634, %v3632
    %3827 = vmatprep.subr.bf16.mxu0 %v3650
    %3828 = vmatpush1.bf16.msra.mxu0 %v3649
    %3829 = vmatprep.subr.bf16.mxu0 %v3648
    %3830 = vmatpush1.bf16.msra.mxu0 %v3647
    %3831 = vmatprep.subr.bf16.mxu0 %v3646
    %3832 = vmatpush1.bf16.msra.mxu0 %v3645
    %3833 = vmatprep.subr.bf16.mxu0 %v3644
    %3834 = vmatpush1.bf16.msra.mxu0 %v3643
    %3835 = vmatprep.subr.bf16.mxu0 %v3642
    %3836 = vmatpush1.bf16.msra.mxu0 %v3641
    %3837 = vmatprep.subr.bf16.mxu0 %v3640
    %3838 = vmatpush1.bf16.msra.mxu0 %v3639
    %3839 = vmatprep.subr.bf16.mxu0 %v3638
    %3840 = vmatpush1.bf16.msra.mxu0 %v3637
    %3841 = vmatprep.subr.bf16.mxu0 %v3636
    %3842 = vmatpush1.bf16.msra.mxu0 %v3635
    %3843 = vmatprep.subr.bf16.mxu0 %v3666
    %3844 = vmatpush2.bf16.msra.mxu0 %v3665
    %3845 = vmatprep.subr.bf16.mxu0 %v3664
    %3846 = vmatpush2.bf16.msra.mxu0 %v3663
    %3847 = vmatprep.subr.bf16.mxu0 %v3662
    %3848 = vmatpush2.bf16.msra.mxu0 %v3661
    %3849 = vmatprep.subr.bf16.mxu0 %v3660
    %3850 = vmatpush2.bf16.msra.mxu0 %v3659
    %3851 = vmatprep.subr.bf16.mxu0 %v3658
    %3852 = vmatpush2.bf16.msra.mxu0 %v3657
    %3853 = vmatprep.subr.bf16.mxu0 %v3656
    %3854 = vmatpush2.bf16.msra.mxu0 %v3655
    %3855 = vmatprep.subr.bf16.mxu0 %v3654
    %3856 = vmatpush2.bf16.msra.mxu0 %v3653
    %3857 = vmatprep.subr.bf16.mxu0 %v3652
    %3858 = vmatpush2.bf16.msra.mxu0 %v3651
    %3859 = vmatprep.mubr.bf16.mxu0 %v3234
    %3860 = vmatmul.mubr.bf16.gmra.mxu0 %v3233
    %v3861 = vpop.f32.mrf.mxu0
    %v3862 = vadd.f32 %v3340, %v3861
    %v3863 = vpop.f32.mrf.mxu0
    %v3864 = vadd.f32 %v3344, %v3863
    %v3865 = vpop.f32.mrf.mxu0
    %v3866 = vpop.f32.mrf.mxu0
    %3867 = vdwg.mxu0
    %3868 = vmatprep.subr.bf16.mxu0 %v3682
    %3869 = vmatpush1.bf16.msra.mxu0 %v3681
    %3870 = vmatprep.subr.bf16.mxu0 %v3680
    %3871 = vmatpush1.bf16.msra.mxu0 %v3679
    %3872 = vmatprep.subr.bf16.mxu0 %v3678
    %3873 = vmatpush1.bf16.msra.mxu0 %v3677
    %3874 = vmatprep.subr.bf16.mxu0 %v3676
    %3875 = vmatpush1.bf16.msra.mxu0 %v3675
    %3876 = vmatprep.subr.bf16.mxu0 %v3674
    %3877 = vmatpush1.bf16.msra.mxu0 %v3673
    %3878 = vmatprep.subr.bf16.mxu0 %v3672
    %3879 = vmatpush1.bf16.msra.mxu0 %v3671
    %3880 = vmatprep.subr.bf16.mxu0 %v3670
    %3881 = vmatpush1.bf16.msra.mxu0 %v3669
    %3882 = vmatprep.subr.bf16.mxu0 %v3668
    %3883 = vmatpush1.bf16.msra.mxu0 %v3667
    %3884 = vmatprep.subr.bf16.mxu0 %v3698
    %3885 = vmatpush2.bf16.msra.mxu0 %v3697
    %3886 = vmatprep.subr.bf16.mxu0 %v3696
    %3887 = vmatpush2.bf16.msra.mxu0 %v3695
    %3888 = vmatprep.subr.bf16.mxu0 %v3694
    %3889 = vmatpush2.bf16.msra.mxu0 %v3693
    %3890 = vmatprep.subr.bf16.mxu0 %v3692
    %3891 = vmatpush2.bf16.msra.mxu0 %v3691
    %3892 = vmatprep.subr.bf16.mxu0 %v3690
    %3893 = vmatpush2.bf16.msra.mxu0 %v3689
    %3894 = vmatprep.subr.bf16.mxu0 %v3688
    %3895 = vmatpush2.bf16.msra.mxu0 %v3687
    %3896 = vmatprep.subr.bf16.mxu0 %v3686
    %3897 = vmatpush2.bf16.msra.mxu0 %v3685
    %3898 = vmatprep.subr.bf16.mxu0 %v3684
    %3899 = vmatpush2.bf16.msra.mxu0 %v3683
    %3900 = vmatprep.mubr.bf16.mxu0 %v3236
    %3901 = vmatmul.mubr.bf16.gmra.mxu0 %v3235
    %v3902 = vpop.f32.mrf.mxu0
    %v3903 = vadd.f32 %v3862, %v3902
    %v3904 = vpop.f32.mrf.mxu0
    %v3905 = vadd.f32 %v3864, %v3904
    %v3906 = vpop.f32.mrf.mxu0
    %v3907 = vpop.f32.mrf.mxu0
    %3908 = vdwg.mxu0
    %3909 = vmatprep.subr.bf16.mxu0 %v3714
    %3910 = vmatpush1.bf16.msra.mxu0 %v3713
    %3911 = vmatprep.subr.bf16.mxu0 %v3712
    %3912 = vmatpush1.bf16.msra.mxu0 %v3711
    %3913 = vmatprep.subr.bf16.mxu0 %v3710
    %3914 = vmatpush1.bf16.msra.mxu0 %v3709
    %3915 = vmatprep.subr.bf16.mxu0 %v3708
    %3916 = vmatpush1.bf16.msra.mxu0 %v3707
    %3917 = vmatprep.subr.bf16.mxu0 %v3706
    %3918 = vmatpush1.bf16.msra.mxu0 %v3705
    %3919 = vmatprep.subr.bf16.mxu0 %v3704
    %3920 = vmatpush1.bf16.msra.mxu0 %v3703
    %3921 = vmatprep.subr.bf16.mxu0 %v3702
    %3922 = vmatpush1.bf16.msra.mxu0 %v3701
    %3923 = vmatprep.subr.bf16.mxu0 %v3700
    %3924 = vmatpush1.bf16.msra.mxu0 %v3699
    %3925 = vmatprep.subr.bf16.mxu0 %v3730
    %3926 = vmatpush2.bf16.msra.mxu0 %v3729
    %3927 = vmatprep.subr.bf16.mxu0 %v3728
    %3928 = vmatpush2.bf16.msra.mxu0 %v3727
    %3929 = vmatprep.subr.bf16.mxu0 %v3726
    %3930 = vmatpush2.bf16.msra.mxu0 %v3725
    %3931 = vmatprep.subr.bf16.mxu0 %v3724
    %3932 = vmatpush2.bf16.msra.mxu0 %v3723
    %3933 = vmatprep.subr.bf16.mxu0 %v3722
    %3934 = vmatpush2.bf16.msra.mxu0 %v3721
    %3935 = vmatprep.subr.bf16.mxu0 %v3720
    %3936 = vmatpush2.bf16.msra.mxu0 %v3719
    %3937 = vmatprep.subr.bf16.mxu0 %v3718
    %3938 = vmatpush2.bf16.msra.mxu0 %v3717
    %3939 = vmatprep.subr.bf16.mxu0 %v3716
    %3940 = vmatpush2.bf16.msra.mxu0 %v3715
    %3941 = vmatprep.mubr.bf16.mxu0 %v3238
    %3942 = vmatmul.mubr.bf16.gmra.mxu0 %v3237
    %v3943 = vpop.f32.mrf.mxu0
    %v3944 = vadd.f32 %v3903, %v3943
    %v3945 = vpop.f32.mrf.mxu0
    %v3946 = vadd.f32 %v3905, %v3945
    %v3947 = vpop.f32.mrf.mxu0
    %v3948 = vpop.f32.mrf.mxu0
    %3949 = vdwg.mxu0
    %v3950 = vmax.f32 %v3944, 0.0
    %v3951 = vmax.f32 %v3946, 0.0
    %v3954 = vcombine.low %v3950, %v3951
    %3956 = vst [vmem:[%s8] sm:$0xff] %v3954
    // Predicated region
    $region58: #{rk_module_forward.1} parent=1 // pred_check
      _
    $region59: #{rk_module_forward.1} parent=1 // pred_check_branch
      %3958 = sbr.rel (0) target = $region61
    $region60: #{rk_module_forward.1} parent=1 // pred_region
      _
    $region61: #{rk_module_forward.1} parent=1 // pred_fallthru
      _
    // Predicated region
    $region62: #{rk_module_forward.1} parent=1 // pred_check
      _
    $region63: #{rk_module_forward.1} parent=1 // pred_check_branch
      %3960 = sbr.rel (0) target = $region65
    $region64: #{rk_module_forward.1} parent=1 // pred_region
      _
    $region65: #{rk_module_forward.1} parent=1 // pred_fallthru
      _
    %3961 = vsyncpa [#allocation3], 1
    %3962 = vsyncpa [#allocation5], 1
    %3963 = vsyncpa [#allocation8], 1
    %3964 = vsyncpa [#allocation11], 1

</llo_original>
